<compile_context>
chip_gen: v7x
topology: tpu7x:2x2x1
jax: 0.10.0
libtpu: 0.0.40
codegen_flags: <defaults>
</compile_context>

<pallas_src>
import jax
import jax.numpy as jnp
from jax.experimental import pallas as pl
from jax.experimental.pallas import tpu as pltpu

IN_FEATURES = 1664
OUT_FEATURES = 1000


def _head_kernel(x_ref, w_ref, b_ref, o_ref):
    # x_ref: (N, IN) f32, w_ref: (IN, OUT) bf16, b_ref: (1, OUT) f32,
    # o_ref: (N, OUT) f32.
    # Fused cast (flatten already folded into the wrapper-side free reshape).
    x_bf = x_ref[...].astype(jnp.bfloat16)
    acc = jnp.dot(x_bf, w_ref[...], preferred_element_type=jnp.float32)
    o_ref[...] = acc + b_ref[...]


def prepare_weights(w, b):
    """w: (OUT, IN) f32 (PyTorch layout), b: (OUT,) f32 ->
    (w_t bf16 (IN, OUT), b_row f32 (1, OUT)). Done once; the per-call path
    streams the already-cast weight."""
    w_t = jnp.transpose(w).astype(jnp.bfloat16)          # (IN, OUT)
    b_row = b.astype(jnp.float32).reshape(1, OUT_FEATURES)
    return w_t, b_row


def flatten_linear(x_nchw, w_t_bf16, b_row):
    """x_nchw: (N, 1664, 1, 1) f32 -> (N, 1000) f32 (== Linear(flatten(x,1)))."""
    n = x_nchw.shape[0]
    # torch.flatten(x, 1): layout-compatible reshape -> metadata-only (no copy,
    # no convert). The bf16 cast happens inside the kernel.
    x2d = x_nchw.reshape(n, IN_FEATURES)

    cost = pl.CostEstimate(
        flops=2 * n * IN_FEATURES * OUT_FEATURES,
        bytes_accessed=(IN_FEATURES * OUT_FEATURES * 2    # bf16 weight (dominant)
                        + n * IN_FEATURES * 4             # f32 activation
                        + OUT_FEATURES * 4                # f32 bias
                        + n * OUT_FEATURES * 4),          # f32 output
        transcendentals=0,
    )

    return pl.pallas_call(
        _head_kernel,
        out_shape=jax.ShapeDtypeStruct((n, OUT_FEATURES), jnp.float32),
        # Whole problem in VMEM, single-buffered (no grid, no pipelining).
        in_specs=[
            pl.BlockSpec(memory_space=pltpu.MemorySpace.VMEM),
            pl.BlockSpec(memory_space=pltpu.MemorySpace.VMEM),
            pl.BlockSpec(memory_space=pltpu.MemorySpace.VMEM),
        ],
        out_specs=pl.BlockSpec(memory_space=pltpu.MemorySpace.VMEM),
        cost_estimate=cost,
    )(x2d, w_t_bf16, b_row)


if __name__ == "__main__":
    key = jax.random.PRNGKey(0)
    kx, kw, kb = jax.random.split(key, 3)

    # Deterministic synthetic parameters (shapes from Linear(1664, 1000)).
    bound = 1.0 / (IN_FEATURES ** 0.5)
    w = jax.random.uniform(kw, (OUT_FEATURES, IN_FEATURES),
                           minval=-bound, maxval=bound, dtype=jnp.float32)
    b = jax.random.uniform(kb, (OUT_FEATURES,),
                           minval=-bound, maxval=bound, dtype=jnp.float32)

    # Input matches the module: x597 ~ randn(1, 1664, 1, 1)
    x = jax.random.normal(kx, (1, IN_FEATURES, 1, 1), dtype=jnp.float32)

    w_t, b_row = prepare_weights(w, b)
    out = flatten_linear(x, w_t, b_row)
    out = jax.block_until_ready(out)
    assert out.shape == (1, OUT_FEATURES)

    # Reference using the same bf16-cast operands, accumulated in f32.
    x_bf = x.reshape(1, -1).astype(jnp.bfloat16).astype(jnp.float32)
    w_bf = jnp.transpose(w).astype(jnp.bfloat16).astype(jnp.float32)
    ref = x_bf @ w_bf + b.reshape(1, -1)
    assert jnp.allclose(out, ref, atol=1e-2, rtol=1e-2)

    # Looser sanity check against the full-precision reference.
    ref_f32 = x.reshape(1, -1) @ jnp.transpose(w) + b.reshape(1, -1)
    assert jnp.allclose(out, ref_f32, atol=5e-2, rtol=5e-2)

    print("KERNEL_OK")
</pallas_src>

<mosaic_0001>
module attributes {stable_mosaic.version = 11 : i64} {
  func.func @_head_kernel(%arg0: memref<1x1664xf32, #tpu.memory_space<vmem>>, %arg1: memref<1664x1000xbf16, #tpu.memory_space<vmem>>, %arg2: memref<1x1000xf32, #tpu.memory_space<vmem>>, %arg3: memref<1x1000xf32, #tpu.memory_space<vmem>>) attributes {dimension_semantics = [], scalar_prefetch = 0 : i64, scratch_operands = 0 : i64, tpu.core_type = #tpu.core_type<tc>} {
    %c0 = arith.constant 0 : index
    %c0_0 = arith.constant 0 : index
    %0 = vector.load %arg0[%c0, %c0_0] : memref<1x1664xf32, #tpu.memory_space<vmem>>, vector<1x1664xf32>
    %1 = arith.truncf %0 : vector<1x1664xf32> to vector<1x1664xbf16>
    %c0_1 = arith.constant 0 : index
    %c0_2 = arith.constant 0 : index
    %2 = vector.load %arg1[%c0_1, %c0_2] : memref<1664x1000xbf16, #tpu.memory_space<vmem>>, vector<1664x1000xbf16>
    %cst = arith.constant dense<0.000000e+00> : vector<1x1000xf32>
    %3 = tpu.matmul %1, %2, %cst {dimension_numbers = #tpu.dot_dimension_numbers<[1], [0], [0], [1], [0, 0, 1, 1], [], []>} : vector<1x1664xbf16>, vector<1664x1000xbf16>, vector<1x1000xf32> -> vector<1x1000xf32>
    %c0_3 = arith.constant 0 : index
    %c0_4 = arith.constant 0 : index
    %4 = vector.load %arg2[%c0_3, %c0_4] : memref<1x1000xf32, #tpu.memory_space<vmem>>, vector<1x1000xf32>
    %5 = arith.addf %3, %4 : vector<1x1000xf32>
    %c0_5 = arith.constant 0 : index
    %c0_6 = arith.constant 0 : index
    %6 = vector.load %arg3[%c0_5, %c0_6] : memref<1x1000xf32, #tpu.memory_space<vmem>>, vector<1x1000xf32>
    tpu.vector_store %arg3[%c0_5, %c0_6], %5 {strides = array<i32>} : memref<1x1000xf32, #tpu.memory_space<vmem>>, vector<1x1000xf32>,
    return
  }
}

</mosaic_0001>

<llo_original>
// kernel: tpu_custom_call.1
$region0: #{tpu_custom_call.1}
  #allocation0 [shape = 'u32[]', space=smem, size = 0x4, offset = 0x4, fixed_abs, tag = 'smem constant byte address 0x4 - core index']
  #allocation1 [shape = 'u32[144,128]{1,0:T(1,128)}', space=vmem, size = 0x12000, scoped, tag = 'internal scratch']
  %s0 = inlined_call_operand.vmem [shape: f32[1,1664], index: 0, kind: input, shape index: {}]
  %s1 = inlined_call_operand.vmem [shape: bf16[1664,1000], index: 1, kind: input, shape index: {}]
  %s2 = inlined_call_operand.vmem [shape: f32[1,1000], index: 2, kind: input, shape index: {}]
  %s3 = inlined_call_operand.hbm [shape: f32[1,1000], index: 3, kind: output, shape index: {}]
  %s4 = sld [smem:[#allocation0]]
  $region22: #{tpu_custom_call.1} parent=0
    _
  %s6 = ssub.s32 1, %s4
  %s7 = scalar_select 0, %s6, %s4
  $region1: #{tpu_custom_call.1} parent=0
    #allocation2 [shape = 'u8[4096]{0}', space=vmem, size = 0x1000, scoped, tag = 'output window, operand 0, single buffered']
    #allocation3 [shape = 's32[1]{0}', space=sflag, size = 0x4, scoped, tag = 'scoped memory for tpu_custom_call.1']
    %8 = vsyncpa [#allocation3], 0
    // Predicated region
    $region2: #{tpu_custom_call.1} parent=1 // pred_check
      _
    $region3: #{tpu_custom_call.1} parent=1 // pred_check_branch
      %10 = sbr.rel (0) target = $region5
    $region4: #{tpu_custom_call.1} parent=1 // pred_region
      _
    $region5: #{tpu_custom_call.1} parent=1 // pred_fallthru
      _
    // Predicated region
    $region6: #{tpu_custom_call.1} parent=1 // pred_check
      _
    $region7: #{tpu_custom_call.1} parent=1 // pred_check_branch
      %12 = sbr.rel (0) target = $region9
    $region8: #{tpu_custom_call.1} parent=1 // pred_region
      _
    $region9: #{tpu_custom_call.1} parent=1 // pred_fallthru
      _
    // Predicated region
    $region10: #{tpu_custom_call.1} parent=1 // pred_check
      _
    $region11: #{tpu_custom_call.1} parent=1 // pred_check_branch
      %14 = sbr.rel (0) target = $region13
    $region12: #{tpu_custom_call.1} parent=1 // pred_region
      _
    $region13: #{tpu_custom_call.1} parent=1 // pred_fallthru
      _
    %v16 = vld [vmem:[%s0] sm:$0xff]
    %v17 = vld [vmem:[%s0 + $0x8] sm:$0x1f]
    %v20 = vlaneseq
    %v21 = vshrl.u32 %v20, 7
    %v22 = vsub.s32 0, %v21
    %v23 = vrot.slane %v16, %v22
    %v24 = vlaneseq
    %v25 = vshrl.u32 %v24, 7
    %v26 = vsub.s32 1, %v25
    %v27 = vrot.slane %v16, %v26
    %v28 = vlaneseq
    %v29 = vshrl.u32 %v28, 7
    %v30 = vsub.s32 2, %v29
    %v31 = vrot.slane %v16, %v30
    %v32 = vlaneseq
    %v33 = vshrl.u32 %v32, 7
    %v34 = vsub.s32 3, %v33
    %v35 = vrot.slane %v16, %v34
    %v36 = vlaneseq
    %v37 = vshrl.u32 %v36, 7
    %v38 = vsub.s32 4, %v37
    %v39 = vrot.slane %v16, %v38
    %v40 = vlaneseq
    %v41 = vshrl.u32 %v40, 7
    %v42 = vsub.s32 5, %v41
    %v43 = vrot.slane %v16, %v42
    %v44 = vlaneseq
    %v45 = vshrl.u32 %v44, 7
    %v46 = vsub.s32 6, %v45
    %v47 = vrot.slane %v16, %v46
    %v48 = vlaneseq
    %v49 = vshrl.u32 %v48, 7
    %v50 = vsub.s32 7, %v49
    %v51 = vrot.slane %v16, %v50
    %v52 = vlaneseq
    %v53 = vshrl.u32 %v52, 7
    %v54 = vsub.s32 0, %v53
    %v55 = vrot.slane %v17, %v54
    %v56 = vlaneseq
    %v57 = vshrl.u32 %v56, 7
    %v58 = vsub.s32 1, %v57
    %v59 = vrot.slane %v17, %v58
    %v60 = vlaneseq
    %v61 = vshrl.u32 %v60, 7
    %v62 = vsub.s32 2, %v61
    %v63 = vrot.slane %v17, %v62
    %v64 = vlaneseq
    %v65 = vshrl.u32 %v64, 7
    %v66 = vsub.s32 3, %v65
    %v67 = vrot.slane %v17, %v66
    %v68 = vlaneseq
    %v69 = vshrl.u32 %v68, 7
    %v70 = vsub.s32 4, %v69
    %v71 = vrot.slane %v17, %v70
    %v85 = vpack.c.bf16 %v23, %v23
    %v86 = vpack.c.bf16 %v27, %v27
    %v87 = vpack.c.bf16 %v31, %v31
    %v88 = vpack.c.bf16 %v35, %v35
    %v89 = vpack.c.bf16 %v39, %v39
    %v90 = vpack.c.bf16 %v43, %v43
    %v91 = vpack.c.bf16 %v47, %v47
    %v92 = vpack.c.bf16 %v51, %v51
    %v93 = vpack.c.bf16 %v55, %v55
    %v94 = vpack.c.bf16 %v59, %v59
    %v95 = vpack.c.bf16 %v63, %v63
    %v96 = vpack.c.bf16 %v67, %v67
    %v97 = vpack.c.bf16 %v71, %v71
    %v98 = vld [vmem:[%s1] sm:$0xff]
    %v99 = vld [vmem:[%s1 + $0x8] sm:$0xff]
    %v100 = vld [vmem:[%s1 + $0x10] sm:$0xff]
    %v101 = vld [vmem:[%s1 + $0x18] sm:$0xff]
    %v102 = vld [vmem:[%s1 + $0x20] sm:$0xff]
    %v103 = vld [vmem:[%s1 + $0x28] sm:$0xff]
    %v104 = vld [vmem:[%s1 + $0x30] sm:$0xff]
    %v105 = vld [vmem:[%s1 + $0x38] sm:$0xff]
    %v106 = vld [vmem:[%s1 + $0x40] sm:$0xff]
    %v107 = vld [vmem:[%s1 + $0x48] sm:$0xff]
    %v108 = vld [vmem:[%s1 + $0x50] sm:$0xff]
    %v109 = vld [vmem:[%s1 + $0x58] sm:$0xff]
    %v110 = vld [vmem:[%s1 + $0x60] sm:$0xff]
    %v111 = vld [vmem:[%s1 + $0x68] sm:$0xff]
    %v112 = vld [vmem:[%s1 + $0x70] sm:$0xff]
    %v113 = vld [vmem:[%s1 + $0x78] sm:$0xff]
    %v114 = vld [vmem:[%s1 + $0x80] sm:$0xff]
    %v115 = vld [vmem:[%s1 + $0x88] sm:$0xff]
    %v116 = vld [vmem:[%s1 + $0x90] sm:$0xff]
    %v117 = vld [vmem:[%s1 + $0x98] sm:$0xff]
    %v118 = vld [vmem:[%s1 + $0xa0] sm:$0xff]
    %v119 = vld [vmem:[%s1 + $0xa8] sm:$0xff]
    %v120 = vld [vmem:[%s1 + $0xb0] sm:$0xff]
    %v121 = vld [vmem:[%s1 + $0xb8] sm:$0xff]
    %v122 = vld [vmem:[%s1 + $0xc0] sm:$0xff]
    %v123 = vld [vmem:[%s1 + $0xc8] sm:$0xff]
    %v124 = vld [vmem:[%s1 + $0xd0] sm:$0xff]
    %v125 = vld [vmem:[%s1 + $0xd8] sm:$0xff]
    %v126 = vld [vmem:[%s1 + $0xe0] sm:$0xff]
    %v127 = vld [vmem:[%s1 + $0xe8] sm:$0xff]
    %v128 = vld [vmem:[%s1 + $0xf0] sm:$0xff]
    %v129 = vld [vmem:[%s1 + $0xf8] sm:$0xff]
    %v130 = vld [vmem:[%s1 + $0x100] sm:$0xff]
    %v131 = vld [vmem:[%s1 + $0x108] sm:$0xff]
    %v132 = vld [vmem:[%s1 + $0x110] sm:$0xff]
    %v133 = vld [vmem:[%s1 + $0x118] sm:$0xff]
    %v134 = vld [vmem:[%s1 + $0x120] sm:$0xff]
    %v135 = vld [vmem:[%s1 + $0x128] sm:$0xff]
    %v136 = vld [vmem:[%s1 + $0x130] sm:$0xff]
    %v137 = vld [vmem:[%s1 + $0x138] sm:$0xff]
    %v138 = vld [vmem:[%s1 + $0x140] sm:$0xff]
    %v139 = vld [vmem:[%s1 + $0x148] sm:$0xff]
    %v140 = vld [vmem:[%s1 + $0x150] sm:$0xff]
    %v141 = vld [vmem:[%s1 + $0x158] sm:$0xff]
    %v142 = vld [vmem:[%s1 + $0x160] sm:$0xff]
    %v143 = vld [vmem:[%s1 + $0x168] sm:$0xff]
    %v144 = vld [vmem:[%s1 + $0x170] sm:$0xff]
    %v145 = vld [vmem:[%s1 + $0x178] sm:$0xff]
    %v146 = vld [vmem:[%s1 + $0x180] sm:$0xff]
    %v147 = vld [vmem:[%s1 + $0x188] sm:$0xff]
    %v148 = vld [vmem:[%s1 + $0x190] sm:$0xff]
    %v149 = vld [vmem:[%s1 + $0x198] sm:$0xff]
    %v150 = vld [vmem:[%s1 + $0x1a0] sm:$0xff]
    %v151 = vld [vmem:[%s1 + $0x1a8] sm:$0xff]
    %v152 = vld [vmem:[%s1 + $0x1b0] sm:$0xff]
    %v153 = vld [vmem:[%s1 + $0x1b8] sm:$0xff]
    %v154 = vld [vmem:[%s1 + $0x1c0] sm:$0xff]
    %v155 = vld [vmem:[%s1 + $0x1c8] sm:$0xff]
    %v156 = vld [vmem:[%s1 + $0x1d0] sm:$0xff]
    %v157 = vld [vmem:[%s1 + $0x1d8] sm:$0xff]
    %v158 = vld [vmem:[%s1 + $0x1e0] sm:$0xff]
    %v159 = vld [vmem:[%s1 + $0x1e8] sm:$0xff]
    %v160 = vld [vmem:[%s1 + $0x1f0] sm:$0xff]
    %v161 = vld [vmem:[%s1 + $0x1f8] sm:$0xff]
    %v162 = vld [vmem:[%s1 + $0x200] sm:$0xff]
    %v163 = vld [vmem:[%s1 + $0x208] sm:$0xff]
    %v164 = vld [vmem:[%s1 + $0x210] sm:$0xff]
    %v165 = vld [vmem:[%s1 + $0x218] sm:$0xff]
    %v166 = vld [vmem:[%s1 + $0x220] sm:$0xff]
    %v167 = vld [vmem:[%s1 + $0x228] sm:$0xff]
    %v168 = vld [vmem:[%s1 + $0x230] sm:$0xff]
    %v169 = vld [vmem:[%s1 + $0x238] sm:$0xff]
    %v170 = vld [vmem:[%s1 + $0x240] sm:$0xff]
    %v171 = vld [vmem:[%s1 + $0x248] sm:$0xff]
    %v172 = vld [vmem:[%s1 + $0x250] sm:$0xff]
    %v173 = vld [vmem:[%s1 + $0x258] sm:$0xff]
    %v174 = vld [vmem:[%s1 + $0x260] sm:$0xff]
    %v175 = vld [vmem:[%s1 + $0x268] sm:$0xff]
    %v176 = vld [vmem:[%s1 + $0x270] sm:$0xff]
    %v177 = vld [vmem:[%s1 + $0x278] sm:$0xff]
    %v178 = vld [vmem:[%s1 + $0x280] sm:$0xff]
    %v179 = vld [vmem:[%s1 + $0x288] sm:$0xff]
    %v180 = vld [vmem:[%s1 + $0x290] sm:$0xff]
    %v181 = vld [vmem:[%s1 + $0x298] sm:$0xff]
    %v182 = vld [vmem:[%s1 + $0x2a0] sm:$0xff]
    %v183 = vld [vmem:[%s1 + $0x2a8] sm:$0xff]
    %v184 = vld [vmem:[%s1 + $0x2b0] sm:$0xff]
    %v185 = vld [vmem:[%s1 + $0x2b8] sm:$0xff]
    %v186 = vld [vmem:[%s1 + $0x2c0] sm:$0xff]
    %v187 = vld [vmem:[%s1 + $0x2c8] sm:$0xff]
    %v188 = vld [vmem:[%s1 + $0x2d0] sm:$0xff]
    %v189 = vld [vmem:[%s1 + $0x2d8] sm:$0xff]
    %v190 = vld [vmem:[%s1 + $0x2e0] sm:$0xff]
    %v191 = vld [vmem:[%s1 + $0x2e8] sm:$0xff]
    %v192 = vld [vmem:[%s1 + $0x2f0] sm:$0xff]
    %v193 = vld [vmem:[%s1 + $0x2f8] sm:$0xff]
    %v194 = vld [vmem:[%s1 + $0x300] sm:$0xff]
    %v195 = vld [vmem:[%s1 + $0x308] sm:$0xff]
    %v196 = vld [vmem:[%s1 + $0x310] sm:$0xff]
    %v197 = vld [vmem:[%s1 + $0x318] sm:$0xff]
    %v198 = vld [vmem:[%s1 + $0x320] sm:$0xff]
    %v199 = vld [vmem:[%s1 + $0x328] sm:$0xff]
    %v200 = vld [vmem:[%s1 + $0x330] sm:$0xff]
    %v201 = vld [vmem:[%s1 + $0x338] sm:$0xff]
    %v202 = vld [vmem:[%s1 + $0x340] sm:$0xff]
    %v203 = vld [vmem:[%s1 + $0x348] sm:$0xff]
    %v204 = vld [vmem:[%s1 + $0x350] sm:$0xff]
    %v205 = vld [vmem:[%s1 + $0x358] sm:$0xff]
    %v206 = vld [vmem:[%s1 + $0x360] sm:$0xff]
    %v207 = vld [vmem:[%s1 + $0x368] sm:$0xff]
    %v208 = vld [vmem:[%s1 + $0x370] sm:$0xff]
    %v209 = vld [vmem:[%s1 + $0x378] sm:$0xff]
    %v210 = vld [vmem:[%s1 + $0x380] sm:$0xff]
    %v211 = vld [vmem:[%s1 + $0x388] sm:$0xff]
    %v212 = vld [vmem:[%s1 + $0x390] sm:$0xff]
    %v213 = vld [vmem:[%s1 + $0x398] sm:$0xff]
    %v214 = vld [vmem:[%s1 + $0x3a0] sm:$0xff]
    %v215 = vld [vmem:[%s1 + $0x3a8] sm:$0xff]
    %v216 = vld [vmem:[%s1 + $0x3b0] sm:$0xff]
    %v217 = vld [vmem:[%s1 + $0x3b8] sm:$0xff]
    %v218 = vld [vmem:[%s1 + $0x3c0] sm:$0xff]
    %v219 = vld [vmem:[%s1 + $0x3c8] sm:$0xff]
    %v220 = vld [vmem:[%s1 + $0x3d0] sm:$0xff]
    %v221 = vld [vmem:[%s1 + $0x3d8] sm:$0xff]
    %v222 = vld [vmem:[%s1 + $0x3e0] sm:$0xff]
    %v223 = vld [vmem:[%s1 + $0x3e8] sm:$0xff]
    %v224 = vld [vmem:[%s1 + $0x3f0] sm:$0xff]
    %v225 = vld [vmem:[%s1 + $0x3f8] sm:$0xff]
    %v226 = vld [vmem:[%s1 + $0x400] sm:$0xff]
    %v227 = vld [vmem:[%s1 + $0x408] sm:$0xff]
    %v228 = vld [vmem:[%s1 + $0x410] sm:$0xff]
    %v229 = vld [vmem:[%s1 + $0x418] sm:$0xff]
    %v230 = vld [vmem:[%s1 + $0x420] sm:$0xff]
    %v231 = vld [vmem:[%s1 + $0x428] sm:$0xff]
    %v232 = vld [vmem:[%s1 + $0x430] sm:$0xff]
    %v233 = vld [vmem:[%s1 + $0x438] sm:$0xff]
    %v234 = vld [vmem:[%s1 + $0x440] sm:$0xff]
    %v235 = vld [vmem:[%s1 + $0x448] sm:$0xff]
    %v236 = vld [vmem:[%s1 + $0x450] sm:$0xff]
    %v237 = vld [vmem:[%s1 + $0x458] sm:$0xff]
    %v238 = vld [vmem:[%s1 + $0x460] sm:$0xff]
    %v239 = vld [vmem:[%s1 + $0x468] sm:$0xff]
    %v240 = vld [vmem:[%s1 + $0x470] sm:$0xff]
    %v241 = vld [vmem:[%s1 + $0x478] sm:$0xff]
    %v242 = vld [vmem:[%s1 + $0x480] sm:$0xff]
    %v243 = vld [vmem:[%s1 + $0x488] sm:$0xff]
    %v244 = vld [vmem:[%s1 + $0x490] sm:$0xff]
    %v245 = vld [vmem:[%s1 + $0x498] sm:$0xff]
    %v246 = vld [vmem:[%s1 + $0x4a0] sm:$0xff]
    %v247 = vld [vmem:[%s1 + $0x4a8] sm:$0xff]
    %v248 = vld [vmem:[%s1 + $0x4b0] sm:$0xff]
    %v249 = vld [vmem:[%s1 + $0x4b8] sm:$0xff]
    %v250 = vld [vmem:[%s1 + $0x4c0] sm:$0xff]
    %v251 = vld [vmem:[%s1 + $0x4c8] sm:$0xff]
    %v252 = vld [vmem:[%s1 + $0x4d0] sm:$0xff]
    %v253 = vld [vmem:[%s1 + $0x4d8] sm:$0xff]
    %v254 = vld [vmem:[%s1 + $0x4e0] sm:$0xff]
    %v255 = vld [vmem:[%s1 + $0x4e8] sm:$0xff]
    %v256 = vld [vmem:[%s1 + $0x4f0] sm:$0xff]
    %v257 = vld [vmem:[%s1 + $0x4f8] sm:$0xff]
    %v258 = vld [vmem:[%s1 + $0x500] sm:$0xff]
    %v259 = vld [vmem:[%s1 + $0x508] sm:$0xff]
    %v260 = vld [vmem:[%s1 + $0x510] sm:$0xff]
    %v261 = vld [vmem:[%s1 + $0x518] sm:$0xff]
    %v262 = vld [vmem:[%s1 + $0x520] sm:$0xff]
    %v263 = vld [vmem:[%s1 + $0x528] sm:$0xff]
    %v264 = vld [vmem:[%s1 + $0x530] sm:$0xff]
    %v265 = vld [vmem:[%s1 + $0x538] sm:$0xff]
    %v266 = vld [vmem:[%s1 + $0x540] sm:$0xff]
    %v267 = vld [vmem:[%s1 + $0x548] sm:$0xff]
    %v268 = vld [vmem:[%s1 + $0x550] sm:$0xff]
    %v269 = vld [vmem:[%s1 + $0x558] sm:$0xff]
    %v270 = vld [vmem:[%s1 + $0x560] sm:$0xff]
    %v271 = vld [vmem:[%s1 + $0x568] sm:$0xff]
    %v272 = vld [vmem:[%s1 + $0x570] sm:$0xff]
    %v273 = vld [vmem:[%s1 + $0x578] sm:$0xff]
    %v274 = vld [vmem:[%s1 + $0x580] sm:$0xff]
    %v275 = vld [vmem:[%s1 + $0x588] sm:$0xff]
    %v276 = vld [vmem:[%s1 + $0x590] sm:$0xff]
    %v277 = vld [vmem:[%s1 + $0x598] sm:$0xff]
    %v278 = vld [vmem:[%s1 + $0x5a0] sm:$0xff]
    %v279 = vld [vmem:[%s1 + $0x5a8] sm:$0xff]
    %v280 = vld [vmem:[%s1 + $0x5b0] sm:$0xff]
    %v281 = vld [vmem:[%s1 + $0x5b8] sm:$0xff]
    %v282 = vld [vmem:[%s1 + $0x5c0] sm:$0xff]
    %v283 = vld [vmem:[%s1 + $0x5c8] sm:$0xff]
    %v284 = vld [vmem:[%s1 + $0x5d0] sm:$0xff]
    %v285 = vld [vmem:[%s1 + $0x5d8] sm:$0xff]
    %v286 = vld [vmem:[%s1 + $0x5e0] sm:$0xff]
    %v287 = vld [vmem:[%s1 + $0x5e8] sm:$0xff]
    %v288 = vld [vmem:[%s1 + $0x5f0] sm:$0xff]
    %v289 = vld [vmem:[%s1 + $0x5f8] sm:$0xff]
    %v290 = vld [vmem:[%s1 + $0x600] sm:$0xff]
    %v291 = vld [vmem:[%s1 + $0x608] sm:$0xff]
    %v292 = vld [vmem:[%s1 + $0x610] sm:$0xff]
    %v293 = vld [vmem:[%s1 + $0x618] sm:$0xff]
    %v294 = vld [vmem:[%s1 + $0x620] sm:$0xff]
    %v295 = vld [vmem:[%s1 + $0x628] sm:$0xff]
    %v296 = vld [vmem:[%s1 + $0x630] sm:$0xff]
    %v297 = vld [vmem:[%s1 + $0x638] sm:$0xff]
    %v298 = vld [vmem:[%s1 + $0x640] sm:$0xff]
    %v299 = vld [vmem:[%s1 + $0x648] sm:$0xff]
    %v300 = vld [vmem:[%s1 + $0x650] sm:$0xff]
    %v301 = vld [vmem:[%s1 + $0x658] sm:$0xff]
    %v302 = vld [vmem:[%s1 + $0x660] sm:$0xff]
    %v303 = vld [vmem:[%s1 + $0x668] sm:$0xff]
    %v304 = vld [vmem:[%s1 + $0x670] sm:$0xff]
    %v305 = vld [vmem:[%s1 + $0x678] sm:$0xff]
    %v306 = vld [vmem:[%s1 + $0x680] sm:$0xff]
    %v307 = vld [vmem:[%s1 + $0x688] sm:$0xff]
    %v308 = vld [vmem:[%s1 + $0x690] sm:$0xff]
    %v309 = vld [vmem:[%s1 + $0x698] sm:$0xff]
    %v310 = vld [vmem:[%s1 + $0x6a0] sm:$0xff]
    %v311 = vld [vmem:[%s1 + $0x6a8] sm:$0xff]
    %v312 = vld [vmem:[%s1 + $0x6b0] sm:$0xff]
    %v313 = vld [vmem:[%s1 + $0x6b8] sm:$0xff]
    %v314 = vld [vmem:[%s1 + $0x6c0] sm:$0xff]
    %v315 = vld [vmem:[%s1 + $0x6c8] sm:$0xff]
    %v316 = vld [vmem:[%s1 + $0x6d0] sm:$0xff]
    %v317 = vld [vmem:[%s1 + $0x6d8] sm:$0xff]
    %v318 = vld [vmem:[%s1 + $0x6e0] sm:$0xff]
    %v319 = vld [vmem:[%s1 + $0x6e8] sm:$0xff]
    %v320 = vld [vmem:[%s1 + $0x6f0] sm:$0xff]
    %v321 = vld [vmem:[%s1 + $0x6f8] sm:$0xff]
    %v322 = vld [vmem:[%s1 + $0x700] sm:$0xff]
    %v323 = vld [vmem:[%s1 + $0x708] sm:$0xff]
    %v324 = vld [vmem:[%s1 + $0x710] sm:$0xff]
    %v325 = vld [vmem:[%s1 + $0x718] sm:$0xff]
    %v326 = vld [vmem:[%s1 + $0x720] sm:$0xff]
    %v327 = vld [vmem:[%s1 + $0x728] sm:$0xff]
    %v328 = vld [vmem:[%s1 + $0x730] sm:$0xff]
    %v329 = vld [vmem:[%s1 + $0x738] sm:$0xff]
    %v330 = vld [vmem:[%s1 + $0x740] sm:$0xff]
    %v331 = vld [vmem:[%s1 + $0x748] sm:$0xff]
    %v332 = vld [vmem:[%s1 + $0x750] sm:$0xff]
    %v333 = vld [vmem:[%s1 + $0x758] sm:$0xff]
    %v334 = vld [vmem:[%s1 + $0x760] sm:$0xff]
    %v335 = vld [vmem:[%s1 + $0x768] sm:$0xff]
    %v336 = vld [vmem:[%s1 + $0x770] sm:$0xff]
    %v337 = vld [vmem:[%s1 + $0x778] sm:$0xff]
    %v338 = vld [vmem:[%s1 + $0x780] sm:$0xff]
    %v339 = vld [vmem:[%s1 + $0x788] sm:$0xff]
    %v340 = vld [vmem:[%s1 + $0x790] sm:$0xff]
    %v341 = vld [vmem:[%s1 + $0x798] sm:$0xff]
    %v342 = vld [vmem:[%s1 + $0x7a0] sm:$0xff]
    %v343 = vld [vmem:[%s1 + $0x7a8] sm:$0xff]
    %v344 = vld [vmem:[%s1 + $0x7b0] sm:$0xff]
    %v345 = vld [vmem:[%s1 + $0x7b8] sm:$0xff]
    %v346 = vld [vmem:[%s1 + $0x7c0] sm:$0xff]
    %v347 = vld [vmem:[%s1 + $0x7c8] sm:$0xff]
    %v348 = vld [vmem:[%s1 + $0x7d0] sm:$0xff]
    %v349 = vld [vmem:[%s1 + $0x7d8] sm:$0xff]
    %v350 = vld [vmem:[%s1 + $0x7e0] sm:$0xff]
    %v351 = vld [vmem:[%s1 + $0x7e8] sm:$0xff]
    %v352 = vld [vmem:[%s1 + $0x7f0] sm:$0xff]
    %v353 = vld [vmem:[%s1 + $0x7f8] sm:$0xff]
    %v354 = vld [vmem:[%s1 + $0x800] sm:$0xff]
    %v355 = vld [vmem:[%s1 + $0x808] sm:$0xff]
    %v356 = vld [vmem:[%s1 + $0x810] sm:$0xff]
    %v357 = vld [vmem:[%s1 + $0x818] sm:$0xff]
    %v358 = vld [vmem:[%s1 + $0x820] sm:$0xff]
    %v359 = vld [vmem:[%s1 + $0x828] sm:$0xff]
    %v360 = vld [vmem:[%s1 + $0x830] sm:$0xff]
    %v361 = vld [vmem:[%s1 + $0x838] sm:$0xff]
    %v362 = vld [vmem:[%s1 + $0x840] sm:$0xff]
    %v363 = vld [vmem:[%s1 + $0x848] sm:$0xff]
    %v364 = vld [vmem:[%s1 + $0x850] sm:$0xff]
    %v365 = vld [vmem:[%s1 + $0x858] sm:$0xff]
    %v366 = vld [vmem:[%s1 + $0x860] sm:$0xff]
    %v367 = vld [vmem:[%s1 + $0x868] sm:$0xff]
    %v368 = vld [vmem:[%s1 + $0x870] sm:$0xff]
    %v369 = vld [vmem:[%s1 + $0x878] sm:$0xff]
    %v370 = vld [vmem:[%s1 + $0x880] sm:$0xff]
    %v371 = vld [vmem:[%s1 + $0x888] sm:$0xff]
    %v372 = vld [vmem:[%s1 + $0x890] sm:$0xff]
    %v373 = vld [vmem:[%s1 + $0x898] sm:$0xff]
    %v374 = vld [vmem:[%s1 + $0x8a0] sm:$0xff]
    %v375 = vld [vmem:[%s1 + $0x8a8] sm:$0xff]
    %v376 = vld [vmem:[%s1 + $0x8b0] sm:$0xff]
    %v377 = vld [vmem:[%s1 + $0x8b8] sm:$0xff]
    %v378 = vld [vmem:[%s1 + $0x8c0] sm:$0xff]
    %v379 = vld [vmem:[%s1 + $0x8c8] sm:$0xff]
    %v380 = vld [vmem:[%s1 + $0x8d0] sm:$0xff]
    %v381 = vld [vmem:[%s1 + $0x8d8] sm:$0xff]
    %v382 = vld [vmem:[%s1 + $0x8e0] sm:$0xff]
    %v383 = vld [vmem:[%s1 + $0x8e8] sm:$0xff]
    %v384 = vld [vmem:[%s1 + $0x8f0] sm:$0xff]
    %v385 = vld [vmem:[%s1 + $0x8f8] sm:$0xff]
    %v386 = vld [vmem:[%s1 + $0x900] sm:$0xff]
    %v387 = vld [vmem:[%s1 + $0x908] sm:$0xff]
    %v388 = vld [vmem:[%s1 + $0x910] sm:$0xff]
    %v389 = vld [vmem:[%s1 + $0x918] sm:$0xff]
    %v390 = vld [vmem:[%s1 + $0x920] sm:$0xff]
    %v391 = vld [vmem:[%s1 + $0x928] sm:$0xff]
    %v392 = vld [vmem:[%s1 + $0x930] sm:$0xff]
    %v393 = vld [vmem:[%s1 + $0x938] sm:$0xff]
    %v394 = vld [vmem:[%s1 + $0x940] sm:$0xff]
    %v395 = vld [vmem:[%s1 + $0x948] sm:$0xff]
    %v396 = vld [vmem:[%s1 + $0x950] sm:$0xff]
    %v397 = vld [vmem:[%s1 + $0x958] sm:$0xff]
    %v398 = vld [vmem:[%s1 + $0x960] sm:$0xff]
    %v399 = vld [vmem:[%s1 + $0x968] sm:$0xff]
    %v400 = vld [vmem:[%s1 + $0x970] sm:$0xff]
    %v401 = vld [vmem:[%s1 + $0x978] sm:$0xff]
    %v402 = vld [vmem:[%s1 + $0x980] sm:$0xff]
    %v403 = vld [vmem:[%s1 + $0x988] sm:$0xff]
    %v404 = vld [vmem:[%s1 + $0x990] sm:$0xff]
    %v405 = vld [vmem:[%s1 + $0x998] sm:$0xff]
    %v406 = vld [vmem:[%s1 + $0x9a0] sm:$0xff]
    %v407 = vld [vmem:[%s1 + $0x9a8] sm:$0xff]
    %v408 = vld [vmem:[%s1 + $0x9b0] sm:$0xff]
    %v409 = vld [vmem:[%s1 + $0x9b8] sm:$0xff]
    %v410 = vld [vmem:[%s1 + $0x9c0] sm:$0xff]
    %v411 = vld [vmem:[%s1 + $0x9c8] sm:$0xff]
    %v412 = vld [vmem:[%s1 + $0x9d0] sm:$0xff]
    %v413 = vld [vmem:[%s1 + $0x9d8] sm:$0xff]
    %v414 = vld [vmem:[%s1 + $0x9e0] sm:$0xff]
    %v415 = vld [vmem:[%s1 + $0x9e8] sm:$0xff]
    %v416 = vld [vmem:[%s1 + $0x9f0] sm:$0xff]
    %v417 = vld [vmem:[%s1 + $0x9f8] sm:$0xff]
    %v418 = vld [vmem:[%s1 + $0xa00] sm:$0xff]
    %v419 = vld [vmem:[%s1 + $0xa08] sm:$0xff]
    %v420 = vld [vmem:[%s1 + $0xa10] sm:$0xff]
    %v421 = vld [vmem:[%s1 + $0xa18] sm:$0xff]
    %v422 = vld [vmem:[%s1 + $0xa20] sm:$0xff]
    %v423 = vld [vmem:[%s1 + $0xa28] sm:$0xff]
    %v424 = vld [vmem:[%s1 + $0xa30] sm:$0xff]
    %v425 = vld [vmem:[%s1 + $0xa38] sm:$0xff]
    %v426 = vld [vmem:[%s1 + $0xa40] sm:$0xff]
    %v427 = vld [vmem:[%s1 + $0xa48] sm:$0xff]
    %v428 = vld [vmem:[%s1 + $0xa50] sm:$0xff]
    %v429 = vld [vmem:[%s1 + $0xa58] sm:$0xff]
    %v430 = vld [vmem:[%s1 + $0xa60] sm:$0xff]
    %v431 = vld [vmem:[%s1 + $0xa68] sm:$0xff]
    %v432 = vld [vmem:[%s1 + $0xa70] sm:$0xff]
    %v433 = vld [vmem:[%s1 + $0xa78] sm:$0xff]
    %v434 = vld [vmem:[%s1 + $0xa80] sm:$0xff]
    %v435 = vld [vmem:[%s1 + $0xa88] sm:$0xff]
    %v436 = vld [vmem:[%s1 + $0xa90] sm:$0xff]
    %v437 = vld [vmem:[%s1 + $0xa98] sm:$0xff]
    %v438 = vld [vmem:[%s1 + $0xaa0] sm:$0xff]
    %v439 = vld [vmem:[%s1 + $0xaa8] sm:$0xff]
    %v440 = vld [vmem:[%s1 + $0xab0] sm:$0xff]
    %v441 = vld [vmem:[%s1 + $0xab8] sm:$0xff]
    %v442 = vld [vmem:[%s1 + $0xac0] sm:$0xff]
    %v443 = vld [vmem:[%s1 + $0xac8] sm:$0xff]
    %v444 = vld [vmem:[%s1 + $0xad0] sm:$0xff]
    %v445 = vld [vmem:[%s1 + $0xad8] sm:$0xff]
    %v446 = vld [vmem:[%s1 + $0xae0] sm:$0xff]
    %v447 = vld [vmem:[%s1 + $0xae8] sm:$0xff]
    %v448 = vld [vmem:[%s1 + $0xaf0] sm:$0xff]
    %v449 = vld [vmem:[%s1 + $0xaf8] sm:$0xff]
    %v450 = vld [vmem:[%s1 + $0xb00] sm:$0xff]
    %v451 = vld [vmem:[%s1 + $0xb08] sm:$0xff]
    %v452 = vld [vmem:[%s1 + $0xb10] sm:$0xff]
    %v453 = vld [vmem:[%s1 + $0xb18] sm:$0xff]
    %v454 = vld [vmem:[%s1 + $0xb20] sm:$0xff]
    %v455 = vld [vmem:[%s1 + $0xb28] sm:$0xff]
    %v456 = vld [vmem:[%s1 + $0xb30] sm:$0xff]
    %v457 = vld [vmem:[%s1 + $0xb38] sm:$0xff]
    %v458 = vld [vmem:[%s1 + $0xb40] sm:$0xff]
    %v459 = vld [vmem:[%s1 + $0xb48] sm:$0xff]
    %v460 = vld [vmem:[%s1 + $0xb50] sm:$0xff]
    %v461 = vld [vmem:[%s1 + $0xb58] sm:$0xff]
    %v462 = vld [vmem:[%s1 + $0xb60] sm:$0xff]
    %v463 = vld [vmem:[%s1 + $0xb68] sm:$0xff]
    %v464 = vld [vmem:[%s1 + $0xb70] sm:$0xff]
    %v465 = vld [vmem:[%s1 + $0xb78] sm:$0xff]
    %v466 = vld [vmem:[%s1 + $0xb80] sm:$0xff]
    %v467 = vld [vmem:[%s1 + $0xb88] sm:$0xff]
    %v468 = vld [vmem:[%s1 + $0xb90] sm:$0xff]
    %v469 = vld [vmem:[%s1 + $0xb98] sm:$0xff]
    %v470 = vld [vmem:[%s1 + $0xba0] sm:$0xff]
    %v471 = vld [vmem:[%s1 + $0xba8] sm:$0xff]
    %v472 = vld [vmem:[%s1 + $0xbb0] sm:$0xff]
    %v473 = vld [vmem:[%s1 + $0xbb8] sm:$0xff]
    %v474 = vld [vmem:[%s1 + $0xbc0] sm:$0xff]
    %v475 = vld [vmem:[%s1 + $0xbc8] sm:$0xff]
    %v476 = vld [vmem:[%s1 + $0xbd0] sm:$0xff]
    %v477 = vld [vmem:[%s1 + $0xbd8] sm:$0xff]
    %v478 = vld [vmem:[%s1 + $0xbe0] sm:$0xff]
    %v479 = vld [vmem:[%s1 + $0xbe8] sm:$0xff]
    %v480 = vld [vmem:[%s1 + $0xbf0] sm:$0xff]
    %v481 = vld [vmem:[%s1 + $0xbf8] sm:$0xff]
    %v482 = vld [vmem:[%s1 + $0xc00] sm:$0xff]
    %v483 = vld [vmem:[%s1 + $0xc08] sm:$0xff]
    %v484 = vld [vmem:[%s1 + $0xc10] sm:$0xff]
    %v485 = vld [vmem:[%s1 + $0xc18] sm:$0xff]
    %v486 = vld [vmem:[%s1 + $0xc20] sm:$0xff]
    %v487 = vld [vmem:[%s1 + $0xc28] sm:$0xff]
    %v488 = vld [vmem:[%s1 + $0xc30] sm:$0xff]
    %v489 = vld [vmem:[%s1 + $0xc38] sm:$0xff]
    %v490 = vld [vmem:[%s1 + $0xc40] sm:$0xff]
    %v491 = vld [vmem:[%s1 + $0xc48] sm:$0xff]
    %v492 = vld [vmem:[%s1 + $0xc50] sm:$0xff]
    %v493 = vld [vmem:[%s1 + $0xc58] sm:$0xff]
    %v494 = vld [vmem:[%s1 + $0xc60] sm:$0xff]
    %v495 = vld [vmem:[%s1 + $0xc68] sm:$0xff]
    %v496 = vld [vmem:[%s1 + $0xc70] sm:$0xff]
    %v497 = vld [vmem:[%s1 + $0xc78] sm:$0xff]
    %v498 = vld [vmem:[%s1 + $0xc80] sm:$0xff]
    %v499 = vld [vmem:[%s1 + $0xc88] sm:$0xff]
    %v500 = vld [vmem:[%s1 + $0xc90] sm:$0xff]
    %v501 = vld [vmem:[%s1 + $0xc98] sm:$0xff]
    %v502 = vld [vmem:[%s1 + $0xca0] sm:$0xff]
    %v503 = vld [vmem:[%s1 + $0xca8] sm:$0xff]
    %v504 = vld [vmem:[%s1 + $0xcb0] sm:$0xff]
    %v505 = vld [vmem:[%s1 + $0xcb8] sm:$0xff]
    %v506 = vld [vmem:[%s1 + $0xcc0] sm:$0xff]
    %v507 = vld [vmem:[%s1 + $0xcc8] sm:$0xff]
    %v508 = vld [vmem:[%s1 + $0xcd0] sm:$0xff]
    %v509 = vld [vmem:[%s1 + $0xcd8] sm:$0xff]
    %v510 = vld [vmem:[%s1 + $0xce0] sm:$0xff]
    %v511 = vld [vmem:[%s1 + $0xce8] sm:$0xff]
    %v512 = vld [vmem:[%s1 + $0xcf0] sm:$0xff]
    %v513 = vld [vmem:[%s1 + $0xcf8] sm:$0xff]
    %v514 = vld [vmem:[%s1 + $0xd00] sm:$0xff]
    %v515 = vld [vmem:[%s1 + $0xd08] sm:$0xff]
    %v516 = vld [vmem:[%s1 + $0xd10] sm:$0xff]
    %v517 = vld [vmem:[%s1 + $0xd18] sm:$0xff]
    %v518 = vld [vmem:[%s1 + $0xd20] sm:$0xff]
    %v519 = vld [vmem:[%s1 + $0xd28] sm:$0xff]
    %v520 = vld [vmem:[%s1 + $0xd30] sm:$0xff]
    %v521 = vld [vmem:[%s1 + $0xd38] sm:$0xff]
    %v522 = vld [vmem:[%s1 + $0xd40] sm:$0xff]
    %v523 = vld [vmem:[%s1 + $0xd48] sm:$0xff]
    %v524 = vld [vmem:[%s1 + $0xd50] sm:$0xff]
    %v525 = vld [vmem:[%s1 + $0xd58] sm:$0xff]
    %v526 = vld [vmem:[%s1 + $0xd60] sm:$0xff]
    %v527 = vld [vmem:[%s1 + $0xd68] sm:$0xff]
    %v528 = vld [vmem:[%s1 + $0xd70] sm:$0xff]
    %v529 = vld [vmem:[%s1 + $0xd78] sm:$0xff]
    %v530 = vld [vmem:[%s1 + $0xd80] sm:$0xff]
    %v531 = vld [vmem:[%s1 + $0xd88] sm:$0xff]
    %v532 = vld [vmem:[%s1 + $0xd90] sm:$0xff]
    %v533 = vld [vmem:[%s1 + $0xd98] sm:$0xff]
    %v534 = vld [vmem:[%s1 + $0xda0] sm:$0xff]
    %v535 = vld [vmem:[%s1 + $0xda8] sm:$0xff]
    %v536 = vld [vmem:[%s1 + $0xdb0] sm:$0xff]
    %v537 = vld [vmem:[%s1 + $0xdb8] sm:$0xff]
    %v538 = vld [vmem:[%s1 + $0xdc0] sm:$0xff]
    %v539 = vld [vmem:[%s1 + $0xdc8] sm:$0xff]
    %v540 = vld [vmem:[%s1 + $0xdd0] sm:$0xff]
    %v541 = vld [vmem:[%s1 + $0xdd8] sm:$0xff]
    %v542 = vld [vmem:[%s1 + $0xde0] sm:$0xff]
    %v543 = vld [vmem:[%s1 + $0xde8] sm:$0xff]
    %v544 = vld [vmem:[%s1 + $0xdf0] sm:$0xff]
    %v545 = vld [vmem:[%s1 + $0xdf8] sm:$0xff]
    %v546 = vld [vmem:[%s1 + $0xe00] sm:$0xff]
    %v547 = vld [vmem:[%s1 + $0xe08] sm:$0xff]
    %v548 = vld [vmem:[%s1 + $0xe10] sm:$0xff]
    %v549 = vld [vmem:[%s1 + $0xe18] sm:$0xff]
    %v550 = vld [vmem:[%s1 + $0xe20] sm:$0xff]
    %v551 = vld [vmem:[%s1 + $0xe28] sm:$0xff]
    %v552 = vld [vmem:[%s1 + $0xe30] sm:$0xff]
    %v553 = vld [vmem:[%s1 + $0xe38] sm:$0xff]
    %v554 = vld [vmem:[%s1 + $0xe40] sm:$0xff]
    %v555 = vld [vmem:[%s1 + $0xe48] sm:$0xff]
    %v556 = vld [vmem:[%s1 + $0xe50] sm:$0xff]
    %v557 = vld [vmem:[%s1 + $0xe58] sm:$0xff]
    %v558 = vld [vmem:[%s1 + $0xe60] sm:$0xff]
    %v559 = vld [vmem:[%s1 + $0xe68] sm:$0xff]
    %v560 = vld [vmem:[%s1 + $0xe70] sm:$0xff]
    %v561 = vld [vmem:[%s1 + $0xe78] sm:$0xff]
    %v562 = vld [vmem:[%s1 + $0xe80] sm:$0xff]
    %v563 = vld [vmem:[%s1 + $0xe88] sm:$0xff]
    %v564 = vld [vmem:[%s1 + $0xe90] sm:$0xff]
    %v565 = vld [vmem:[%s1 + $0xe98] sm:$0xff]
    %v566 = vld [vmem:[%s1 + $0xea0] sm:$0xff]
    %v567 = vld [vmem:[%s1 + $0xea8] sm:$0xff]
    %v568 = vld [vmem:[%s1 + $0xeb0] sm:$0xff]
    %v569 = vld [vmem:[%s1 + $0xeb8] sm:$0xff]
    %v570 = vld [vmem:[%s1 + $0xec0] sm:$0xff]
    %v571 = vld [vmem:[%s1 + $0xec8] sm:$0xff]
    %v572 = vld [vmem:[%s1 + $0xed0] sm:$0xff]
    %v573 = vld [vmem:[%s1 + $0xed8] sm:$0xff]
    %v574 = vld [vmem:[%s1 + $0xee0] sm:$0xff]
    %v575 = vld [vmem:[%s1 + $0xee8] sm:$0xff]
    %v576 = vld [vmem:[%s1 + $0xef0] sm:$0xff]
    %v577 = vld [vmem:[%s1 + $0xef8] sm:$0xff]
    %v578 = vld [vmem:[%s1 + $0xf00] sm:$0xff]
    %v579 = vld [vmem:[%s1 + $0xf08] sm:$0xff]
    %v580 = vld [vmem:[%s1 + $0xf10] sm:$0xff]
    %v581 = vld [vmem:[%s1 + $0xf18] sm:$0xff]
    %v582 = vld [vmem:[%s1 + $0xf20] sm:$0xff]
    %v583 = vld [vmem:[%s1 + $0xf28] sm:$0xff]
    %v584 = vld [vmem:[%s1 + $0xf30] sm:$0xff]
    %v585 = vld [vmem:[%s1 + $0xf38] sm:$0xff]
    %v586 = vld [vmem:[%s1 + $0xf40] sm:$0xff]
    %v587 = vld [vmem:[%s1 + $0xf48] sm:$0xff]
    %v588 = vld [vmem:[%s1 + $0xf50] sm:$0xff]
    %v589 = vld [vmem:[%s1 + $0xf58] sm:$0xff]
    %v590 = vld [vmem:[%s1 + $0xf60] sm:$0xff]
    %v591 = vld [vmem:[%s1 + $0xf68] sm:$0xff]
    %v592 = vld [vmem:[%s1 + $0xf70] sm:$0xff]
    %v593 = vld [vmem:[%s1 + $0xf78] sm:$0xff]
    %v594 = vld [vmem:[%s1 + $0xf80] sm:$0xff]
    %v595 = vld [vmem:[%s1 + $0xf88] sm:$0xff]
    %v596 = vld [vmem:[%s1 + $0xf90] sm:$0xff]
    %v597 = vld [vmem:[%s1 + $0xf98] sm:$0xff]
    %v598 = vld [vmem:[%s1 + $0xfa0] sm:$0xff]
    %v599 = vld [vmem:[%s1 + $0xfa8] sm:$0xff]
    %v600 = vld [vmem:[%s1 + $0xfb0] sm:$0xff]
    %v601 = vld [vmem:[%s1 + $0xfb8] sm:$0xff]
    %v602 = vld [vmem:[%s1 + $0xfc0] sm:$0xff]
    %v603 = vld [vmem:[%s1 + $0xfc8] sm:$0xff]
    %v604 = vld [vmem:[%s1 + $0xfd0] sm:$0xff]
    %v605 = vld [vmem:[%s1 + $0xfd8] sm:$0xff]
    %v606 = vld [vmem:[%s1 + $0xfe0] sm:$0xff]
    %v607 = vld [vmem:[%s1 + $0xfe8] sm:$0xff]
    %v608 = vld [vmem:[%s1 + $0xff0] sm:$0xff]
    %v609 = vld [vmem:[%s1 + $0xff8] sm:$0xff]
    %v610 = vld [vmem:[%s1 + $0x1000] sm:$0xff]
    %v611 = vld [vmem:[%s1 + $0x1008] sm:$0xff]
    %v612 = vld [vmem:[%s1 + $0x1010] sm:$0xff]
    %v613 = vld [vmem:[%s1 + $0x1018] sm:$0xff]
    %v614 = vld [vmem:[%s1 + $0x1020] sm:$0xff]
    %v615 = vld [vmem:[%s1 + $0x1028] sm:$0xff]
    %v616 = vld [vmem:[%s1 + $0x1030] sm:$0xff]
    %v617 = vld [vmem:[%s1 + $0x1038] sm:$0xff]
    %v618 = vld [vmem:[%s1 + $0x1040] sm:$0xff]
    %v619 = vld [vmem:[%s1 + $0x1048] sm:$0xff]
    %v620 = vld [vmem:[%s1 + $0x1050] sm:$0xff]
    %v621 = vld [vmem:[%s1 + $0x1058] sm:$0xff]
    %v622 = vld [vmem:[%s1 + $0x1060] sm:$0xff]
    %v623 = vld [vmem:[%s1 + $0x1068] sm:$0xff]
    %v624 = vld [vmem:[%s1 + $0x1070] sm:$0xff]
    %v625 = vld [vmem:[%s1 + $0x1078] sm:$0xff]
    %v626 = vld [vmem:[%s1 + $0x1080] sm:$0xff]
    %v627 = vld [vmem:[%s1 + $0x1088] sm:$0xff]
    %v628 = vld [vmem:[%s1 + $0x1090] sm:$0xff]
    %v629 = vld [vmem:[%s1 + $0x1098] sm:$0xff]
    %v630 = vld [vmem:[%s1 + $0x10a0] sm:$0xff]
    %v631 = vld [vmem:[%s1 + $0x10a8] sm:$0xff]
    %v632 = vld [vmem:[%s1 + $0x10b0] sm:$0xff]
    %v633 = vld [vmem:[%s1 + $0x10b8] sm:$0xff]
    %v634 = vld [vmem:[%s1 + $0x10c0] sm:$0xff]
    %v635 = vld [vmem:[%s1 + $0x10c8] sm:$0xff]
    %v636 = vld [vmem:[%s1 + $0x10d0] sm:$0xff]
    %v637 = vld [vmem:[%s1 + $0x10d8] sm:$0xff]
    %v638 = vld [vmem:[%s1 + $0x10e0] sm:$0xff]
    %v639 = vld [vmem:[%s1 + $0x10e8] sm:$0xff]
    %v640 = vld [vmem:[%s1 + $0x10f0] sm:$0xff]
    %v641 = vld [vmem:[%s1 + $0x10f8] sm:$0xff]
    %v642 = vld [vmem:[%s1 + $0x1100] sm:$0xff]
    %v643 = vld [vmem:[%s1 + $0x1108] sm:$0xff]
    %v644 = vld [vmem:[%s1 + $0x1110] sm:$0xff]
    %v645 = vld [vmem:[%s1 + $0x1118] sm:$0xff]
    %v646 = vld [vmem:[%s1 + $0x1120] sm:$0xff]
    %v647 = vld [vmem:[%s1 + $0x1128] sm:$0xff]
    %v648 = vld [vmem:[%s1 + $0x1130] sm:$0xff]
    %v649 = vld [vmem:[%s1 + $0x1138] sm:$0xff]
    %v650 = vld [vmem:[%s1 + $0x1140] sm:$0xff]
    %v651 = vld [vmem:[%s1 + $0x1148] sm:$0xff]
    %v652 = vld [vmem:[%s1 + $0x1150] sm:$0xff]
    %v653 = vld [vmem:[%s1 + $0x1158] sm:$0xff]
    %v654 = vld [vmem:[%s1 + $0x1160] sm:$0xff]
    %v655 = vld [vmem:[%s1 + $0x1168] sm:$0xff]
    %v656 = vld [vmem:[%s1 + $0x1170] sm:$0xff]
    %v657 = vld [vmem:[%s1 + $0x1178] sm:$0xff]
    %v658 = vld [vmem:[%s1 + $0x1180] sm:$0xff]
    %v659 = vld [vmem:[%s1 + $0x1188] sm:$0xff]
    %v660 = vld [vmem:[%s1 + $0x1190] sm:$0xff]
    %v661 = vld [vmem:[%s1 + $0x1198] sm:$0xff]
    %v662 = vld [vmem:[%s1 + $0x11a0] sm:$0xff]
    %v663 = vld [vmem:[%s1 + $0x11a8] sm:$0xff]
    %v664 = vld [vmem:[%s1 + $0x11b0] sm:$0xff]
    %v665 = vld [vmem:[%s1 + $0x11b8] sm:$0xff]
    %v666 = vld [vmem:[%s1 + $0x11c0] sm:$0xff]
    %v667 = vld [vmem:[%s1 + $0x11c8] sm:$0xff]
    %v668 = vld [vmem:[%s1 + $0x11d0] sm:$0xff]
    %v669 = vld [vmem:[%s1 + $0x11d8] sm:$0xff]
    %v670 = vld [vmem:[%s1 + $0x11e0] sm:$0xff]
    %v671 = vld [vmem:[%s1 + $0x11e8] sm:$0xff]
    %v672 = vld [vmem:[%s1 + $0x11f0] sm:$0xff]
    %v673 = vld [vmem:[%s1 + $0x11f8] sm:$0xff]
    %v674 = vld [vmem:[%s1 + $0x1200] sm:$0xff]
    %v675 = vld [vmem:[%s1 + $0x1208] sm:$0xff]
    %v676 = vld [vmem:[%s1 + $0x1210] sm:$0xff]
    %v677 = vld [vmem:[%s1 + $0x1218] sm:$0xff]
    %v678 = vld [vmem:[%s1 + $0x1220] sm:$0xff]
    %v679 = vld [vmem:[%s1 + $0x1228] sm:$0xff]
    %v680 = vld [vmem:[%s1 + $0x1230] sm:$0xff]
    %v681 = vld [vmem:[%s1 + $0x1238] sm:$0xff]
    %v682 = vld [vmem:[%s1 + $0x1240] sm:$0xff]
    %v683 = vld [vmem:[%s1 + $0x1248] sm:$0xff]
    %v684 = vld [vmem:[%s1 + $0x1250] sm:$0xff]
    %v685 = vld [vmem:[%s1 + $0x1258] sm:$0xff]
    %v686 = vld [vmem:[%s1 + $0x1260] sm:$0xff]
    %v687 = vld [vmem:[%s1 + $0x1268] sm:$0xff]
    %v688 = vld [vmem:[%s1 + $0x1270] sm:$0xff]
    %v689 = vld [vmem:[%s1 + $0x1278] sm:$0xff]
    %v690 = vld [vmem:[%s1 + $0x1280] sm:$0xff]
    %v691 = vld [vmem:[%s1 + $0x1288] sm:$0xff]
    %v692 = vld [vmem:[%s1 + $0x1290] sm:$0xff]
    %v693 = vld [vmem:[%s1 + $0x1298] sm:$0xff]
    %v694 = vld [vmem:[%s1 + $0x12a0] sm:$0xff]
    %v695 = vld [vmem:[%s1 + $0x12a8] sm:$0xff]
    %v696 = vld [vmem:[%s1 + $0x12b0] sm:$0xff]
    %v697 = vld [vmem:[%s1 + $0x12b8] sm:$0xff]
    %v698 = vld [vmem:[%s1 + $0x12c0] sm:$0xff]
    %v699 = vld [vmem:[%s1 + $0x12c8] sm:$0xff]
    %v700 = vld [vmem:[%s1 + $0x12d0] sm:$0xff]
    %v701 = vld [vmem:[%s1 + $0x12d8] sm:$0xff]
    %v702 = vld [vmem:[%s1 + $0x12e0] sm:$0xff]
    %v703 = vld [vmem:[%s1 + $0x12e8] sm:$0xff]
    %v704 = vld [vmem:[%s1 + $0x12f0] sm:$0xff]
    %v705 = vld [vmem:[%s1 + $0x12f8] sm:$0xff]
    %v706 = vld [vmem:[%s1 + $0x1300] sm:$0xff]
    %v707 = vld [vmem:[%s1 + $0x1308] sm:$0xff]
    %v708 = vld [vmem:[%s1 + $0x1310] sm:$0xff]
    %v709 = vld [vmem:[%s1 + $0x1318] sm:$0xff]
    %v710 = vld [vmem:[%s1 + $0x1320] sm:$0xff]
    %v711 = vld [vmem:[%s1 + $0x1328] sm:$0xff]
    %v712 = vld [vmem:[%s1 + $0x1330] sm:$0xff]
    %v713 = vld [vmem:[%s1 + $0x1338] sm:$0xff]
    %v714 = vld [vmem:[%s1 + $0x1340] sm:$0xff]
    %v715 = vld [vmem:[%s1 + $0x1348] sm:$0xff]
    %v716 = vld [vmem:[%s1 + $0x1350] sm:$0xff]
    %v717 = vld [vmem:[%s1 + $0x1358] sm:$0xff]
    %v718 = vld [vmem:[%s1 + $0x1360] sm:$0xff]
    %v719 = vld [vmem:[%s1 + $0x1368] sm:$0xff]
    %v720 = vld [vmem:[%s1 + $0x1370] sm:$0xff]
    %v721 = vld [vmem:[%s1 + $0x1378] sm:$0xff]
    %v722 = vld [vmem:[%s1 + $0x1380] sm:$0xff]
    %v723 = vld [vmem:[%s1 + $0x1388] sm:$0xff]
    %v724 = vld [vmem:[%s1 + $0x1390] sm:$0xff]
    %v725 = vld [vmem:[%s1 + $0x1398] sm:$0xff]
    %v726 = vld [vmem:[%s1 + $0x13a0] sm:$0xff]
    %v727 = vld [vmem:[%s1 + $0x13a8] sm:$0xff]
    %v728 = vld [vmem:[%s1 + $0x13b0] sm:$0xff]
    %v729 = vld [vmem:[%s1 + $0x13b8] sm:$0xff]
    %v730 = vld [vmem:[%s1 + $0x13c0] sm:$0xff]
    %v731 = vld [vmem:[%s1 + $0x13c8] sm:$0xff]
    %v732 = vld [vmem:[%s1 + $0x13d0] sm:$0xff]
    %v733 = vld [vmem:[%s1 + $0x13d8] sm:$0xff]
    %v734 = vld [vmem:[%s1 + $0x13e0] sm:$0xff]
    %v735 = vld [vmem:[%s1 + $0x13e8] sm:$0xff]
    %v736 = vld [vmem:[%s1 + $0x13f0] sm:$0xff]
    %v737 = vld [vmem:[%s1 + $0x13f8] sm:$0xff]
    %v738 = vld [vmem:[%s1 + $0x1400] sm:$0xff]
    %v739 = vld [vmem:[%s1 + $0x1408] sm:$0xff]
    %v740 = vld [vmem:[%s1 + $0x1410] sm:$0xff]
    %v741 = vld [vmem:[%s1 + $0x1418] sm:$0xff]
    %v742 = vld [vmem:[%s1 + $0x1420] sm:$0xff]
    %v743 = vld [vmem:[%s1 + $0x1428] sm:$0xff]
    %v744 = vld [vmem:[%s1 + $0x1430] sm:$0xff]
    %v745 = vld [vmem:[%s1 + $0x1438] sm:$0xff]
    %v746 = vld [vmem:[%s1 + $0x1440] sm:$0xff]
    %v747 = vld [vmem:[%s1 + $0x1448] sm:$0xff]
    %v748 = vld [vmem:[%s1 + $0x1450] sm:$0xff]
    %v749 = vld [vmem:[%s1 + $0x1458] sm:$0xff]
    %v750 = vld [vmem:[%s1 + $0x1460] sm:$0xff]
    %v751 = vld [vmem:[%s1 + $0x1468] sm:$0xff]
    %v752 = vld [vmem:[%s1 + $0x1470] sm:$0xff]
    %v753 = vld [vmem:[%s1 + $0x1478] sm:$0xff]
    %v754 = vld [vmem:[%s1 + $0x1480] sm:$0xff]
    %v755 = vld [vmem:[%s1 + $0x1488] sm:$0xff]
    %v756 = vld [vmem:[%s1 + $0x1490] sm:$0xff]
    %v757 = vld [vmem:[%s1 + $0x1498] sm:$0xff]
    %v758 = vld [vmem:[%s1 + $0x14a0] sm:$0xff]
    %v759 = vld [vmem:[%s1 + $0x14a8] sm:$0xff]
    %v760 = vld [vmem:[%s1 + $0x14b0] sm:$0xff]
    %v761 = vld [vmem:[%s1 + $0x14b8] sm:$0xff]
    %v762 = vld [vmem:[%s1 + $0x14c0] sm:$0xff]
    %v763 = vld [vmem:[%s1 + $0x14c8] sm:$0xff]
    %v764 = vld [vmem:[%s1 + $0x14d0] sm:$0xff]
    %v765 = vld [vmem:[%s1 + $0x14d8] sm:$0xff]
    %v766 = vld [vmem:[%s1 + $0x14e0] sm:$0xff]
    %v767 = vld [vmem:[%s1 + $0x14e8] sm:$0xff]
    %v768 = vld [vmem:[%s1 + $0x14f0] sm:$0xff]
    %v769 = vld [vmem:[%s1 + $0x14f8] sm:$0xff]
    %v770 = vld [vmem:[%s1 + $0x1500] sm:$0xff]
    %v771 = vld [vmem:[%s1 + $0x1508] sm:$0xff]
    %v772 = vld [vmem:[%s1 + $0x1510] sm:$0xff]
    %v773 = vld [vmem:[%s1 + $0x1518] sm:$0xff]
    %v774 = vld [vmem:[%s1 + $0x1520] sm:$0xff]
    %v775 = vld [vmem:[%s1 + $0x1528] sm:$0xff]
    %v776 = vld [vmem:[%s1 + $0x1530] sm:$0xff]
    %v777 = vld [vmem:[%s1 + $0x1538] sm:$0xff]
    %v778 = vld [vmem:[%s1 + $0x1540] sm:$0xff]
    %v779 = vld [vmem:[%s1 + $0x1548] sm:$0xff]
    %v780 = vld [vmem:[%s1 + $0x1550] sm:$0xff]
    %v781 = vld [vmem:[%s1 + $0x1558] sm:$0xff]
    %v782 = vld [vmem:[%s1 + $0x1560] sm:$0xff]
    %v783 = vld [vmem:[%s1 + $0x1568] sm:$0xff]
    %v784 = vld [vmem:[%s1 + $0x1570] sm:$0xff]
    %v785 = vld [vmem:[%s1 + $0x1578] sm:$0xff]
    %v786 = vld [vmem:[%s1 + $0x1580] sm:$0xff]
    %v787 = vld [vmem:[%s1 + $0x1588] sm:$0xff]
    %v788 = vld [vmem:[%s1 + $0x1590] sm:$0xff]
    %v789 = vld [vmem:[%s1 + $0x1598] sm:$0xff]
    %v790 = vld [vmem:[%s1 + $0x15a0] sm:$0xff]
    %v791 = vld [vmem:[%s1 + $0x15a8] sm:$0xff]
    %v792 = vld [vmem:[%s1 + $0x15b0] sm:$0xff]
    %v793 = vld [vmem:[%s1 + $0x15b8] sm:$0xff]
    %v794 = vld [vmem:[%s1 + $0x15c0] sm:$0xff]
    %v795 = vld [vmem:[%s1 + $0x15c8] sm:$0xff]
    %v796 = vld [vmem:[%s1 + $0x15d0] sm:$0xff]
    %v797 = vld [vmem:[%s1 + $0x15d8] sm:$0xff]
    %v798 = vld [vmem:[%s1 + $0x15e0] sm:$0xff]
    %v799 = vld [vmem:[%s1 + $0x15e8] sm:$0xff]
    %v800 = vld [vmem:[%s1 + $0x15f0] sm:$0xff]
    %v801 = vld [vmem:[%s1 + $0x15f8] sm:$0xff]
    %v802 = vld [vmem:[%s1 + $0x1600] sm:$0xff]
    %v803 = vld [vmem:[%s1 + $0x1608] sm:$0xff]
    %v804 = vld [vmem:[%s1 + $0x1610] sm:$0xff]
    %v805 = vld [vmem:[%s1 + $0x1618] sm:$0xff]
    %v806 = vld [vmem:[%s1 + $0x1620] sm:$0xff]
    %v807 = vld [vmem:[%s1 + $0x1628] sm:$0xff]
    %v808 = vld [vmem:[%s1 + $0x1630] sm:$0xff]
    %v809 = vld [vmem:[%s1 + $0x1638] sm:$0xff]
    %v810 = vld [vmem:[%s1 + $0x1640] sm:$0xff]
    %v811 = vld [vmem:[%s1 + $0x1648] sm:$0xff]
    %v812 = vld [vmem:[%s1 + $0x1650] sm:$0xff]
    %v813 = vld [vmem:[%s1 + $0x1658] sm:$0xff]
    %v814 = vld [vmem:[%s1 + $0x1660] sm:$0xff]
    %v815 = vld [vmem:[%s1 + $0x1668] sm:$0xff]
    %v816 = vld [vmem:[%s1 + $0x1670] sm:$0xff]
    %v817 = vld [vmem:[%s1 + $0x1678] sm:$0xff]
    %v818 = vld [vmem:[%s1 + $0x1680] sm:$0xff]
    %v819 = vld [vmem:[%s1 + $0x1688] sm:$0xff]
    %v820 = vld [vmem:[%s1 + $0x1690] sm:$0xff]
    %v821 = vld [vmem:[%s1 + $0x1698] sm:$0xff]
    %v822 = vld [vmem:[%s1 + $0x16a0] sm:$0xff]
    %v823 = vld [vmem:[%s1 + $0x16a8] sm:$0xff]
    %v824 = vld [vmem:[%s1 + $0x16b0] sm:$0xff]
    %v825 = vld [vmem:[%s1 + $0x16b8] sm:$0xff]
    %v826 = vld [vmem:[%s1 + $0x16c0] sm:$0xff]
    %v827 = vld [vmem:[%s1 + $0x16c8] sm:$0xff]
    %v828 = vld [vmem:[%s1 + $0x16d0] sm:$0xff]
    %v829 = vld [vmem:[%s1 + $0x16d8] sm:$0xff]
    %v830 = vld [vmem:[%s1 + $0x16e0] sm:$0xff]
    %v831 = vld [vmem:[%s1 + $0x16e8] sm:$0xff]
    %v832 = vld [vmem:[%s1 + $0x16f0] sm:$0xff]
    %v833 = vld [vmem:[%s1 + $0x16f8] sm:$0xff]
    %v834 = vld [vmem:[%s1 + $0x1700] sm:$0xff]
    %v835 = vld [vmem:[%s1 + $0x1708] sm:$0xff]
    %v836 = vld [vmem:[%s1 + $0x1710] sm:$0xff]
    %v837 = vld [vmem:[%s1 + $0x1718] sm:$0xff]
    %v838 = vld [vmem:[%s1 + $0x1720] sm:$0xff]
    %v839 = vld [vmem:[%s1 + $0x1728] sm:$0xff]
    %v840 = vld [vmem:[%s1 + $0x1730] sm:$0xff]
    %v841 = vld [vmem:[%s1 + $0x1738] sm:$0xff]
    %v842 = vld [vmem:[%s1 + $0x1740] sm:$0xff]
    %v843 = vld [vmem:[%s1 + $0x1748] sm:$0xff]
    %v844 = vld [vmem:[%s1 + $0x1750] sm:$0xff]
    %v845 = vld [vmem:[%s1 + $0x1758] sm:$0xff]
    %v846 = vld [vmem:[%s1 + $0x1760] sm:$0xff]
    %v847 = vld [vmem:[%s1 + $0x1768] sm:$0xff]
    %v848 = vld [vmem:[%s1 + $0x1770] sm:$0xff]
    %v849 = vld [vmem:[%s1 + $0x1778] sm:$0xff]
    %v850 = vld [vmem:[%s1 + $0x1780] sm:$0xff]
    %v851 = vld [vmem:[%s1 + $0x1788] sm:$0xff]
    %v852 = vld [vmem:[%s1 + $0x1790] sm:$0xff]
    %v853 = vld [vmem:[%s1 + $0x1798] sm:$0xff]
    %v854 = vld [vmem:[%s1 + $0x17a0] sm:$0xff]
    %v855 = vld [vmem:[%s1 + $0x17a8] sm:$0xff]
    %v856 = vld [vmem:[%s1 + $0x17b0] sm:$0xff]
    %v857 = vld [vmem:[%s1 + $0x17b8] sm:$0xff]
    %v858 = vld [vmem:[%s1 + $0x17c0] sm:$0xff]
    %v859 = vld [vmem:[%s1 + $0x17c8] sm:$0xff]
    %v860 = vld [vmem:[%s1 + $0x17d0] sm:$0xff]
    %v861 = vld [vmem:[%s1 + $0x17d8] sm:$0xff]
    %v862 = vld [vmem:[%s1 + $0x17e0] sm:$0xff]
    %v863 = vld [vmem:[%s1 + $0x17e8] sm:$0xff]
    %v864 = vld [vmem:[%s1 + $0x17f0] sm:$0xff]
    %v865 = vld [vmem:[%s1 + $0x17f8] sm:$0xff]
    %v866 = vld [vmem:[%s1 + $0x1800] sm:$0xff]
    %v867 = vld [vmem:[%s1 + $0x1808] sm:$0xff]
    %v868 = vld [vmem:[%s1 + $0x1810] sm:$0xff]
    %v869 = vld [vmem:[%s1 + $0x1818] sm:$0xff]
    %v870 = vld [vmem:[%s1 + $0x1820] sm:$0xff]
    %v871 = vld [vmem:[%s1 + $0x1828] sm:$0xff]
    %v872 = vld [vmem:[%s1 + $0x1830] sm:$0xff]
    %v873 = vld [vmem:[%s1 + $0x1838] sm:$0xff]
    %v874 = vld [vmem:[%s1 + $0x1840] sm:$0xff]
    %v875 = vld [vmem:[%s1 + $0x1848] sm:$0xff]
    %v876 = vld [vmem:[%s1 + $0x1850] sm:$0xff]
    %v877 = vld [vmem:[%s1 + $0x1858] sm:$0xff]
    %v878 = vld [vmem:[%s1 + $0x1860] sm:$0xff]
    %v879 = vld [vmem:[%s1 + $0x1868] sm:$0xff]
    %v880 = vld [vmem:[%s1 + $0x1870] sm:$0xff]
    %v881 = vld [vmem:[%s1 + $0x1878] sm:$0xff]
    %v882 = vld [vmem:[%s1 + $0x1880] sm:$0xff]
    %v883 = vld [vmem:[%s1 + $0x1888] sm:$0xff]
    %v884 = vld [vmem:[%s1 + $0x1890] sm:$0xff]
    %v885 = vld [vmem:[%s1 + $0x1898] sm:$0xff]
    %v886 = vld [vmem:[%s1 + $0x18a0] sm:$0xff]
    %v887 = vld [vmem:[%s1 + $0x18a8] sm:$0xff]
    %v888 = vld [vmem:[%s1 + $0x18b0] sm:$0xff]
    %v889 = vld [vmem:[%s1 + $0x18b8] sm:$0xff]
    %v890 = vld [vmem:[%s1 + $0x18c0] sm:$0xff]
    %v891 = vld [vmem:[%s1 + $0x18c8] sm:$0xff]
    %v892 = vld [vmem:[%s1 + $0x18d0] sm:$0xff]
    %v893 = vld [vmem:[%s1 + $0x18d8] sm:$0xff]
    %v894 = vld [vmem:[%s1 + $0x18e0] sm:$0xff]
    %v895 = vld [vmem:[%s1 + $0x18e8] sm:$0xff]
    %v896 = vld [vmem:[%s1 + $0x18f0] sm:$0xff]
    %v897 = vld [vmem:[%s1 + $0x18f8] sm:$0xff]
    %v898 = vld [vmem:[%s1 + $0x1900] sm:$0xff]
    %v899 = vld [vmem:[%s1 + $0x1908] sm:$0xff]
    %v900 = vld [vmem:[%s1 + $0x1910] sm:$0xff]
    %v901 = vld [vmem:[%s1 + $0x1918] sm:$0xff]
    %v902 = vld [vmem:[%s1 + $0x1920] sm:$0xff]
    %v903 = vld [vmem:[%s1 + $0x1928] sm:$0xff]
    %v904 = vld [vmem:[%s1 + $0x1930] sm:$0xff]
    %v905 = vld [vmem:[%s1 + $0x1938] sm:$0xff]
    %v906 = vld [vmem:[%s1 + $0x1940] sm:$0xff]
    %v907 = vld [vmem:[%s1 + $0x1948] sm:$0xff]
    %v908 = vld [vmem:[%s1 + $0x1950] sm:$0xff]
    %v909 = vld [vmem:[%s1 + $0x1958] sm:$0xff]
    %v910 = vld [vmem:[%s1 + $0x1960] sm:$0xff]
    %v911 = vld [vmem:[%s1 + $0x1968] sm:$0xff]
    %v912 = vld [vmem:[%s1 + $0x1970] sm:$0xff]
    %v913 = vld [vmem:[%s1 + $0x1978] sm:$0xff]
    %v914 = vld [vmem:[%s1 + $0x1980] sm:$0xff]
    %v915 = vld [vmem:[%s1 + $0x1988] sm:$0xff]
    %v916 = vld [vmem:[%s1 + $0x1990] sm:$0xff]
    %v917 = vld [vmem:[%s1 + $0x1998] sm:$0xff]
    %v918 = vld [vmem:[%s1 + $0x19a0] sm:$0xff]
    %v919 = vld [vmem:[%s1 + $0x19a8] sm:$0xff]
    %v920 = vld [vmem:[%s1 + $0x19b0] sm:$0xff]
    %v921 = vld [vmem:[%s1 + $0x19b8] sm:$0xff]
    %v922 = vld [vmem:[%s1 + $0x19c0] sm:$0xff]
    %v923 = vld [vmem:[%s1 + $0x19c8] sm:$0xff]
    %v924 = vld [vmem:[%s1 + $0x19d0] sm:$0xff]
    %v925 = vld [vmem:[%s1 + $0x19d8] sm:$0xff]
    %v926 = vld [vmem:[%s1 + $0x19e0] sm:$0xff]
    %v927 = vld [vmem:[%s1 + $0x19e8] sm:$0xff]
    %v928 = vld [vmem:[%s1 + $0x19f0] sm:$0xff]
    %v929 = vld [vmem:[%s1 + $0x19f8] sm:$0xff]
    %v930 = vld [vmem:[%s2] sm:$0xff]
    %v1763 = vunpack.c.l.b16 %v98
    %v1764 = vunpack.c.h.b16 %v98
    %v1765 = vunpack.c.l.b16 %v99
    %v1766 = vunpack.c.h.b16 %v99
    %v1767 = vunpack.c.l.b16 %v100
    %v1768 = vunpack.c.h.b16 %v100
    %v1769 = vunpack.c.l.b16 %v101
    %v1770 = vunpack.c.h.b16 %v101
    %v1771 = vunpack.c.l.b16 %v102
    %v1772 = vunpack.c.h.b16 %v102
    %v1773 = vunpack.c.l.b16 %v103
    %v1774 = vunpack.c.h.b16 %v103
    %v1775 = vunpack.c.l.b16 %v104
    %v1776 = vunpack.c.h.b16 %v104
    %v1777 = vunpack.c.l.b16 %v105
    %v1778 = vunpack.c.h.b16 %v105
    %v1779 = vunpack.c.l.b16 %v106
    %v1780 = vunpack.c.h.b16 %v106
    %v1781 = vunpack.c.l.b16 %v107
    %v1782 = vunpack.c.h.b16 %v107
    %v1783 = vunpack.c.l.b16 %v108
    %v1784 = vunpack.c.h.b16 %v108
    %v1785 = vunpack.c.l.b16 %v109
    %v1786 = vunpack.c.h.b16 %v109
    %v1787 = vunpack.c.l.b16 %v110
    %v1788 = vunpack.c.h.b16 %v110
    %v1789 = vunpack.c.l.b16 %v111
    %v1790 = vunpack.c.h.b16 %v111
    %v1791 = vunpack.c.l.b16 %v112
    %v1792 = vunpack.c.h.b16 %v112
    %v1793 = vunpack.c.l.b16 %v113
    %v1794 = vunpack.c.h.b16 %v113
    %v1795 = vunpack.c.l.b16 %v114
    %v1796 = vunpack.c.h.b16 %v114
    %v1797 = vunpack.c.l.b16 %v115
    %v1798 = vunpack.c.h.b16 %v115
    %v1799 = vunpack.c.l.b16 %v116
    %v1800 = vunpack.c.h.b16 %v116
    %v1801 = vunpack.c.l.b16 %v117
    %v1802 = vunpack.c.h.b16 %v117
    %v1803 = vunpack.c.l.b16 %v118
    %v1804 = vunpack.c.h.b16 %v118
    %v1805 = vunpack.c.l.b16 %v119
    %v1806 = vunpack.c.h.b16 %v119
    %v1807 = vunpack.c.l.b16 %v120
    %v1808 = vunpack.c.h.b16 %v120
    %v1809 = vunpack.c.l.b16 %v121
    %v1810 = vunpack.c.h.b16 %v121
    %v1811 = vunpack.c.l.b16 %v122
    %v1812 = vunpack.c.h.b16 %v122
    %v1813 = vunpack.c.l.b16 %v123
    %v1814 = vunpack.c.h.b16 %v123
    %v1815 = vunpack.c.l.b16 %v124
    %v1816 = vunpack.c.h.b16 %v124
    %v1817 = vunpack.c.l.b16 %v125
    %v1818 = vunpack.c.h.b16 %v125
    %v1819 = vunpack.c.l.b16 %v126
    %v1820 = vunpack.c.h.b16 %v126
    %v1821 = vunpack.c.l.b16 %v127
    %v1822 = vunpack.c.h.b16 %v127
    %v1823 = vunpack.c.l.b16 %v128
    %v1824 = vunpack.c.h.b16 %v128
    %v1825 = vunpack.c.l.b16 %v129
    %v1826 = vunpack.c.h.b16 %v129
    %v1827 = vunpack.c.l.b16 %v130
    %v1828 = vunpack.c.h.b16 %v130
    %v1829 = vunpack.c.l.b16 %v131
    %v1830 = vunpack.c.h.b16 %v131
    %v1831 = vunpack.c.l.b16 %v132
    %v1832 = vunpack.c.h.b16 %v132
    %v1833 = vunpack.c.l.b16 %v133
    %v1834 = vunpack.c.h.b16 %v133
    %v1835 = vunpack.c.l.b16 %v134
    %v1836 = vunpack.c.h.b16 %v134
    %v1837 = vunpack.c.l.b16 %v135
    %v1838 = vunpack.c.h.b16 %v135
    %v1839 = vunpack.c.l.b16 %v136
    %v1840 = vunpack.c.h.b16 %v136
    %v1841 = vunpack.c.l.b16 %v137
    %v1842 = vunpack.c.h.b16 %v137
    %v1843 = vunpack.c.l.b16 %v138
    %v1844 = vunpack.c.h.b16 %v138
    %v1845 = vunpack.c.l.b16 %v139
    %v1846 = vunpack.c.h.b16 %v139
    %v1847 = vunpack.c.l.b16 %v140
    %v1848 = vunpack.c.h.b16 %v140
    %v1849 = vunpack.c.l.b16 %v141
    %v1850 = vunpack.c.h.b16 %v141
    %v1851 = vunpack.c.l.b16 %v142
    %v1852 = vunpack.c.h.b16 %v142
    %v1853 = vunpack.c.l.b16 %v143
    %v1854 = vunpack.c.h.b16 %v143
    %v1855 = vunpack.c.l.b16 %v144
    %v1856 = vunpack.c.h.b16 %v144
    %v1857 = vunpack.c.l.b16 %v145
    %v1858 = vunpack.c.h.b16 %v145
    %v1859 = vunpack.c.l.b16 %v146
    %v1860 = vunpack.c.h.b16 %v146
    %v1861 = vunpack.c.l.b16 %v147
    %v1862 = vunpack.c.h.b16 %v147
    %v1863 = vunpack.c.l.b16 %v148
    %v1864 = vunpack.c.h.b16 %v148
    %v1865 = vunpack.c.l.b16 %v149
    %v1866 = vunpack.c.h.b16 %v149
    %v1867 = vunpack.c.l.b16 %v150
    %v1868 = vunpack.c.h.b16 %v150
    %v1869 = vunpack.c.l.b16 %v151
    %v1870 = vunpack.c.h.b16 %v151
    %v1871 = vunpack.c.l.b16 %v152
    %v1872 = vunpack.c.h.b16 %v152
    %v1873 = vunpack.c.l.b16 %v153
    %v1874 = vunpack.c.h.b16 %v153
    %v1875 = vunpack.c.l.b16 %v154
    %v1876 = vunpack.c.h.b16 %v154
    %v1877 = vunpack.c.l.b16 %v155
    %v1878 = vunpack.c.h.b16 %v155
    %v1879 = vunpack.c.l.b16 %v156
    %v1880 = vunpack.c.h.b16 %v156
    %v1881 = vunpack.c.l.b16 %v157
    %v1882 = vunpack.c.h.b16 %v157
    %v1883 = vunpack.c.l.b16 %v158
    %v1884 = vunpack.c.h.b16 %v158
    %v1885 = vunpack.c.l.b16 %v159
    %v1886 = vunpack.c.h.b16 %v159
    %v1887 = vunpack.c.l.b16 %v160
    %v1888 = vunpack.c.h.b16 %v160
    %v1889 = vunpack.c.l.b16 %v161
    %v1890 = vunpack.c.h.b16 %v161
    %v1891 = vunpack.c.l.b16 %v162
    %v1892 = vunpack.c.h.b16 %v162
    %v1893 = vunpack.c.l.b16 %v163
    %v1894 = vunpack.c.h.b16 %v163
    %v1895 = vunpack.c.l.b16 %v164
    %v1896 = vunpack.c.h.b16 %v164
    %v1897 = vunpack.c.l.b16 %v165
    %v1898 = vunpack.c.h.b16 %v165
    %v1899 = vunpack.c.l.b16 %v166
    %v1900 = vunpack.c.h.b16 %v166
    %v1901 = vunpack.c.l.b16 %v167
    %v1902 = vunpack.c.h.b16 %v167
    %v1903 = vunpack.c.l.b16 %v168
    %v1904 = vunpack.c.h.b16 %v168
    %v1905 = vunpack.c.l.b16 %v169
    %v1906 = vunpack.c.h.b16 %v169
    %v1907 = vunpack.c.l.b16 %v170
    %v1908 = vunpack.c.h.b16 %v170
    %v1909 = vunpack.c.l.b16 %v171
    %v1910 = vunpack.c.h.b16 %v171
    %v1911 = vunpack.c.l.b16 %v172
    %v1912 = vunpack.c.h.b16 %v172
    %v1913 = vunpack.c.l.b16 %v173
    %v1914 = vunpack.c.h.b16 %v173
    %v1915 = vunpack.c.l.b16 %v174
    %v1916 = vunpack.c.h.b16 %v174
    %v1917 = vunpack.c.l.b16 %v175
    %v1918 = vunpack.c.h.b16 %v175
    %v1919 = vunpack.c.l.b16 %v176
    %v1920 = vunpack.c.h.b16 %v176
    %v1921 = vunpack.c.l.b16 %v177
    %v1922 = vunpack.c.h.b16 %v177
    %v1923 = vunpack.c.l.b16 %v178
    %v1924 = vunpack.c.h.b16 %v178
    %v1925 = vunpack.c.l.b16 %v179
    %v1926 = vunpack.c.h.b16 %v179
    %v1927 = vunpack.c.l.b16 %v180
    %v1928 = vunpack.c.h.b16 %v180
    %v1929 = vunpack.c.l.b16 %v181
    %v1930 = vunpack.c.h.b16 %v181
    %v1931 = vunpack.c.l.b16 %v182
    %v1932 = vunpack.c.h.b16 %v182
    %v1933 = vunpack.c.l.b16 %v183
    %v1934 = vunpack.c.h.b16 %v183
    %v1935 = vunpack.c.l.b16 %v184
    %v1936 = vunpack.c.h.b16 %v184
    %v1937 = vunpack.c.l.b16 %v185
    %v1938 = vunpack.c.h.b16 %v185
    %v1939 = vunpack.c.l.b16 %v186
    %v1940 = vunpack.c.h.b16 %v186
    %v1941 = vunpack.c.l.b16 %v187
    %v1942 = vunpack.c.h.b16 %v187
    %v1943 = vunpack.c.l.b16 %v188
    %v1944 = vunpack.c.h.b16 %v188
    %v1945 = vunpack.c.l.b16 %v189
    %v1946 = vunpack.c.h.b16 %v189
    %v1947 = vunpack.c.l.b16 %v190
    %v1948 = vunpack.c.h.b16 %v190
    %v1949 = vunpack.c.l.b16 %v191
    %v1950 = vunpack.c.h.b16 %v191
    %v1951 = vunpack.c.l.b16 %v192
    %v1952 = vunpack.c.h.b16 %v192
    %v1953 = vunpack.c.l.b16 %v193
    %v1954 = vunpack.c.h.b16 %v193
    %v1955 = vunpack.c.l.b16 %v194
    %v1956 = vunpack.c.h.b16 %v194
    %v1957 = vunpack.c.l.b16 %v195
    %v1958 = vunpack.c.h.b16 %v195
    %v1959 = vunpack.c.l.b16 %v196
    %v1960 = vunpack.c.h.b16 %v196
    %v1961 = vunpack.c.l.b16 %v197
    %v1962 = vunpack.c.h.b16 %v197
    %v1963 = vunpack.c.l.b16 %v198
    %v1964 = vunpack.c.h.b16 %v198
    %v1965 = vunpack.c.l.b16 %v199
    %v1966 = vunpack.c.h.b16 %v199
    %v1967 = vunpack.c.l.b16 %v200
    %v1968 = vunpack.c.h.b16 %v200
    %v1969 = vunpack.c.l.b16 %v201
    %v1970 = vunpack.c.h.b16 %v201
    %v1971 = vunpack.c.l.b16 %v202
    %v1972 = vunpack.c.h.b16 %v202
    %v1973 = vunpack.c.l.b16 %v203
    %v1974 = vunpack.c.h.b16 %v203
    %v1975 = vunpack.c.l.b16 %v204
    %v1976 = vunpack.c.h.b16 %v204
    %v1977 = vunpack.c.l.b16 %v205
    %v1978 = vunpack.c.h.b16 %v205
    %v1979 = vunpack.c.l.b16 %v206
    %v1980 = vunpack.c.h.b16 %v206
    %v1981 = vunpack.c.l.b16 %v207
    %v1982 = vunpack.c.h.b16 %v207
    %v1983 = vunpack.c.l.b16 %v208
    %v1984 = vunpack.c.h.b16 %v208
    %v1985 = vunpack.c.l.b16 %v209
    %v1986 = vunpack.c.h.b16 %v209
    %v1987 = vunpack.c.l.b16 %v210
    %v1988 = vunpack.c.h.b16 %v210
    %v1989 = vunpack.c.l.b16 %v211
    %v1990 = vunpack.c.h.b16 %v211
    %v1991 = vunpack.c.l.b16 %v212
    %v1992 = vunpack.c.h.b16 %v212
    %v1993 = vunpack.c.l.b16 %v213
    %v1994 = vunpack.c.h.b16 %v213
    %v1995 = vunpack.c.l.b16 %v214
    %v1996 = vunpack.c.h.b16 %v214
    %v1997 = vunpack.c.l.b16 %v215
    %v1998 = vunpack.c.h.b16 %v215
    %v1999 = vunpack.c.l.b16 %v216
    %v2000 = vunpack.c.h.b16 %v216
    %v2001 = vunpack.c.l.b16 %v217
    %v2002 = vunpack.c.h.b16 %v217
    %v2003 = vunpack.c.l.b16 %v218
    %v2004 = vunpack.c.h.b16 %v218
    %v2005 = vunpack.c.l.b16 %v219
    %v2006 = vunpack.c.h.b16 %v219
    %v2007 = vunpack.c.l.b16 %v220
    %v2008 = vunpack.c.h.b16 %v220
    %v2009 = vunpack.c.l.b16 %v221
    %v2010 = vunpack.c.h.b16 %v221
    %v2011 = vunpack.c.l.b16 %v222
    %v2012 = vunpack.c.h.b16 %v222
    %v2013 = vunpack.c.l.b16 %v223
    %v2014 = vunpack.c.h.b16 %v223
    %v2015 = vunpack.c.l.b16 %v224
    %v2016 = vunpack.c.h.b16 %v224
    %v2017 = vunpack.c.l.b16 %v225
    %v2018 = vunpack.c.h.b16 %v225
    %v2019 = vunpack.c.l.b16 %v226
    %v2020 = vunpack.c.h.b16 %v226
    %v2021 = vunpack.c.l.b16 %v227
    %v2022 = vunpack.c.h.b16 %v227
    %v2023 = vunpack.c.l.b16 %v228
    %v2024 = vunpack.c.h.b16 %v228
    %v2025 = vunpack.c.l.b16 %v229
    %v2026 = vunpack.c.h.b16 %v229
    %v2027 = vunpack.c.l.b16 %v230
    %v2028 = vunpack.c.h.b16 %v230
    %v2029 = vunpack.c.l.b16 %v231
    %v2030 = vunpack.c.h.b16 %v231
    %v2031 = vunpack.c.l.b16 %v232
    %v2032 = vunpack.c.h.b16 %v232
    %v2033 = vunpack.c.l.b16 %v233
    %v2034 = vunpack.c.h.b16 %v233
    %v2035 = vunpack.c.l.b16 %v234
    %v2036 = vunpack.c.h.b16 %v234
    %v2037 = vunpack.c.l.b16 %v235
    %v2038 = vunpack.c.h.b16 %v235
    %v2039 = vunpack.c.l.b16 %v236
    %v2040 = vunpack.c.h.b16 %v236
    %v2041 = vunpack.c.l.b16 %v237
    %v2042 = vunpack.c.h.b16 %v237
    %v2043 = vunpack.c.l.b16 %v238
    %v2044 = vunpack.c.h.b16 %v238
    %v2045 = vunpack.c.l.b16 %v239
    %v2046 = vunpack.c.h.b16 %v239
    %v2047 = vunpack.c.l.b16 %v240
    %v2048 = vunpack.c.h.b16 %v240
    %v2049 = vunpack.c.l.b16 %v241
    %v2050 = vunpack.c.h.b16 %v241
    %v2051 = vunpack.c.l.b16 %v242
    %v2052 = vunpack.c.h.b16 %v242
    %v2053 = vunpack.c.l.b16 %v243
    %v2054 = vunpack.c.h.b16 %v243
    %v2055 = vunpack.c.l.b16 %v244
    %v2056 = vunpack.c.h.b16 %v244
    %v2057 = vunpack.c.l.b16 %v245
    %v2058 = vunpack.c.h.b16 %v245
    %v2059 = vunpack.c.l.b16 %v246
    %v2060 = vunpack.c.h.b16 %v246
    %v2061 = vunpack.c.l.b16 %v247
    %v2062 = vunpack.c.h.b16 %v247
    %v2063 = vunpack.c.l.b16 %v248
    %v2064 = vunpack.c.h.b16 %v248
    %v2065 = vunpack.c.l.b16 %v249
    %v2066 = vunpack.c.h.b16 %v249
    %v2067 = vunpack.c.l.b16 %v250
    %v2068 = vunpack.c.h.b16 %v250
    %v2069 = vunpack.c.l.b16 %v251
    %v2070 = vunpack.c.h.b16 %v251
    %v2071 = vunpack.c.l.b16 %v252
    %v2072 = vunpack.c.h.b16 %v252
    %v2073 = vunpack.c.l.b16 %v253
    %v2074 = vunpack.c.h.b16 %v253
    %v2075 = vunpack.c.l.b16 %v254
    %v2076 = vunpack.c.h.b16 %v254
    %v2077 = vunpack.c.l.b16 %v255
    %v2078 = vunpack.c.h.b16 %v255
    %v2079 = vunpack.c.l.b16 %v256
    %v2080 = vunpack.c.h.b16 %v256
    %v2081 = vunpack.c.l.b16 %v257
    %v2082 = vunpack.c.h.b16 %v257
    %v2083 = vunpack.c.l.b16 %v258
    %v2084 = vunpack.c.h.b16 %v258
    %v2085 = vunpack.c.l.b16 %v259
    %v2086 = vunpack.c.h.b16 %v259
    %v2087 = vunpack.c.l.b16 %v260
    %v2088 = vunpack.c.h.b16 %v260
    %v2089 = vunpack.c.l.b16 %v261
    %v2090 = vunpack.c.h.b16 %v261
    %v2091 = vunpack.c.l.b16 %v262
    %v2092 = vunpack.c.h.b16 %v262
    %v2093 = vunpack.c.l.b16 %v263
    %v2094 = vunpack.c.h.b16 %v263
    %v2095 = vunpack.c.l.b16 %v264
    %v2096 = vunpack.c.h.b16 %v264
    %v2097 = vunpack.c.l.b16 %v265
    %v2098 = vunpack.c.h.b16 %v265
    %v2099 = vunpack.c.l.b16 %v266
    %v2100 = vunpack.c.h.b16 %v266
    %v2101 = vunpack.c.l.b16 %v267
    %v2102 = vunpack.c.h.b16 %v267
    %v2103 = vunpack.c.l.b16 %v268
    %v2104 = vunpack.c.h.b16 %v268
    %v2105 = vunpack.c.l.b16 %v269
    %v2106 = vunpack.c.h.b16 %v269
    %v2107 = vunpack.c.l.b16 %v270
    %v2108 = vunpack.c.h.b16 %v270
    %v2109 = vunpack.c.l.b16 %v271
    %v2110 = vunpack.c.h.b16 %v271
    %v2111 = vunpack.c.l.b16 %v272
    %v2112 = vunpack.c.h.b16 %v272
    %v2113 = vunpack.c.l.b16 %v273
    %v2114 = vunpack.c.h.b16 %v273
    %v2115 = vunpack.c.l.b16 %v274
    %v2116 = vunpack.c.h.b16 %v274
    %v2117 = vunpack.c.l.b16 %v275
    %v2118 = vunpack.c.h.b16 %v275
    %v2119 = vunpack.c.l.b16 %v276
    %v2120 = vunpack.c.h.b16 %v276
    %v2121 = vunpack.c.l.b16 %v277
    %v2122 = vunpack.c.h.b16 %v277
    %v2123 = vunpack.c.l.b16 %v278
    %v2124 = vunpack.c.h.b16 %v278
    %v2125 = vunpack.c.l.b16 %v279
    %v2126 = vunpack.c.h.b16 %v279
    %v2127 = vunpack.c.l.b16 %v280
    %v2128 = vunpack.c.h.b16 %v280
    %v2129 = vunpack.c.l.b16 %v281
    %v2130 = vunpack.c.h.b16 %v281
    %v2131 = vunpack.c.l.b16 %v282
    %v2132 = vunpack.c.h.b16 %v282
    %v2133 = vunpack.c.l.b16 %v283
    %v2134 = vunpack.c.h.b16 %v283
    %v2135 = vunpack.c.l.b16 %v284
    %v2136 = vunpack.c.h.b16 %v284
    %v2137 = vunpack.c.l.b16 %v285
    %v2138 = vunpack.c.h.b16 %v285
    %v2139 = vunpack.c.l.b16 %v286
    %v2140 = vunpack.c.h.b16 %v286
    %v2141 = vunpack.c.l.b16 %v287
    %v2142 = vunpack.c.h.b16 %v287
    %v2143 = vunpack.c.l.b16 %v288
    %v2144 = vunpack.c.h.b16 %v288
    %v2145 = vunpack.c.l.b16 %v289
    %v2146 = vunpack.c.h.b16 %v289
    %v2147 = vunpack.c.l.b16 %v290
    %v2148 = vunpack.c.h.b16 %v290
    %v2149 = vunpack.c.l.b16 %v291
    %v2150 = vunpack.c.h.b16 %v291
    %v2151 = vunpack.c.l.b16 %v292
    %v2152 = vunpack.c.h.b16 %v292
    %v2153 = vunpack.c.l.b16 %v293
    %v2154 = vunpack.c.h.b16 %v293
    %v2155 = vunpack.c.l.b16 %v294
    %v2156 = vunpack.c.h.b16 %v294
    %v2157 = vunpack.c.l.b16 %v295
    %v2158 = vunpack.c.h.b16 %v295
    %v2159 = vunpack.c.l.b16 %v296
    %v2160 = vunpack.c.h.b16 %v296
    %v2161 = vunpack.c.l.b16 %v297
    %v2162 = vunpack.c.h.b16 %v297
    %v2163 = vunpack.c.l.b16 %v298
    %v2164 = vunpack.c.h.b16 %v298
    %v2165 = vunpack.c.l.b16 %v299
    %v2166 = vunpack.c.h.b16 %v299
    %v2167 = vunpack.c.l.b16 %v300
    %v2168 = vunpack.c.h.b16 %v300
    %v2169 = vunpack.c.l.b16 %v301
    %v2170 = vunpack.c.h.b16 %v301
    %v2171 = vunpack.c.l.b16 %v302
    %v2172 = vunpack.c.h.b16 %v302
    %v2173 = vunpack.c.l.b16 %v303
    %v2174 = vunpack.c.h.b16 %v303
    %v2175 = vunpack.c.l.b16 %v304
    %v2176 = vunpack.c.h.b16 %v304
    %v2177 = vunpack.c.l.b16 %v305
    %v2178 = vunpack.c.h.b16 %v305
    %v2179 = vunpack.c.l.b16 %v306
    %v2180 = vunpack.c.h.b16 %v306
    %v2181 = vunpack.c.l.b16 %v307
    %v2182 = vunpack.c.h.b16 %v307
    %v2183 = vunpack.c.l.b16 %v308
    %v2184 = vunpack.c.h.b16 %v308
    %v2185 = vunpack.c.l.b16 %v309
    %v2186 = vunpack.c.h.b16 %v309
    %v2187 = vunpack.c.l.b16 %v310
    %v2188 = vunpack.c.h.b16 %v310
    %v2189 = vunpack.c.l.b16 %v311
    %v2190 = vunpack.c.h.b16 %v311
    %v2191 = vunpack.c.l.b16 %v312
    %v2192 = vunpack.c.h.b16 %v312
    %v2193 = vunpack.c.l.b16 %v313
    %v2194 = vunpack.c.h.b16 %v313
    %v2195 = vunpack.c.l.b16 %v314
    %v2196 = vunpack.c.h.b16 %v314
    %v2197 = vunpack.c.l.b16 %v315
    %v2198 = vunpack.c.h.b16 %v315
    %v2199 = vunpack.c.l.b16 %v316
    %v2200 = vunpack.c.h.b16 %v316
    %v2201 = vunpack.c.l.b16 %v317
    %v2202 = vunpack.c.h.b16 %v317
    %v2203 = vunpack.c.l.b16 %v318
    %v2204 = vunpack.c.h.b16 %v318
    %v2205 = vunpack.c.l.b16 %v319
    %v2206 = vunpack.c.h.b16 %v319
    %v2207 = vunpack.c.l.b16 %v320
    %v2208 = vunpack.c.h.b16 %v320
    %v2209 = vunpack.c.l.b16 %v321
    %v2210 = vunpack.c.h.b16 %v321
    %v2211 = vunpack.c.l.b16 %v322
    %v2212 = vunpack.c.h.b16 %v322
    %v2213 = vunpack.c.l.b16 %v323
    %v2214 = vunpack.c.h.b16 %v323
    %v2215 = vunpack.c.l.b16 %v324
    %v2216 = vunpack.c.h.b16 %v324
    %v2217 = vunpack.c.l.b16 %v325
    %v2218 = vunpack.c.h.b16 %v325
    %v2219 = vunpack.c.l.b16 %v326
    %v2220 = vunpack.c.h.b16 %v326
    %v2221 = vunpack.c.l.b16 %v327
    %v2222 = vunpack.c.h.b16 %v327
    %v2223 = vunpack.c.l.b16 %v328
    %v2224 = vunpack.c.h.b16 %v328
    %v2225 = vunpack.c.l.b16 %v329
    %v2226 = vunpack.c.h.b16 %v329
    %v2227 = vunpack.c.l.b16 %v330
    %v2228 = vunpack.c.h.b16 %v330
    %v2229 = vunpack.c.l.b16 %v331
    %v2230 = vunpack.c.h.b16 %v331
    %v2231 = vunpack.c.l.b16 %v332
    %v2232 = vunpack.c.h.b16 %v332
    %v2233 = vunpack.c.l.b16 %v333
    %v2234 = vunpack.c.h.b16 %v333
    %v2235 = vunpack.c.l.b16 %v334
    %v2236 = vunpack.c.h.b16 %v334
    %v2237 = vunpack.c.l.b16 %v335
    %v2238 = vunpack.c.h.b16 %v335
    %v2239 = vunpack.c.l.b16 %v336
    %v2240 = vunpack.c.h.b16 %v336
    %v2241 = vunpack.c.l.b16 %v337
    %v2242 = vunpack.c.h.b16 %v337
    %v2243 = vunpack.c.l.b16 %v338
    %v2244 = vunpack.c.h.b16 %v338
    %v2245 = vunpack.c.l.b16 %v339
    %v2246 = vunpack.c.h.b16 %v339
    %v2247 = vunpack.c.l.b16 %v340
    %v2248 = vunpack.c.h.b16 %v340
    %v2249 = vunpack.c.l.b16 %v341
    %v2250 = vunpack.c.h.b16 %v341
    %v2251 = vunpack.c.l.b16 %v342
    %v2252 = vunpack.c.h.b16 %v342
    %v2253 = vunpack.c.l.b16 %v343
    %v2254 = vunpack.c.h.b16 %v343
    %v2255 = vunpack.c.l.b16 %v344
    %v2256 = vunpack.c.h.b16 %v344
    %v2257 = vunpack.c.l.b16 %v345
    %v2258 = vunpack.c.h.b16 %v345
    %v2259 = vunpack.c.l.b16 %v346
    %v2260 = vunpack.c.h.b16 %v346
    %v2261 = vunpack.c.l.b16 %v347
    %v2262 = vunpack.c.h.b16 %v347
    %v2263 = vunpack.c.l.b16 %v348
    %v2264 = vunpack.c.h.b16 %v348
    %v2265 = vunpack.c.l.b16 %v349
    %v2266 = vunpack.c.h.b16 %v349
    %v2267 = vunpack.c.l.b16 %v350
    %v2268 = vunpack.c.h.b16 %v350
    %v2269 = vunpack.c.l.b16 %v351
    %v2270 = vunpack.c.h.b16 %v351
    %v2271 = vunpack.c.l.b16 %v352
    %v2272 = vunpack.c.h.b16 %v352
    %v2273 = vunpack.c.l.b16 %v353
    %v2274 = vunpack.c.h.b16 %v353
    %v2275 = vunpack.c.l.b16 %v354
    %v2276 = vunpack.c.h.b16 %v354
    %v2277 = vunpack.c.l.b16 %v355
    %v2278 = vunpack.c.h.b16 %v355
    %v2279 = vunpack.c.l.b16 %v356
    %v2280 = vunpack.c.h.b16 %v356
    %v2281 = vunpack.c.l.b16 %v357
    %v2282 = vunpack.c.h.b16 %v357
    %v2283 = vunpack.c.l.b16 %v358
    %v2284 = vunpack.c.h.b16 %v358
    %v2285 = vunpack.c.l.b16 %v359
    %v2286 = vunpack.c.h.b16 %v359
    %v2287 = vunpack.c.l.b16 %v360
    %v2288 = vunpack.c.h.b16 %v360
    %v2289 = vunpack.c.l.b16 %v361
    %v2290 = vunpack.c.h.b16 %v361
    %v2291 = vunpack.c.l.b16 %v362
    %v2292 = vunpack.c.h.b16 %v362
    %v2293 = vunpack.c.l.b16 %v363
    %v2294 = vunpack.c.h.b16 %v363
    %v2295 = vunpack.c.l.b16 %v364
    %v2296 = vunpack.c.h.b16 %v364
    %v2297 = vunpack.c.l.b16 %v365
    %v2298 = vunpack.c.h.b16 %v365
    %v2299 = vunpack.c.l.b16 %v366
    %v2300 = vunpack.c.h.b16 %v366
    %v2301 = vunpack.c.l.b16 %v367
    %v2302 = vunpack.c.h.b16 %v367
    %v2303 = vunpack.c.l.b16 %v368
    %v2304 = vunpack.c.h.b16 %v368
    %v2305 = vunpack.c.l.b16 %v369
    %v2306 = vunpack.c.h.b16 %v369
    %v2307 = vunpack.c.l.b16 %v370
    %v2308 = vunpack.c.h.b16 %v370
    %v2309 = vunpack.c.l.b16 %v371
    %v2310 = vunpack.c.h.b16 %v371
    %v2311 = vunpack.c.l.b16 %v372
    %v2312 = vunpack.c.h.b16 %v372
    %v2313 = vunpack.c.l.b16 %v373
    %v2314 = vunpack.c.h.b16 %v373
    %v2315 = vunpack.c.l.b16 %v374
    %v2316 = vunpack.c.h.b16 %v374
    %v2317 = vunpack.c.l.b16 %v375
    %v2318 = vunpack.c.h.b16 %v375
    %v2319 = vunpack.c.l.b16 %v376
    %v2320 = vunpack.c.h.b16 %v376
    %v2321 = vunpack.c.l.b16 %v377
    %v2322 = vunpack.c.h.b16 %v377
    %v2323 = vunpack.c.l.b16 %v378
    %v2324 = vunpack.c.h.b16 %v378
    %v2325 = vunpack.c.l.b16 %v379
    %v2326 = vunpack.c.h.b16 %v379
    %v2327 = vunpack.c.l.b16 %v380
    %v2328 = vunpack.c.h.b16 %v380
    %v2329 = vunpack.c.l.b16 %v381
    %v2330 = vunpack.c.h.b16 %v381
    %v2331 = vunpack.c.l.b16 %v382
    %v2332 = vunpack.c.h.b16 %v382
    %v2333 = vunpack.c.l.b16 %v383
    %v2334 = vunpack.c.h.b16 %v383
    %v2335 = vunpack.c.l.b16 %v384
    %v2336 = vunpack.c.h.b16 %v384
    %v2337 = vunpack.c.l.b16 %v385
    %v2338 = vunpack.c.h.b16 %v385
    %v2339 = vunpack.c.l.b16 %v386
    %v2340 = vunpack.c.h.b16 %v386
    %v2341 = vunpack.c.l.b16 %v387
    %v2342 = vunpack.c.h.b16 %v387
    %v2343 = vunpack.c.l.b16 %v388
    %v2344 = vunpack.c.h.b16 %v388
    %v2345 = vunpack.c.l.b16 %v389
    %v2346 = vunpack.c.h.b16 %v389
    %v2347 = vunpack.c.l.b16 %v390
    %v2348 = vunpack.c.h.b16 %v390
    %v2349 = vunpack.c.l.b16 %v391
    %v2350 = vunpack.c.h.b16 %v391
    %v2351 = vunpack.c.l.b16 %v392
    %v2352 = vunpack.c.h.b16 %v392
    %v2353 = vunpack.c.l.b16 %v393
    %v2354 = vunpack.c.h.b16 %v393
    %v2355 = vunpack.c.l.b16 %v394
    %v2356 = vunpack.c.h.b16 %v394
    %v2357 = vunpack.c.l.b16 %v395
    %v2358 = vunpack.c.h.b16 %v395
    %v2359 = vunpack.c.l.b16 %v396
    %v2360 = vunpack.c.h.b16 %v396
    %v2361 = vunpack.c.l.b16 %v397
    %v2362 = vunpack.c.h.b16 %v397
    %v2363 = vunpack.c.l.b16 %v398
    %v2364 = vunpack.c.h.b16 %v398
    %v2365 = vunpack.c.l.b16 %v399
    %v2366 = vunpack.c.h.b16 %v399
    %v2367 = vunpack.c.l.b16 %v400
    %v2368 = vunpack.c.h.b16 %v400
    %v2369 = vunpack.c.l.b16 %v401
    %v2370 = vunpack.c.h.b16 %v401
    %v2371 = vunpack.c.l.b16 %v402
    %v2372 = vunpack.c.h.b16 %v402
    %v2373 = vunpack.c.l.b16 %v403
    %v2374 = vunpack.c.h.b16 %v403
    %v2375 = vunpack.c.l.b16 %v404
    %v2376 = vunpack.c.h.b16 %v404
    %v2377 = vunpack.c.l.b16 %v405
    %v2378 = vunpack.c.h.b16 %v405
    %v2379 = vunpack.c.l.b16 %v406
    %v2380 = vunpack.c.h.b16 %v406
    %v2381 = vunpack.c.l.b16 %v407
    %v2382 = vunpack.c.h.b16 %v407
    %v2383 = vunpack.c.l.b16 %v408
    %v2384 = vunpack.c.h.b16 %v408
    %v2385 = vunpack.c.l.b16 %v409
    %v2386 = vunpack.c.h.b16 %v409
    %v2387 = vunpack.c.l.b16 %v410
    %v2388 = vunpack.c.h.b16 %v410
    %v2389 = vunpack.c.l.b16 %v411
    %v2390 = vunpack.c.h.b16 %v411
    %v2391 = vunpack.c.l.b16 %v412
    %v2392 = vunpack.c.h.b16 %v412
    %v2393 = vunpack.c.l.b16 %v413
    %v2394 = vunpack.c.h.b16 %v413
    %v2395 = vunpack.c.l.b16 %v414
    %v2396 = vunpack.c.h.b16 %v414
    %v2397 = vunpack.c.l.b16 %v415
    %v2398 = vunpack.c.h.b16 %v415
    %v2399 = vunpack.c.l.b16 %v416
    %v2400 = vunpack.c.h.b16 %v416
    %v2401 = vunpack.c.l.b16 %v417
    %v2402 = vunpack.c.h.b16 %v417
    %v2403 = vunpack.c.l.b16 %v418
    %v2404 = vunpack.c.h.b16 %v418
    %v2405 = vunpack.c.l.b16 %v419
    %v2406 = vunpack.c.h.b16 %v419
    %v2407 = vunpack.c.l.b16 %v420
    %v2408 = vunpack.c.h.b16 %v420
    %v2409 = vunpack.c.l.b16 %v421
    %v2410 = vunpack.c.h.b16 %v421
    %v2411 = vunpack.c.l.b16 %v422
    %v2412 = vunpack.c.h.b16 %v422
    %v2413 = vunpack.c.l.b16 %v423
    %v2414 = vunpack.c.h.b16 %v423
    %v2415 = vunpack.c.l.b16 %v424
    %v2416 = vunpack.c.h.b16 %v424
    %v2417 = vunpack.c.l.b16 %v425
    %v2418 = vunpack.c.h.b16 %v425
    %v2419 = vunpack.c.l.b16 %v426
    %v2420 = vunpack.c.h.b16 %v426
    %v2421 = vunpack.c.l.b16 %v427
    %v2422 = vunpack.c.h.b16 %v427
    %v2423 = vunpack.c.l.b16 %v428
    %v2424 = vunpack.c.h.b16 %v428
    %v2425 = vunpack.c.l.b16 %v429
    %v2426 = vunpack.c.h.b16 %v429
    %v2427 = vunpack.c.l.b16 %v430
    %v2428 = vunpack.c.h.b16 %v430
    %v2429 = vunpack.c.l.b16 %v431
    %v2430 = vunpack.c.h.b16 %v431
    %v2431 = vunpack.c.l.b16 %v432
    %v2432 = vunpack.c.h.b16 %v432
    %v2433 = vunpack.c.l.b16 %v433
    %v2434 = vunpack.c.h.b16 %v433
    %v2435 = vunpack.c.l.b16 %v434
    %v2436 = vunpack.c.h.b16 %v434
    %v2437 = vunpack.c.l.b16 %v435
    %v2438 = vunpack.c.h.b16 %v435
    %v2439 = vunpack.c.l.b16 %v436
    %v2440 = vunpack.c.h.b16 %v436
    %v2441 = vunpack.c.l.b16 %v437
    %v2442 = vunpack.c.h.b16 %v437
    %v2443 = vunpack.c.l.b16 %v438
    %v2444 = vunpack.c.h.b16 %v438
    %v2445 = vunpack.c.l.b16 %v439
    %v2446 = vunpack.c.h.b16 %v439
    %v2447 = vunpack.c.l.b16 %v440
    %v2448 = vunpack.c.h.b16 %v440
    %v2449 = vunpack.c.l.b16 %v441
    %v2450 = vunpack.c.h.b16 %v441
    %v2451 = vunpack.c.l.b16 %v442
    %v2452 = vunpack.c.h.b16 %v442
    %v2453 = vunpack.c.l.b16 %v443
    %v2454 = vunpack.c.h.b16 %v443
    %v2455 = vunpack.c.l.b16 %v444
    %v2456 = vunpack.c.h.b16 %v444
    %v2457 = vunpack.c.l.b16 %v445
    %v2458 = vunpack.c.h.b16 %v445
    %v2459 = vunpack.c.l.b16 %v446
    %v2460 = vunpack.c.h.b16 %v446
    %v2461 = vunpack.c.l.b16 %v447
    %v2462 = vunpack.c.h.b16 %v447
    %v2463 = vunpack.c.l.b16 %v448
    %v2464 = vunpack.c.h.b16 %v448
    %v2465 = vunpack.c.l.b16 %v449
    %v2466 = vunpack.c.h.b16 %v449
    %v2467 = vunpack.c.l.b16 %v450
    %v2468 = vunpack.c.h.b16 %v450
    %v2469 = vunpack.c.l.b16 %v451
    %v2470 = vunpack.c.h.b16 %v451
    %v2471 = vunpack.c.l.b16 %v452
    %v2472 = vunpack.c.h.b16 %v452
    %v2473 = vunpack.c.l.b16 %v453
    %v2474 = vunpack.c.h.b16 %v453
    %v2475 = vunpack.c.l.b16 %v454
    %v2476 = vunpack.c.h.b16 %v454
    %v2477 = vunpack.c.l.b16 %v455
    %v2478 = vunpack.c.h.b16 %v455
    %v2479 = vunpack.c.l.b16 %v456
    %v2480 = vunpack.c.h.b16 %v456
    %v2481 = vunpack.c.l.b16 %v457
    %v2482 = vunpack.c.h.b16 %v457
    %v2483 = vunpack.c.l.b16 %v458
    %v2484 = vunpack.c.h.b16 %v458
    %v2485 = vunpack.c.l.b16 %v459
    %v2486 = vunpack.c.h.b16 %v459
    %v2487 = vunpack.c.l.b16 %v460
    %v2488 = vunpack.c.h.b16 %v460
    %v2489 = vunpack.c.l.b16 %v461
    %v2490 = vunpack.c.h.b16 %v461
    %v2491 = vunpack.c.l.b16 %v462
    %v2492 = vunpack.c.h.b16 %v462
    %v2493 = vunpack.c.l.b16 %v463
    %v2494 = vunpack.c.h.b16 %v463
    %v2495 = vunpack.c.l.b16 %v464
    %v2496 = vunpack.c.h.b16 %v464
    %v2497 = vunpack.c.l.b16 %v465
    %v2498 = vunpack.c.h.b16 %v465
    %v2499 = vunpack.c.l.b16 %v466
    %v2500 = vunpack.c.h.b16 %v466
    %v2501 = vunpack.c.l.b16 %v467
    %v2502 = vunpack.c.h.b16 %v467
    %v2503 = vunpack.c.l.b16 %v468
    %v2504 = vunpack.c.h.b16 %v468
    %v2505 = vunpack.c.l.b16 %v469
    %v2506 = vunpack.c.h.b16 %v469
    %v2507 = vunpack.c.l.b16 %v470
    %v2508 = vunpack.c.h.b16 %v470
    %v2509 = vunpack.c.l.b16 %v471
    %v2510 = vunpack.c.h.b16 %v471
    %v2511 = vunpack.c.l.b16 %v472
    %v2512 = vunpack.c.h.b16 %v472
    %v2513 = vunpack.c.l.b16 %v473
    %v2514 = vunpack.c.h.b16 %v473
    %v2515 = vunpack.c.l.b16 %v474
    %v2516 = vunpack.c.h.b16 %v474
    %v2517 = vunpack.c.l.b16 %v475
    %v2518 = vunpack.c.h.b16 %v475
    %v2519 = vunpack.c.l.b16 %v476
    %v2520 = vunpack.c.h.b16 %v476
    %v2521 = vunpack.c.l.b16 %v477
    %v2522 = vunpack.c.h.b16 %v477
    %v2523 = vunpack.c.l.b16 %v478
    %v2524 = vunpack.c.h.b16 %v478
    %v2525 = vunpack.c.l.b16 %v479
    %v2526 = vunpack.c.h.b16 %v479
    %v2527 = vunpack.c.l.b16 %v480
    %v2528 = vunpack.c.h.b16 %v480
    %v2529 = vunpack.c.l.b16 %v481
    %v2530 = vunpack.c.h.b16 %v481
    %v2531 = vunpack.c.l.b16 %v482
    %v2532 = vunpack.c.h.b16 %v482
    %v2533 = vunpack.c.l.b16 %v483
    %v2534 = vunpack.c.h.b16 %v483
    %v2535 = vunpack.c.l.b16 %v484
    %v2536 = vunpack.c.h.b16 %v484
    %v2537 = vunpack.c.l.b16 %v485
    %v2538 = vunpack.c.h.b16 %v485
    %v2539 = vunpack.c.l.b16 %v486
    %v2540 = vunpack.c.h.b16 %v486
    %v2541 = vunpack.c.l.b16 %v487
    %v2542 = vunpack.c.h.b16 %v487
    %v2543 = vunpack.c.l.b16 %v488
    %v2544 = vunpack.c.h.b16 %v488
    %v2545 = vunpack.c.l.b16 %v489
    %v2546 = vunpack.c.h.b16 %v489
    %v2547 = vunpack.c.l.b16 %v490
    %v2548 = vunpack.c.h.b16 %v490
    %v2549 = vunpack.c.l.b16 %v491
    %v2550 = vunpack.c.h.b16 %v491
    %v2551 = vunpack.c.l.b16 %v492
    %v2552 = vunpack.c.h.b16 %v492
    %v2553 = vunpack.c.l.b16 %v493
    %v2554 = vunpack.c.h.b16 %v493
    %v2555 = vunpack.c.l.b16 %v494
    %v2556 = vunpack.c.h.b16 %v494
    %v2557 = vunpack.c.l.b16 %v495
    %v2558 = vunpack.c.h.b16 %v495
    %v2559 = vunpack.c.l.b16 %v496
    %v2560 = vunpack.c.h.b16 %v496
    %v2561 = vunpack.c.l.b16 %v497
    %v2562 = vunpack.c.h.b16 %v497
    %v2563 = vunpack.c.l.b16 %v498
    %v2564 = vunpack.c.h.b16 %v498
    %v2565 = vunpack.c.l.b16 %v499
    %v2566 = vunpack.c.h.b16 %v499
    %v2567 = vunpack.c.l.b16 %v500
    %v2568 = vunpack.c.h.b16 %v500
    %v2569 = vunpack.c.l.b16 %v501
    %v2570 = vunpack.c.h.b16 %v501
    %v2571 = vunpack.c.l.b16 %v502
    %v2572 = vunpack.c.h.b16 %v502
    %v2573 = vunpack.c.l.b16 %v503
    %v2574 = vunpack.c.h.b16 %v503
    %v2575 = vunpack.c.l.b16 %v504
    %v2576 = vunpack.c.h.b16 %v504
    %v2577 = vunpack.c.l.b16 %v505
    %v2578 = vunpack.c.h.b16 %v505
    %v2579 = vunpack.c.l.b16 %v506
    %v2580 = vunpack.c.h.b16 %v506
    %v2581 = vunpack.c.l.b16 %v507
    %v2582 = vunpack.c.h.b16 %v507
    %v2583 = vunpack.c.l.b16 %v508
    %v2584 = vunpack.c.h.b16 %v508
    %v2585 = vunpack.c.l.b16 %v509
    %v2586 = vunpack.c.h.b16 %v509
    %v2587 = vunpack.c.l.b16 %v510
    %v2588 = vunpack.c.h.b16 %v510
    %v2589 = vunpack.c.l.b16 %v511
    %v2590 = vunpack.c.h.b16 %v511
    %v2591 = vunpack.c.l.b16 %v512
    %v2592 = vunpack.c.h.b16 %v512
    %v2593 = vunpack.c.l.b16 %v513
    %v2594 = vunpack.c.h.b16 %v513
    %v2595 = vunpack.c.l.b16 %v514
    %v2596 = vunpack.c.h.b16 %v514
    %v2597 = vunpack.c.l.b16 %v515
    %v2598 = vunpack.c.h.b16 %v515
    %v2599 = vunpack.c.l.b16 %v516
    %v2600 = vunpack.c.h.b16 %v516
    %v2601 = vunpack.c.l.b16 %v517
    %v2602 = vunpack.c.h.b16 %v517
    %v2603 = vunpack.c.l.b16 %v518
    %v2604 = vunpack.c.h.b16 %v518
    %v2605 = vunpack.c.l.b16 %v519
    %v2606 = vunpack.c.h.b16 %v519
    %v2607 = vunpack.c.l.b16 %v520
    %v2608 = vunpack.c.h.b16 %v520
    %v2609 = vunpack.c.l.b16 %v521
    %v2610 = vunpack.c.h.b16 %v521
    %v2611 = vunpack.c.l.b16 %v522
    %v2612 = vunpack.c.h.b16 %v522
    %v2613 = vunpack.c.l.b16 %v523
    %v2614 = vunpack.c.h.b16 %v523
    %v2615 = vunpack.c.l.b16 %v524
    %v2616 = vunpack.c.h.b16 %v524
    %v2617 = vunpack.c.l.b16 %v525
    %v2618 = vunpack.c.h.b16 %v525
    %v2619 = vunpack.c.l.b16 %v526
    %v2620 = vunpack.c.h.b16 %v526
    %v2621 = vunpack.c.l.b16 %v527
    %v2622 = vunpack.c.h.b16 %v527
    %v2623 = vunpack.c.l.b16 %v528
    %v2624 = vunpack.c.h.b16 %v528
    %v2625 = vunpack.c.l.b16 %v529
    %v2626 = vunpack.c.h.b16 %v529
    %v2627 = vunpack.c.l.b16 %v530
    %v2628 = vunpack.c.h.b16 %v530
    %v2629 = vunpack.c.l.b16 %v531
    %v2630 = vunpack.c.h.b16 %v531
    %v2631 = vunpack.c.l.b16 %v532
    %v2632 = vunpack.c.h.b16 %v532
    %v2633 = vunpack.c.l.b16 %v533
    %v2634 = vunpack.c.h.b16 %v533
    %v2635 = vunpack.c.l.b16 %v534
    %v2636 = vunpack.c.h.b16 %v534
    %v2637 = vunpack.c.l.b16 %v535
    %v2638 = vunpack.c.h.b16 %v535
    %v2639 = vunpack.c.l.b16 %v536
    %v2640 = vunpack.c.h.b16 %v536
    %v2641 = vunpack.c.l.b16 %v537
    %v2642 = vunpack.c.h.b16 %v537
    %v2643 = vunpack.c.l.b16 %v538
    %v2644 = vunpack.c.h.b16 %v538
    %v2645 = vunpack.c.l.b16 %v539
    %v2646 = vunpack.c.h.b16 %v539
    %v2647 = vunpack.c.l.b16 %v540
    %v2648 = vunpack.c.h.b16 %v540
    %v2649 = vunpack.c.l.b16 %v541
    %v2650 = vunpack.c.h.b16 %v541
    %v2651 = vunpack.c.l.b16 %v542
    %v2652 = vunpack.c.h.b16 %v542
    %v2653 = vunpack.c.l.b16 %v543
    %v2654 = vunpack.c.h.b16 %v543
    %v2655 = vunpack.c.l.b16 %v544
    %v2656 = vunpack.c.h.b16 %v544
    %v2657 = vunpack.c.l.b16 %v545
    %v2658 = vunpack.c.h.b16 %v545
    %v2659 = vunpack.c.l.b16 %v546
    %v2660 = vunpack.c.h.b16 %v546
    %v2661 = vunpack.c.l.b16 %v547
    %v2662 = vunpack.c.h.b16 %v547
    %v2663 = vunpack.c.l.b16 %v548
    %v2664 = vunpack.c.h.b16 %v548
    %v2665 = vunpack.c.l.b16 %v549
    %v2666 = vunpack.c.h.b16 %v549
    %v2667 = vunpack.c.l.b16 %v550
    %v2668 = vunpack.c.h.b16 %v550
    %v2669 = vunpack.c.l.b16 %v551
    %v2670 = vunpack.c.h.b16 %v551
    %v2671 = vunpack.c.l.b16 %v552
    %v2672 = vunpack.c.h.b16 %v552
    %v2673 = vunpack.c.l.b16 %v553
    %v2674 = vunpack.c.h.b16 %v553
    %v2675 = vunpack.c.l.b16 %v554
    %v2676 = vunpack.c.h.b16 %v554
    %v2677 = vunpack.c.l.b16 %v555
    %v2678 = vunpack.c.h.b16 %v555
    %v2679 = vunpack.c.l.b16 %v556
    %v2680 = vunpack.c.h.b16 %v556
    %v2681 = vunpack.c.l.b16 %v557
    %v2682 = vunpack.c.h.b16 %v557
    %v2683 = vunpack.c.l.b16 %v558
    %v2684 = vunpack.c.h.b16 %v558
    %v2685 = vunpack.c.l.b16 %v559
    %v2686 = vunpack.c.h.b16 %v559
    %v2687 = vunpack.c.l.b16 %v560
    %v2688 = vunpack.c.h.b16 %v560
    %v2689 = vunpack.c.l.b16 %v561
    %v2690 = vunpack.c.h.b16 %v561
    %v2691 = vunpack.c.l.b16 %v562
    %v2692 = vunpack.c.h.b16 %v562
    %v2693 = vunpack.c.l.b16 %v563
    %v2694 = vunpack.c.h.b16 %v563
    %v2695 = vunpack.c.l.b16 %v564
    %v2696 = vunpack.c.h.b16 %v564
    %v2697 = vunpack.c.l.b16 %v565
    %v2698 = vunpack.c.h.b16 %v565
    %v2699 = vunpack.c.l.b16 %v566
    %v2700 = vunpack.c.h.b16 %v566
    %v2701 = vunpack.c.l.b16 %v567
    %v2702 = vunpack.c.h.b16 %v567
    %v2703 = vunpack.c.l.b16 %v568
    %v2704 = vunpack.c.h.b16 %v568
    %v2705 = vunpack.c.l.b16 %v569
    %v2706 = vunpack.c.h.b16 %v569
    %v2707 = vunpack.c.l.b16 %v570
    %v2708 = vunpack.c.h.b16 %v570
    %v2709 = vunpack.c.l.b16 %v571
    %v2710 = vunpack.c.h.b16 %v571
    %v2711 = vunpack.c.l.b16 %v572
    %v2712 = vunpack.c.h.b16 %v572
    %v2713 = vunpack.c.l.b16 %v573
    %v2714 = vunpack.c.h.b16 %v573
    %v2715 = vunpack.c.l.b16 %v574
    %v2716 = vunpack.c.h.b16 %v574
    %v2717 = vunpack.c.l.b16 %v575
    %v2718 = vunpack.c.h.b16 %v575
    %v2719 = vunpack.c.l.b16 %v576
    %v2720 = vunpack.c.h.b16 %v576
    %v2721 = vunpack.c.l.b16 %v577
    %v2722 = vunpack.c.h.b16 %v577
    %v2723 = vunpack.c.l.b16 %v578
    %v2724 = vunpack.c.h.b16 %v578
    %v2725 = vunpack.c.l.b16 %v579
    %v2726 = vunpack.c.h.b16 %v579
    %v2727 = vunpack.c.l.b16 %v580
    %v2728 = vunpack.c.h.b16 %v580
    %v2729 = vunpack.c.l.b16 %v581
    %v2730 = vunpack.c.h.b16 %v581
    %v2731 = vunpack.c.l.b16 %v582
    %v2732 = vunpack.c.h.b16 %v582
    %v2733 = vunpack.c.l.b16 %v583
    %v2734 = vunpack.c.h.b16 %v583
    %v2735 = vunpack.c.l.b16 %v584
    %v2736 = vunpack.c.h.b16 %v584
    %v2737 = vunpack.c.l.b16 %v585
    %v2738 = vunpack.c.h.b16 %v585
    %v2739 = vunpack.c.l.b16 %v586
    %v2740 = vunpack.c.h.b16 %v586
    %v2741 = vunpack.c.l.b16 %v587
    %v2742 = vunpack.c.h.b16 %v587
    %v2743 = vunpack.c.l.b16 %v588
    %v2744 = vunpack.c.h.b16 %v588
    %v2745 = vunpack.c.l.b16 %v589
    %v2746 = vunpack.c.h.b16 %v589
    %v2747 = vunpack.c.l.b16 %v590
    %v2748 = vunpack.c.h.b16 %v590
    %v2749 = vunpack.c.l.b16 %v591
    %v2750 = vunpack.c.h.b16 %v591
    %v2751 = vunpack.c.l.b16 %v592
    %v2752 = vunpack.c.h.b16 %v592
    %v2753 = vunpack.c.l.b16 %v593
    %v2754 = vunpack.c.h.b16 %v593
    %v2755 = vunpack.c.l.b16 %v594
    %v2756 = vunpack.c.h.b16 %v594
    %v2757 = vunpack.c.l.b16 %v595
    %v2758 = vunpack.c.h.b16 %v595
    %v2759 = vunpack.c.l.b16 %v596
    %v2760 = vunpack.c.h.b16 %v596
    %v2761 = vunpack.c.l.b16 %v597
    %v2762 = vunpack.c.h.b16 %v597
    %v2763 = vunpack.c.l.b16 %v598
    %v2764 = vunpack.c.h.b16 %v598
    %v2765 = vunpack.c.l.b16 %v599
    %v2766 = vunpack.c.h.b16 %v599
    %v2767 = vunpack.c.l.b16 %v600
    %v2768 = vunpack.c.h.b16 %v600
    %v2769 = vunpack.c.l.b16 %v601
    %v2770 = vunpack.c.h.b16 %v601
    %v2771 = vunpack.c.l.b16 %v602
    %v2772 = vunpack.c.h.b16 %v602
    %v2773 = vunpack.c.l.b16 %v603
    %v2774 = vunpack.c.h.b16 %v603
    %v2775 = vunpack.c.l.b16 %v604
    %v2776 = vunpack.c.h.b16 %v604
    %v2777 = vunpack.c.l.b16 %v605
    %v2778 = vunpack.c.h.b16 %v605
    %v2779 = vunpack.c.l.b16 %v606
    %v2780 = vunpack.c.h.b16 %v606
    %v2781 = vunpack.c.l.b16 %v607
    %v2782 = vunpack.c.h.b16 %v607
    %v2783 = vunpack.c.l.b16 %v608
    %v2784 = vunpack.c.h.b16 %v608
    %v2785 = vunpack.c.l.b16 %v609
    %v2786 = vunpack.c.h.b16 %v609
    %v2787 = vunpack.c.l.b16 %v610
    %v2788 = vunpack.c.h.b16 %v610
    %v2789 = vunpack.c.l.b16 %v611
    %v2790 = vunpack.c.h.b16 %v611
    %v2791 = vunpack.c.l.b16 %v612
    %v2792 = vunpack.c.h.b16 %v612
    %v2793 = vunpack.c.l.b16 %v613
    %v2794 = vunpack.c.h.b16 %v613
    %v2795 = vunpack.c.l.b16 %v614
    %v2796 = vunpack.c.h.b16 %v614
    %v2797 = vunpack.c.l.b16 %v615
    %v2798 = vunpack.c.h.b16 %v615
    %v2799 = vunpack.c.l.b16 %v616
    %v2800 = vunpack.c.h.b16 %v616
    %v2801 = vunpack.c.l.b16 %v617
    %v2802 = vunpack.c.h.b16 %v617
    %v2803 = vunpack.c.l.b16 %v618
    %v2804 = vunpack.c.h.b16 %v618
    %v2805 = vunpack.c.l.b16 %v619
    %v2806 = vunpack.c.h.b16 %v619
    %v2807 = vunpack.c.l.b16 %v620
    %v2808 = vunpack.c.h.b16 %v620
    %v2809 = vunpack.c.l.b16 %v621
    %v2810 = vunpack.c.h.b16 %v621
    %v2811 = vunpack.c.l.b16 %v622
    %v2812 = vunpack.c.h.b16 %v622
    %v2813 = vunpack.c.l.b16 %v623
    %v2814 = vunpack.c.h.b16 %v623
    %v2815 = vunpack.c.l.b16 %v624
    %v2816 = vunpack.c.h.b16 %v624
    %v2817 = vunpack.c.l.b16 %v625
    %v2818 = vunpack.c.h.b16 %v625
    %v2819 = vunpack.c.l.b16 %v626
    %v2820 = vunpack.c.h.b16 %v626
    %v2821 = vunpack.c.l.b16 %v627
    %v2822 = vunpack.c.h.b16 %v627
    %v2823 = vunpack.c.l.b16 %v628
    %v2824 = vunpack.c.h.b16 %v628
    %v2825 = vunpack.c.l.b16 %v629
    %v2826 = vunpack.c.h.b16 %v629
    %v2827 = vunpack.c.l.b16 %v630
    %v2828 = vunpack.c.h.b16 %v630
    %v2829 = vunpack.c.l.b16 %v631
    %v2830 = vunpack.c.h.b16 %v631
    %v2831 = vunpack.c.l.b16 %v632
    %v2832 = vunpack.c.h.b16 %v632
    %v2833 = vunpack.c.l.b16 %v633
    %v2834 = vunpack.c.h.b16 %v633
    %v2835 = vunpack.c.l.b16 %v634
    %v2836 = vunpack.c.h.b16 %v634
    %v2837 = vunpack.c.l.b16 %v635
    %v2838 = vunpack.c.h.b16 %v635
    %v2839 = vunpack.c.l.b16 %v636
    %v2840 = vunpack.c.h.b16 %v636
    %v2841 = vunpack.c.l.b16 %v637
    %v2842 = vunpack.c.h.b16 %v637
    %v2843 = vunpack.c.l.b16 %v638
    %v2844 = vunpack.c.h.b16 %v638
    %v2845 = vunpack.c.l.b16 %v639
    %v2846 = vunpack.c.h.b16 %v639
    %v2847 = vunpack.c.l.b16 %v640
    %v2848 = vunpack.c.h.b16 %v640
    %v2849 = vunpack.c.l.b16 %v641
    %v2850 = vunpack.c.h.b16 %v641
    %v2851 = vunpack.c.l.b16 %v642
    %v2852 = vunpack.c.h.b16 %v642
    %v2853 = vunpack.c.l.b16 %v643
    %v2854 = vunpack.c.h.b16 %v643
    %v2855 = vunpack.c.l.b16 %v644
    %v2856 = vunpack.c.h.b16 %v644
    %v2857 = vunpack.c.l.b16 %v645
    %v2858 = vunpack.c.h.b16 %v645
    %v2859 = vunpack.c.l.b16 %v646
    %v2860 = vunpack.c.h.b16 %v646
    %v2861 = vunpack.c.l.b16 %v647
    %v2862 = vunpack.c.h.b16 %v647
    %v2863 = vunpack.c.l.b16 %v648
    %v2864 = vunpack.c.h.b16 %v648
    %v2865 = vunpack.c.l.b16 %v649
    %v2866 = vunpack.c.h.b16 %v649
    %v2867 = vunpack.c.l.b16 %v650
    %v2868 = vunpack.c.h.b16 %v650
    %v2869 = vunpack.c.l.b16 %v651
    %v2870 = vunpack.c.h.b16 %v651
    %v2871 = vunpack.c.l.b16 %v652
    %v2872 = vunpack.c.h.b16 %v652
    %v2873 = vunpack.c.l.b16 %v653
    %v2874 = vunpack.c.h.b16 %v653
    %v2875 = vunpack.c.l.b16 %v654
    %v2876 = vunpack.c.h.b16 %v654
    %v2877 = vunpack.c.l.b16 %v655
    %v2878 = vunpack.c.h.b16 %v655
    %v2879 = vunpack.c.l.b16 %v656
    %v2880 = vunpack.c.h.b16 %v656
    %v2881 = vunpack.c.l.b16 %v657
    %v2882 = vunpack.c.h.b16 %v657
    %v2883 = vunpack.c.l.b16 %v658
    %v2884 = vunpack.c.h.b16 %v658
    %v2885 = vunpack.c.l.b16 %v659
    %v2886 = vunpack.c.h.b16 %v659
    %v2887 = vunpack.c.l.b16 %v660
    %v2888 = vunpack.c.h.b16 %v660
    %v2889 = vunpack.c.l.b16 %v661
    %v2890 = vunpack.c.h.b16 %v661
    %v2891 = vunpack.c.l.b16 %v662
    %v2892 = vunpack.c.h.b16 %v662
    %v2893 = vunpack.c.l.b16 %v663
    %v2894 = vunpack.c.h.b16 %v663
    %v2895 = vunpack.c.l.b16 %v664
    %v2896 = vunpack.c.h.b16 %v664
    %v2897 = vunpack.c.l.b16 %v665
    %v2898 = vunpack.c.h.b16 %v665
    %v2899 = vunpack.c.l.b16 %v666
    %v2900 = vunpack.c.h.b16 %v666
    %v2901 = vunpack.c.l.b16 %v667
    %v2902 = vunpack.c.h.b16 %v667
    %v2903 = vunpack.c.l.b16 %v668
    %v2904 = vunpack.c.h.b16 %v668
    %v2905 = vunpack.c.l.b16 %v669
    %v2906 = vunpack.c.h.b16 %v669
    %v2907 = vunpack.c.l.b16 %v670
    %v2908 = vunpack.c.h.b16 %v670
    %v2909 = vunpack.c.l.b16 %v671
    %v2910 = vunpack.c.h.b16 %v671
    %v2911 = vunpack.c.l.b16 %v672
    %v2912 = vunpack.c.h.b16 %v672
    %v2913 = vunpack.c.l.b16 %v673
    %v2914 = vunpack.c.h.b16 %v673
    %v2915 = vunpack.c.l.b16 %v674
    %v2916 = vunpack.c.h.b16 %v674
    %v2917 = vunpack.c.l.b16 %v675
    %v2918 = vunpack.c.h.b16 %v675
    %v2919 = vunpack.c.l.b16 %v676
    %v2920 = vunpack.c.h.b16 %v676
    %v2921 = vunpack.c.l.b16 %v677
    %v2922 = vunpack.c.h.b16 %v677
    %v2923 = vunpack.c.l.b16 %v678
    %v2924 = vunpack.c.h.b16 %v678
    %v2925 = vunpack.c.l.b16 %v679
    %v2926 = vunpack.c.h.b16 %v679
    %v2927 = vunpack.c.l.b16 %v680
    %v2928 = vunpack.c.h.b16 %v680
    %v2929 = vunpack.c.l.b16 %v681
    %v2930 = vunpack.c.h.b16 %v681
    %v2931 = vunpack.c.l.b16 %v682
    %v2932 = vunpack.c.h.b16 %v682
    %v2933 = vunpack.c.l.b16 %v683
    %v2934 = vunpack.c.h.b16 %v683
    %v2935 = vunpack.c.l.b16 %v684
    %v2936 = vunpack.c.h.b16 %v684
    %v2937 = vunpack.c.l.b16 %v685
    %v2938 = vunpack.c.h.b16 %v685
    %v2939 = vunpack.c.l.b16 %v686
    %v2940 = vunpack.c.h.b16 %v686
    %v2941 = vunpack.c.l.b16 %v687
    %v2942 = vunpack.c.h.b16 %v687
    %v2943 = vunpack.c.l.b16 %v688
    %v2944 = vunpack.c.h.b16 %v688
    %v2945 = vunpack.c.l.b16 %v689
    %v2946 = vunpack.c.h.b16 %v689
    %v2947 = vunpack.c.l.b16 %v690
    %v2948 = vunpack.c.h.b16 %v690
    %v2949 = vunpack.c.l.b16 %v691
    %v2950 = vunpack.c.h.b16 %v691
    %v2951 = vunpack.c.l.b16 %v692
    %v2952 = vunpack.c.h.b16 %v692
    %v2953 = vunpack.c.l.b16 %v693
    %v2954 = vunpack.c.h.b16 %v693
    %v2955 = vunpack.c.l.b16 %v694
    %v2956 = vunpack.c.h.b16 %v694
    %v2957 = vunpack.c.l.b16 %v695
    %v2958 = vunpack.c.h.b16 %v695
    %v2959 = vunpack.c.l.b16 %v696
    %v2960 = vunpack.c.h.b16 %v696
    %v2961 = vunpack.c.l.b16 %v697
    %v2962 = vunpack.c.h.b16 %v697
    %v2963 = vunpack.c.l.b16 %v698
    %v2964 = vunpack.c.h.b16 %v698
    %v2965 = vunpack.c.l.b16 %v699
    %v2966 = vunpack.c.h.b16 %v699
    %v2967 = vunpack.c.l.b16 %v700
    %v2968 = vunpack.c.h.b16 %v700
    %v2969 = vunpack.c.l.b16 %v701
    %v2970 = vunpack.c.h.b16 %v701
    %v2971 = vunpack.c.l.b16 %v702
    %v2972 = vunpack.c.h.b16 %v702
    %v2973 = vunpack.c.l.b16 %v703
    %v2974 = vunpack.c.h.b16 %v703
    %v2975 = vunpack.c.l.b16 %v704
    %v2976 = vunpack.c.h.b16 %v704
    %v2977 = vunpack.c.l.b16 %v705
    %v2978 = vunpack.c.h.b16 %v705
    %v2979 = vunpack.c.l.b16 %v706
    %v2980 = vunpack.c.h.b16 %v706
    %v2981 = vunpack.c.l.b16 %v707
    %v2982 = vunpack.c.h.b16 %v707
    %v2983 = vunpack.c.l.b16 %v708
    %v2984 = vunpack.c.h.b16 %v708
    %v2985 = vunpack.c.l.b16 %v709
    %v2986 = vunpack.c.h.b16 %v709
    %v2987 = vunpack.c.l.b16 %v710
    %v2988 = vunpack.c.h.b16 %v710
    %v2989 = vunpack.c.l.b16 %v711
    %v2990 = vunpack.c.h.b16 %v711
    %v2991 = vunpack.c.l.b16 %v712
    %v2992 = vunpack.c.h.b16 %v712
    %v2993 = vunpack.c.l.b16 %v713
    %v2994 = vunpack.c.h.b16 %v713
    %v2995 = vunpack.c.l.b16 %v714
    %v2996 = vunpack.c.h.b16 %v714
    %v2997 = vunpack.c.l.b16 %v715
    %v2998 = vunpack.c.h.b16 %v715
    %v2999 = vunpack.c.l.b16 %v716
    %v3000 = vunpack.c.h.b16 %v716
    %v3001 = vunpack.c.l.b16 %v717
    %v3002 = vunpack.c.h.b16 %v717
    %v3003 = vunpack.c.l.b16 %v718
    %v3004 = vunpack.c.h.b16 %v718
    %v3005 = vunpack.c.l.b16 %v719
    %v3006 = vunpack.c.h.b16 %v719
    %v3007 = vunpack.c.l.b16 %v720
    %v3008 = vunpack.c.h.b16 %v720
    %v3009 = vunpack.c.l.b16 %v721
    %v3010 = vunpack.c.h.b16 %v721
    %v3011 = vunpack.c.l.b16 %v722
    %v3012 = vunpack.c.h.b16 %v722
    %v3013 = vunpack.c.l.b16 %v723
    %v3014 = vunpack.c.h.b16 %v723
    %v3015 = vunpack.c.l.b16 %v724
    %v3016 = vunpack.c.h.b16 %v724
    %v3017 = vunpack.c.l.b16 %v725
    %v3018 = vunpack.c.h.b16 %v725
    %v3019 = vunpack.c.l.b16 %v726
    %v3020 = vunpack.c.h.b16 %v726
    %v3021 = vunpack.c.l.b16 %v727
    %v3022 = vunpack.c.h.b16 %v727
    %v3023 = vunpack.c.l.b16 %v728
    %v3024 = vunpack.c.h.b16 %v728
    %v3025 = vunpack.c.l.b16 %v729
    %v3026 = vunpack.c.h.b16 %v729
    %v3027 = vunpack.c.l.b16 %v730
    %v3028 = vunpack.c.h.b16 %v730
    %v3029 = vunpack.c.l.b16 %v731
    %v3030 = vunpack.c.h.b16 %v731
    %v3031 = vunpack.c.l.b16 %v732
    %v3032 = vunpack.c.h.b16 %v732
    %v3033 = vunpack.c.l.b16 %v733
    %v3034 = vunpack.c.h.b16 %v733
    %v3035 = vunpack.c.l.b16 %v734
    %v3036 = vunpack.c.h.b16 %v734
    %v3037 = vunpack.c.l.b16 %v735
    %v3038 = vunpack.c.h.b16 %v735
    %v3039 = vunpack.c.l.b16 %v736
    %v3040 = vunpack.c.h.b16 %v736
    %v3041 = vunpack.c.l.b16 %v737
    %v3042 = vunpack.c.h.b16 %v737
    %v3043 = vunpack.c.l.b16 %v738
    %v3044 = vunpack.c.h.b16 %v738
    %v3045 = vunpack.c.l.b16 %v739
    %v3046 = vunpack.c.h.b16 %v739
    %v3047 = vunpack.c.l.b16 %v740
    %v3048 = vunpack.c.h.b16 %v740
    %v3049 = vunpack.c.l.b16 %v741
    %v3050 = vunpack.c.h.b16 %v741
    %v3051 = vunpack.c.l.b16 %v742
    %v3052 = vunpack.c.h.b16 %v742
    %v3053 = vunpack.c.l.b16 %v743
    %v3054 = vunpack.c.h.b16 %v743
    %v3055 = vunpack.c.l.b16 %v744
    %v3056 = vunpack.c.h.b16 %v744
    %v3057 = vunpack.c.l.b16 %v745
    %v3058 = vunpack.c.h.b16 %v745
    %v3059 = vunpack.c.l.b16 %v746
    %v3060 = vunpack.c.h.b16 %v746
    %v3061 = vunpack.c.l.b16 %v747
    %v3062 = vunpack.c.h.b16 %v747
    %v3063 = vunpack.c.l.b16 %v748
    %v3064 = vunpack.c.h.b16 %v748
    %v3065 = vunpack.c.l.b16 %v749
    %v3066 = vunpack.c.h.b16 %v749
    %v3067 = vunpack.c.l.b16 %v750
    %v3068 = vunpack.c.h.b16 %v750
    %v3069 = vunpack.c.l.b16 %v751
    %v3070 = vunpack.c.h.b16 %v751
    %v3071 = vunpack.c.l.b16 %v752
    %v3072 = vunpack.c.h.b16 %v752
    %v3073 = vunpack.c.l.b16 %v753
    %v3074 = vunpack.c.h.b16 %v753
    %v3075 = vunpack.c.l.b16 %v754
    %v3076 = vunpack.c.h.b16 %v754
    %v3077 = vunpack.c.l.b16 %v755
    %v3078 = vunpack.c.h.b16 %v755
    %v3079 = vunpack.c.l.b16 %v756
    %v3080 = vunpack.c.h.b16 %v756
    %v3081 = vunpack.c.l.b16 %v757
    %v3082 = vunpack.c.h.b16 %v757
    %v3083 = vunpack.c.l.b16 %v758
    %v3084 = vunpack.c.h.b16 %v758
    %v3085 = vunpack.c.l.b16 %v759
    %v3086 = vunpack.c.h.b16 %v759
    %v3087 = vunpack.c.l.b16 %v760
    %v3088 = vunpack.c.h.b16 %v760
    %v3089 = vunpack.c.l.b16 %v761
    %v3090 = vunpack.c.h.b16 %v761
    %v3091 = vunpack.c.l.b16 %v762
    %v3092 = vunpack.c.h.b16 %v762
    %v3093 = vunpack.c.l.b16 %v763
    %v3094 = vunpack.c.h.b16 %v763
    %v3095 = vunpack.c.l.b16 %v764
    %v3096 = vunpack.c.h.b16 %v764
    %v3097 = vunpack.c.l.b16 %v765
    %v3098 = vunpack.c.h.b16 %v765
    %v3099 = vunpack.c.l.b16 %v766
    %v3100 = vunpack.c.h.b16 %v766
    %v3101 = vunpack.c.l.b16 %v767
    %v3102 = vunpack.c.h.b16 %v767
    %v3103 = vunpack.c.l.b16 %v768
    %v3104 = vunpack.c.h.b16 %v768
    %v3105 = vunpack.c.l.b16 %v769
    %v3106 = vunpack.c.h.b16 %v769
    %v3107 = vunpack.c.l.b16 %v770
    %v3108 = vunpack.c.h.b16 %v770
    %v3109 = vunpack.c.l.b16 %v771
    %v3110 = vunpack.c.h.b16 %v771
    %v3111 = vunpack.c.l.b16 %v772
    %v3112 = vunpack.c.h.b16 %v772
    %v3113 = vunpack.c.l.b16 %v773
    %v3114 = vunpack.c.h.b16 %v773
    %v3115 = vunpack.c.l.b16 %v774
    %v3116 = vunpack.c.h.b16 %v774
    %v3117 = vunpack.c.l.b16 %v775
    %v3118 = vunpack.c.h.b16 %v775
    %v3119 = vunpack.c.l.b16 %v776
    %v3120 = vunpack.c.h.b16 %v776
    %v3121 = vunpack.c.l.b16 %v777
    %v3122 = vunpack.c.h.b16 %v777
    %v3123 = vunpack.c.l.b16 %v778
    %v3124 = vunpack.c.h.b16 %v778
    %v3125 = vunpack.c.l.b16 %v779
    %v3126 = vunpack.c.h.b16 %v779
    %v3127 = vunpack.c.l.b16 %v780
    %v3128 = vunpack.c.h.b16 %v780
    %v3129 = vunpack.c.l.b16 %v781
    %v3130 = vunpack.c.h.b16 %v781
    %v3131 = vunpack.c.l.b16 %v782
    %v3132 = vunpack.c.h.b16 %v782
    %v3133 = vunpack.c.l.b16 %v783
    %v3134 = vunpack.c.h.b16 %v783
    %v3135 = vunpack.c.l.b16 %v784
    %v3136 = vunpack.c.h.b16 %v784
    %v3137 = vunpack.c.l.b16 %v785
    %v3138 = vunpack.c.h.b16 %v785
    %v3139 = vunpack.c.l.b16 %v786
    %v3140 = vunpack.c.h.b16 %v786
    %v3141 = vunpack.c.l.b16 %v787
    %v3142 = vunpack.c.h.b16 %v787
    %v3143 = vunpack.c.l.b16 %v788
    %v3144 = vunpack.c.h.b16 %v788
    %v3145 = vunpack.c.l.b16 %v789
    %v3146 = vunpack.c.h.b16 %v789
    %v3147 = vunpack.c.l.b16 %v790
    %v3148 = vunpack.c.h.b16 %v790
    %v3149 = vunpack.c.l.b16 %v791
    %v3150 = vunpack.c.h.b16 %v791
    %v3151 = vunpack.c.l.b16 %v792
    %v3152 = vunpack.c.h.b16 %v792
    %v3153 = vunpack.c.l.b16 %v793
    %v3154 = vunpack.c.h.b16 %v793
    %v3155 = vunpack.c.l.b16 %v794
    %v3156 = vunpack.c.h.b16 %v794
    %v3157 = vunpack.c.l.b16 %v795
    %v3158 = vunpack.c.h.b16 %v795
    %v3159 = vunpack.c.l.b16 %v796
    %v3160 = vunpack.c.h.b16 %v796
    %v3161 = vunpack.c.l.b16 %v797
    %v3162 = vunpack.c.h.b16 %v797
    %v3163 = vunpack.c.l.b16 %v798
    %v3164 = vunpack.c.h.b16 %v798
    %v3165 = vunpack.c.l.b16 %v799
    %v3166 = vunpack.c.h.b16 %v799
    %v3167 = vunpack.c.l.b16 %v800
    %v3168 = vunpack.c.h.b16 %v800
    %v3169 = vunpack.c.l.b16 %v801
    %v3170 = vunpack.c.h.b16 %v801
    %v3171 = vunpack.c.l.b16 %v802
    %v3172 = vunpack.c.h.b16 %v802
    %v3173 = vunpack.c.l.b16 %v803
    %v3174 = vunpack.c.h.b16 %v803
    %v3175 = vunpack.c.l.b16 %v804
    %v3176 = vunpack.c.h.b16 %v804
    %v3177 = vunpack.c.l.b16 %v805
    %v3178 = vunpack.c.h.b16 %v805
    %v3179 = vunpack.c.l.b16 %v806
    %v3180 = vunpack.c.h.b16 %v806
    %v3181 = vunpack.c.l.b16 %v807
    %v3182 = vunpack.c.h.b16 %v807
    %v3183 = vunpack.c.l.b16 %v808
    %v3184 = vunpack.c.h.b16 %v808
    %v3185 = vunpack.c.l.b16 %v809
    %v3186 = vunpack.c.h.b16 %v809
    %v3187 = vunpack.c.l.b16 %v810
    %v3188 = vunpack.c.h.b16 %v810
    %v3189 = vunpack.c.l.b16 %v811
    %v3190 = vunpack.c.h.b16 %v811
    %v3191 = vunpack.c.l.b16 %v812
    %v3192 = vunpack.c.h.b16 %v812
    %v3193 = vunpack.c.l.b16 %v813
    %v3194 = vunpack.c.h.b16 %v813
    %v3195 = vunpack.c.l.b16 %v814
    %v3196 = vunpack.c.h.b16 %v814
    %v3197 = vunpack.c.l.b16 %v815
    %v3198 = vunpack.c.h.b16 %v815
    %v3199 = vunpack.c.l.b16 %v816
    %v3200 = vunpack.c.h.b16 %v816
    %v3201 = vunpack.c.l.b16 %v817
    %v3202 = vunpack.c.h.b16 %v817
    %v3203 = vunpack.c.l.b16 %v818
    %v3204 = vunpack.c.h.b16 %v818
    %v3205 = vunpack.c.l.b16 %v819
    %v3206 = vunpack.c.h.b16 %v819
    %v3207 = vunpack.c.l.b16 %v820
    %v3208 = vunpack.c.h.b16 %v820
    %v3209 = vunpack.c.l.b16 %v821
    %v3210 = vunpack.c.h.b16 %v821
    %v3211 = vunpack.c.l.b16 %v822
    %v3212 = vunpack.c.h.b16 %v822
    %v3213 = vunpack.c.l.b16 %v823
    %v3214 = vunpack.c.h.b16 %v823
    %v3215 = vunpack.c.l.b16 %v824
    %v3216 = vunpack.c.h.b16 %v824
    %v3217 = vunpack.c.l.b16 %v825
    %v3218 = vunpack.c.h.b16 %v825
    %v3219 = vunpack.c.l.b16 %v826
    %v3220 = vunpack.c.h.b16 %v826
    %v3221 = vunpack.c.l.b16 %v827
    %v3222 = vunpack.c.h.b16 %v827
    %v3223 = vunpack.c.l.b16 %v828
    %v3224 = vunpack.c.h.b16 %v828
    %v3225 = vunpack.c.l.b16 %v829
    %v3226 = vunpack.c.h.b16 %v829
    %v3227 = vunpack.c.l.b16 %v830
    %v3228 = vunpack.c.h.b16 %v830
    %v3229 = vunpack.c.l.b16 %v831
    %v3230 = vunpack.c.h.b16 %v831
    %v3231 = vunpack.c.l.b16 %v832
    %v3232 = vunpack.c.h.b16 %v832
    %v3233 = vunpack.c.l.b16 %v833
    %v3234 = vunpack.c.h.b16 %v833
    %v3235 = vunpack.c.l.b16 %v834
    %v3236 = vunpack.c.h.b16 %v834
    %v3237 = vunpack.c.l.b16 %v835
    %v3238 = vunpack.c.h.b16 %v835
    %v3239 = vunpack.c.l.b16 %v836
    %v3240 = vunpack.c.h.b16 %v836
    %v3241 = vunpack.c.l.b16 %v837
    %v3242 = vunpack.c.h.b16 %v837
    %v3243 = vunpack.c.l.b16 %v838
    %v3244 = vunpack.c.h.b16 %v838
    %v3245 = vunpack.c.l.b16 %v839
    %v3246 = vunpack.c.h.b16 %v839
    %v3247 = vunpack.c.l.b16 %v840
    %v3248 = vunpack.c.h.b16 %v840
    %v3249 = vunpack.c.l.b16 %v841
    %v3250 = vunpack.c.h.b16 %v841
    %v3251 = vunpack.c.l.b16 %v842
    %v3252 = vunpack.c.h.b16 %v842
    %v3253 = vunpack.c.l.b16 %v843
    %v3254 = vunpack.c.h.b16 %v843
    %v3255 = vunpack.c.l.b16 %v844
    %v3256 = vunpack.c.h.b16 %v844
    %v3257 = vunpack.c.l.b16 %v845
    %v3258 = vunpack.c.h.b16 %v845
    %v3259 = vunpack.c.l.b16 %v846
    %v3260 = vunpack.c.h.b16 %v846
    %v3261 = vunpack.c.l.b16 %v847
    %v3262 = vunpack.c.h.b16 %v847
    %v3263 = vunpack.c.l.b16 %v848
    %v3264 = vunpack.c.h.b16 %v848
    %v3265 = vunpack.c.l.b16 %v849
    %v3266 = vunpack.c.h.b16 %v849
    %v3267 = vunpack.c.l.b16 %v850
    %v3268 = vunpack.c.h.b16 %v850
    %v3269 = vunpack.c.l.b16 %v851
    %v3270 = vunpack.c.h.b16 %v851
    %v3271 = vunpack.c.l.b16 %v852
    %v3272 = vunpack.c.h.b16 %v852
    %v3273 = vunpack.c.l.b16 %v853
    %v3274 = vunpack.c.h.b16 %v853
    %v3275 = vunpack.c.l.b16 %v854
    %v3276 = vunpack.c.h.b16 %v854
    %v3277 = vunpack.c.l.b16 %v855
    %v3278 = vunpack.c.h.b16 %v855
    %v3279 = vunpack.c.l.b16 %v856
    %v3280 = vunpack.c.h.b16 %v856
    %v3281 = vunpack.c.l.b16 %v857
    %v3282 = vunpack.c.h.b16 %v857
    %v3283 = vunpack.c.l.b16 %v858
    %v3284 = vunpack.c.h.b16 %v858
    %v3285 = vunpack.c.l.b16 %v859
    %v3286 = vunpack.c.h.b16 %v859
    %v3287 = vunpack.c.l.b16 %v860
    %v3288 = vunpack.c.h.b16 %v860
    %v3289 = vunpack.c.l.b16 %v861
    %v3290 = vunpack.c.h.b16 %v861
    %v3291 = vunpack.c.l.b16 %v862
    %v3292 = vunpack.c.h.b16 %v862
    %v3293 = vunpack.c.l.b16 %v863
    %v3294 = vunpack.c.h.b16 %v863
    %v3295 = vunpack.c.l.b16 %v864
    %v3296 = vunpack.c.h.b16 %v864
    %v3297 = vunpack.c.l.b16 %v865
    %v3298 = vunpack.c.h.b16 %v865
    %v3299 = vunpack.c.l.b16 %v866
    %v3300 = vunpack.c.h.b16 %v866
    %v3301 = vunpack.c.l.b16 %v867
    %v3302 = vunpack.c.h.b16 %v867
    %v3303 = vunpack.c.l.b16 %v868
    %v3304 = vunpack.c.h.b16 %v868
    %v3305 = vunpack.c.l.b16 %v869
    %v3306 = vunpack.c.h.b16 %v869
    %v3307 = vunpack.c.l.b16 %v870
    %v3308 = vunpack.c.h.b16 %v870
    %v3309 = vunpack.c.l.b16 %v871
    %v3310 = vunpack.c.h.b16 %v871
    %v3311 = vunpack.c.l.b16 %v872
    %v3312 = vunpack.c.h.b16 %v872
    %v3313 = vunpack.c.l.b16 %v873
    %v3314 = vunpack.c.h.b16 %v873
    %v3315 = vunpack.c.l.b16 %v874
    %v3316 = vunpack.c.h.b16 %v874
    %v3317 = vunpack.c.l.b16 %v875
    %v3318 = vunpack.c.h.b16 %v875
    %v3319 = vunpack.c.l.b16 %v876
    %v3320 = vunpack.c.h.b16 %v876
    %v3321 = vunpack.c.l.b16 %v877
    %v3322 = vunpack.c.h.b16 %v877
    %v3323 = vunpack.c.l.b16 %v878
    %v3324 = vunpack.c.h.b16 %v878
    %v3325 = vunpack.c.l.b16 %v879
    %v3326 = vunpack.c.h.b16 %v879
    %v3327 = vunpack.c.l.b16 %v880
    %v3328 = vunpack.c.h.b16 %v880
    %v3329 = vunpack.c.l.b16 %v881
    %v3330 = vunpack.c.h.b16 %v881
    %v3331 = vunpack.c.l.b16 %v882
    %v3332 = vunpack.c.h.b16 %v882
    %v3333 = vunpack.c.l.b16 %v883
    %v3334 = vunpack.c.h.b16 %v883
    %v3335 = vunpack.c.l.b16 %v884
    %v3336 = vunpack.c.h.b16 %v884
    %v3337 = vunpack.c.l.b16 %v885
    %v3338 = vunpack.c.h.b16 %v885
    %v3339 = vunpack.c.l.b16 %v886
    %v3340 = vunpack.c.h.b16 %v886
    %v3341 = vunpack.c.l.b16 %v887
    %v3342 = vunpack.c.h.b16 %v887
    %v3343 = vunpack.c.l.b16 %v888
    %v3344 = vunpack.c.h.b16 %v888
    %v3345 = vunpack.c.l.b16 %v889
    %v3346 = vunpack.c.h.b16 %v889
    %v3347 = vunpack.c.l.b16 %v890
    %v3348 = vunpack.c.h.b16 %v890
    %v3349 = vunpack.c.l.b16 %v891
    %v3350 = vunpack.c.h.b16 %v891
    %v3351 = vunpack.c.l.b16 %v892
    %v3352 = vunpack.c.h.b16 %v892
    %v3353 = vunpack.c.l.b16 %v893
    %v3354 = vunpack.c.h.b16 %v893
    %v3355 = vunpack.c.l.b16 %v894
    %v3356 = vunpack.c.h.b16 %v894
    %v3357 = vunpack.c.l.b16 %v895
    %v3358 = vunpack.c.h.b16 %v895
    %v3359 = vunpack.c.l.b16 %v896
    %v3360 = vunpack.c.h.b16 %v896
    %v3361 = vunpack.c.l.b16 %v897
    %v3362 = vunpack.c.h.b16 %v897
    %v3363 = vunpack.c.l.b16 %v898
    %v3364 = vunpack.c.h.b16 %v898
    %v3365 = vunpack.c.l.b16 %v899
    %v3366 = vunpack.c.h.b16 %v899
    %v3367 = vunpack.c.l.b16 %v900
    %v3368 = vunpack.c.h.b16 %v900
    %v3369 = vunpack.c.l.b16 %v901
    %v3370 = vunpack.c.h.b16 %v901
    %v3371 = vunpack.c.l.b16 %v902
    %v3372 = vunpack.c.h.b16 %v902
    %v3373 = vunpack.c.l.b16 %v903
    %v3374 = vunpack.c.h.b16 %v903
    %v3375 = vunpack.c.l.b16 %v904
    %v3376 = vunpack.c.h.b16 %v904
    %v3377 = vunpack.c.l.b16 %v905
    %v3378 = vunpack.c.h.b16 %v905
    %v3379 = vunpack.c.l.b16 %v906
    %v3380 = vunpack.c.h.b16 %v906
    %v3381 = vunpack.c.l.b16 %v907
    %v3382 = vunpack.c.h.b16 %v907
    %v3383 = vunpack.c.l.b16 %v908
    %v3384 = vunpack.c.h.b16 %v908
    %v3385 = vunpack.c.l.b16 %v909
    %v3386 = vunpack.c.h.b16 %v909
    %v3387 = vunpack.c.l.b16 %v910
    %v3388 = vunpack.c.h.b16 %v910
    %v3389 = vunpack.c.l.b16 %v911
    %v3390 = vunpack.c.h.b16 %v911
    %v3391 = vunpack.c.l.b16 %v912
    %v3392 = vunpack.c.h.b16 %v912
    %v3393 = vunpack.c.l.b16 %v913
    %v3394 = vunpack.c.h.b16 %v913
    %v3395 = vunpack.c.l.b16 %v914
    %v3396 = vunpack.c.h.b16 %v914
    %v3397 = vunpack.c.l.b16 %v915
    %v3398 = vunpack.c.h.b16 %v915
    %v3399 = vunpack.c.l.b16 %v916
    %v3400 = vunpack.c.h.b16 %v916
    %v3401 = vunpack.c.l.b16 %v917
    %v3402 = vunpack.c.h.b16 %v917
    %v3403 = vunpack.c.l.b16 %v918
    %v3404 = vunpack.c.h.b16 %v918
    %v3405 = vunpack.c.l.b16 %v919
    %v3406 = vunpack.c.h.b16 %v919
    %v3407 = vunpack.c.l.b16 %v920
    %v3408 = vunpack.c.h.b16 %v920
    %v3409 = vunpack.c.l.b16 %v921
    %v3410 = vunpack.c.h.b16 %v921
    %v3411 = vunpack.c.l.b16 %v922
    %v3412 = vunpack.c.h.b16 %v922
    %v3413 = vunpack.c.l.b16 %v923
    %v3414 = vunpack.c.h.b16 %v923
    %v3415 = vunpack.c.l.b16 %v924
    %v3416 = vunpack.c.h.b16 %v924
    %v3417 = vunpack.c.l.b16 %v925
    %v3418 = vunpack.c.h.b16 %v925
    %v3419 = vunpack.c.l.b16 %v926
    %v3420 = vunpack.c.h.b16 %v926
    %v3421 = vunpack.c.l.b16 %v927
    %v3422 = vunpack.c.h.b16 %v927
    %v3423 = vunpack.c.l.b16 %v928
    %v3424 = vunpack.c.h.b16 %v928
    %v3425 = vunpack.c.l.b16 %v929
    %v3426 = vunpack.c.h.b16 %v929
    %v3427 = vpack.c.b16 %v1771, %v1763
    %v3428 = vpack.c.b16 %v1772, %v1764
    %v3429 = vpack.c.b16 %v1773, %v1765
    %v3430 = vpack.c.b16 %v1774, %v1766
    %v3431 = vpack.c.b16 %v1775, %v1767
    %v3432 = vpack.c.b16 %v1776, %v1768
    %v3433 = vpack.c.b16 %v1777, %v1769
    %v3434 = vpack.c.b16 %v1778, %v1770
    %v3435 = vpack.c.b16 %v1787, %v1779
    %v3436 = vpack.c.b16 %v1788, %v1780
    %v3437 = vpack.c.b16 %v1789, %v1781
    %v3438 = vpack.c.b16 %v1790, %v1782
    %v3439 = vpack.c.b16 %v1791, %v1783
    %v3440 = vpack.c.b16 %v1792, %v1784
    %v3441 = vpack.c.b16 %v1793, %v1785
    %v3442 = vpack.c.b16 %v1794, %v1786
    %v3443 = vpack.c.b16 %v1803, %v1795
    %v3444 = vpack.c.b16 %v1804, %v1796
    %v3445 = vpack.c.b16 %v1805, %v1797
    %v3446 = vpack.c.b16 %v1806, %v1798
    %v3447 = vpack.c.b16 %v1807, %v1799
    %v3448 = vpack.c.b16 %v1808, %v1800
    %v3449 = vpack.c.b16 %v1809, %v1801
    %v3450 = vpack.c.b16 %v1810, %v1802
    %v3451 = vpack.c.b16 %v1819, %v1811
    %v3452 = vpack.c.b16 %v1820, %v1812
    %v3453 = vpack.c.b16 %v1821, %v1813
    %v3454 = vpack.c.b16 %v1822, %v1814
    %v3455 = vpack.c.b16 %v1823, %v1815
    %v3456 = vpack.c.b16 %v1824, %v1816
    %v3457 = vpack.c.b16 %v1825, %v1817
    %v3458 = vpack.c.b16 %v1826, %v1818
    %v3459 = vpack.c.b16 %v1835, %v1827
    %v3460 = vpack.c.b16 %v1836, %v1828
    %v3461 = vpack.c.b16 %v1837, %v1829
    %v3462 = vpack.c.b16 %v1838, %v1830
    %v3463 = vpack.c.b16 %v1839, %v1831
    %v3464 = vpack.c.b16 %v1840, %v1832
    %v3465 = vpack.c.b16 %v1841, %v1833
    %v3466 = vpack.c.b16 %v1842, %v1834
    %v3467 = vpack.c.b16 %v1851, %v1843
    %v3468 = vpack.c.b16 %v1852, %v1844
    %v3469 = vpack.c.b16 %v1853, %v1845
    %v3470 = vpack.c.b16 %v1854, %v1846
    %v3471 = vpack.c.b16 %v1855, %v1847
    %v3472 = vpack.c.b16 %v1856, %v1848
    %v3473 = vpack.c.b16 %v1857, %v1849
    %v3474 = vpack.c.b16 %v1858, %v1850
    %v3475 = vpack.c.b16 %v1867, %v1859
    %v3476 = vpack.c.b16 %v1868, %v1860
    %v3477 = vpack.c.b16 %v1869, %v1861
    %v3478 = vpack.c.b16 %v1870, %v1862
    %v3479 = vpack.c.b16 %v1871, %v1863
    %v3480 = vpack.c.b16 %v1872, %v1864
    %v3481 = vpack.c.b16 %v1873, %v1865
    %v3482 = vpack.c.b16 %v1874, %v1866
    %v3483 = vpack.c.b16 %v1883, %v1875
    %v3484 = vpack.c.b16 %v1884, %v1876
    %v3485 = vpack.c.b16 %v1885, %v1877
    %v3486 = vpack.c.b16 %v1886, %v1878
    %v3487 = vpack.c.b16 %v1887, %v1879
    %v3488 = vpack.c.b16 %v1888, %v1880
    %v3489 = vpack.c.b16 %v1889, %v1881
    %v3490 = vpack.c.b16 %v1890, %v1882
    %v3491 = vpack.c.b16 %v1899, %v1891
    %v3492 = vpack.c.b16 %v1900, %v1892
    %v3493 = vpack.c.b16 %v1901, %v1893
    %v3494 = vpack.c.b16 %v1902, %v1894
    %v3495 = vpack.c.b16 %v1903, %v1895
    %v3496 = vpack.c.b16 %v1904, %v1896
    %v3497 = vpack.c.b16 %v1905, %v1897
    %v3498 = vpack.c.b16 %v1906, %v1898
    %v3499 = vpack.c.b16 %v1915, %v1907
    %v3500 = vpack.c.b16 %v1916, %v1908
    %v3501 = vpack.c.b16 %v1917, %v1909
    %v3502 = vpack.c.b16 %v1918, %v1910
    %v3503 = vpack.c.b16 %v1919, %v1911
    %v3504 = vpack.c.b16 %v1920, %v1912
    %v3505 = vpack.c.b16 %v1921, %v1913
    %v3506 = vpack.c.b16 %v1922, %v1914
    %v3507 = vpack.c.b16 %v1931, %v1923
    %v3508 = vpack.c.b16 %v1932, %v1924
    %v3509 = vpack.c.b16 %v1933, %v1925
    %v3510 = vpack.c.b16 %v1934, %v1926
    %v3511 = vpack.c.b16 %v1935, %v1927
    %v3512 = vpack.c.b16 %v1936, %v1928
    %v3513 = vpack.c.b16 %v1937, %v1929
    %v3514 = vpack.c.b16 %v1938, %v1930
    %v3515 = vpack.c.b16 %v1947, %v1939
    %v3516 = vpack.c.b16 %v1948, %v1940
    %v3517 = vpack.c.b16 %v1949, %v1941
    %v3518 = vpack.c.b16 %v1950, %v1942
    %v3519 = vpack.c.b16 %v1951, %v1943
    %v3520 = vpack.c.b16 %v1952, %v1944
    %v3521 = vpack.c.b16 %v1953, %v1945
    %v3522 = vpack.c.b16 %v1954, %v1946
    %v3523 = vpack.c.b16 %v1963, %v1955
    %v3524 = vpack.c.b16 %v1964, %v1956
    %v3525 = vpack.c.b16 %v1965, %v1957
    %v3526 = vpack.c.b16 %v1966, %v1958
    %v3527 = vpack.c.b16 %v1967, %v1959
    %v3528 = vpack.c.b16 %v1968, %v1960
    %v3529 = vpack.c.b16 %v1969, %v1961
    %v3530 = vpack.c.b16 %v1970, %v1962
    %v3531 = vpack.c.b16 %v1979, %v1971
    %v3532 = vpack.c.b16 %v1980, %v1972
    %v3533 = vpack.c.b16 %v1981, %v1973
    %v3534 = vpack.c.b16 %v1982, %v1974
    %v3535 = vpack.c.b16 %v1983, %v1975
    %v3536 = vpack.c.b16 %v1984, %v1976
    %v3537 = vpack.c.b16 %v1985, %v1977
    %v3538 = vpack.c.b16 %v1986, %v1978
    %v3539 = vpack.c.b16 %v1995, %v1987
    %v3540 = vpack.c.b16 %v1996, %v1988
    %v3541 = vpack.c.b16 %v1997, %v1989
    %v3542 = vpack.c.b16 %v1998, %v1990
    %v3543 = vpack.c.b16 %v1999, %v1991
    %v3544 = vpack.c.b16 %v2000, %v1992
    %v3545 = vpack.c.b16 %v2001, %v1993
    %v3546 = vpack.c.b16 %v2002, %v1994
    %v3547 = vpack.c.b16 %v2011, %v2003
    %v3548 = vpack.c.b16 %v2012, %v2004
    %v3549 = vpack.c.b16 %v2013, %v2005
    %v3550 = vpack.c.b16 %v2014, %v2006
    %v3551 = vpack.c.b16 %v2015, %v2007
    %v3552 = vpack.c.b16 %v2016, %v2008
    %v3553 = vpack.c.b16 %v2017, %v2009
    %v3554 = vpack.c.b16 %v2018, %v2010
    %v3555 = vpack.c.b16 %v2027, %v2019
    %v3556 = vpack.c.b16 %v2028, %v2020
    %v3557 = vpack.c.b16 %v2029, %v2021
    %v3558 = vpack.c.b16 %v2030, %v2022
    %v3559 = vpack.c.b16 %v2031, %v2023
    %v3560 = vpack.c.b16 %v2032, %v2024
    %v3561 = vpack.c.b16 %v2033, %v2025
    %v3562 = vpack.c.b16 %v2034, %v2026
    %v3563 = vpack.c.b16 %v2043, %v2035
    %v3564 = vpack.c.b16 %v2044, %v2036
    %v3565 = vpack.c.b16 %v2045, %v2037
    %v3566 = vpack.c.b16 %v2046, %v2038
    %v3567 = vpack.c.b16 %v2047, %v2039
    %v3568 = vpack.c.b16 %v2048, %v2040
    %v3569 = vpack.c.b16 %v2049, %v2041
    %v3570 = vpack.c.b16 %v2050, %v2042
    %v3571 = vpack.c.b16 %v2059, %v2051
    %v3572 = vpack.c.b16 %v2060, %v2052
    %v3573 = vpack.c.b16 %v2061, %v2053
    %v3574 = vpack.c.b16 %v2062, %v2054
    %v3575 = vpack.c.b16 %v2063, %v2055
    %v3576 = vpack.c.b16 %v2064, %v2056
    %v3577 = vpack.c.b16 %v2065, %v2057
    %v3578 = vpack.c.b16 %v2066, %v2058
    %v3579 = vpack.c.b16 %v2075, %v2067
    %v3580 = vpack.c.b16 %v2076, %v2068
    %v3581 = vpack.c.b16 %v2077, %v2069
    %v3582 = vpack.c.b16 %v2078, %v2070
    %v3583 = vpack.c.b16 %v2079, %v2071
    %v3584 = vpack.c.b16 %v2080, %v2072
    %v3585 = vpack.c.b16 %v2081, %v2073
    %v3586 = vpack.c.b16 %v2082, %v2074
    %v3587 = vpack.c.b16 %v2091, %v2083
    %v3588 = vpack.c.b16 %v2092, %v2084
    %v3589 = vpack.c.b16 %v2093, %v2085
    %v3590 = vpack.c.b16 %v2094, %v2086
    %v3591 = vpack.c.b16 %v2095, %v2087
    %v3592 = vpack.c.b16 %v2096, %v2088
    %v3593 = vpack.c.b16 %v2097, %v2089
    %v3594 = vpack.c.b16 %v2098, %v2090
    %v3595 = vpack.c.b16 %v2107, %v2099
    %v3596 = vpack.c.b16 %v2108, %v2100
    %v3597 = vpack.c.b16 %v2109, %v2101
    %v3598 = vpack.c.b16 %v2110, %v2102
    %v3599 = vpack.c.b16 %v2111, %v2103
    %v3600 = vpack.c.b16 %v2112, %v2104
    %v3601 = vpack.c.b16 %v2113, %v2105
    %v3602 = vpack.c.b16 %v2114, %v2106
    %v3603 = vpack.c.b16 %v2123, %v2115
    %v3604 = vpack.c.b16 %v2124, %v2116
    %v3605 = vpack.c.b16 %v2125, %v2117
    %v3606 = vpack.c.b16 %v2126, %v2118
    %v3607 = vpack.c.b16 %v2127, %v2119
    %v3608 = vpack.c.b16 %v2128, %v2120
    %v3609 = vpack.c.b16 %v2129, %v2121
    %v3610 = vpack.c.b16 %v2130, %v2122
    %v3611 = vpack.c.b16 %v2139, %v2131
    %v3612 = vpack.c.b16 %v2140, %v2132
    %v3613 = vpack.c.b16 %v2141, %v2133
    %v3614 = vpack.c.b16 %v2142, %v2134
    %v3615 = vpack.c.b16 %v2143, %v2135
    %v3616 = vpack.c.b16 %v2144, %v2136
    %v3617 = vpack.c.b16 %v2145, %v2137
    %v3618 = vpack.c.b16 %v2146, %v2138
    %v3619 = vpack.c.b16 %v2155, %v2147
    %v3620 = vpack.c.b16 %v2156, %v2148
    %v3621 = vpack.c.b16 %v2157, %v2149
    %v3622 = vpack.c.b16 %v2158, %v2150
    %v3623 = vpack.c.b16 %v2159, %v2151
    %v3624 = vpack.c.b16 %v2160, %v2152
    %v3625 = vpack.c.b16 %v2161, %v2153
    %v3626 = vpack.c.b16 %v2162, %v2154
    %v3627 = vpack.c.b16 %v2171, %v2163
    %v3628 = vpack.c.b16 %v2172, %v2164
    %v3629 = vpack.c.b16 %v2173, %v2165
    %v3630 = vpack.c.b16 %v2174, %v2166
    %v3631 = vpack.c.b16 %v2175, %v2167
    %v3632 = vpack.c.b16 %v2176, %v2168
    %v3633 = vpack.c.b16 %v2177, %v2169
    %v3634 = vpack.c.b16 %v2178, %v2170
    %v3635 = vpack.c.b16 %v2187, %v2179
    %v3636 = vpack.c.b16 %v2188, %v2180
    %v3637 = vpack.c.b16 %v2189, %v2181
    %v3638 = vpack.c.b16 %v2190, %v2182
    %v3639 = vpack.c.b16 %v2191, %v2183
    %v3640 = vpack.c.b16 %v2192, %v2184
    %v3641 = vpack.c.b16 %v2193, %v2185
    %v3642 = vpack.c.b16 %v2194, %v2186
    %v3643 = vpack.c.b16 %v2203, %v2195
    %v3644 = vpack.c.b16 %v2204, %v2196
    %v3645 = vpack.c.b16 %v2205, %v2197
    %v3646 = vpack.c.b16 %v2206, %v2198
    %v3647 = vpack.c.b16 %v2207, %v2199
    %v3648 = vpack.c.b16 %v2208, %v2200
    %v3649 = vpack.c.b16 %v2209, %v2201
    %v3650 = vpack.c.b16 %v2210, %v2202
    %v3651 = vpack.c.b16 %v2219, %v2211
    %v3652 = vpack.c.b16 %v2220, %v2212
    %v3653 = vpack.c.b16 %v2221, %v2213
    %v3654 = vpack.c.b16 %v2222, %v2214
    %v3655 = vpack.c.b16 %v2223, %v2215
    %v3656 = vpack.c.b16 %v2224, %v2216
    %v3657 = vpack.c.b16 %v2225, %v2217
    %v3658 = vpack.c.b16 %v2226, %v2218
    %v3659 = vpack.c.b16 %v2235, %v2227
    %v3660 = vpack.c.b16 %v2236, %v2228
    %v3661 = vpack.c.b16 %v2237, %v2229
    %v3662 = vpack.c.b16 %v2238, %v2230
    %v3663 = vpack.c.b16 %v2239, %v2231
    %v3664 = vpack.c.b16 %v2240, %v2232
    %v3665 = vpack.c.b16 %v2241, %v2233
    %v3666 = vpack.c.b16 %v2242, %v2234
    %v3667 = vpack.c.b16 %v2251, %v2243
    %v3668 = vpack.c.b16 %v2252, %v2244
    %v3669 = vpack.c.b16 %v2253, %v2245
    %v3670 = vpack.c.b16 %v2254, %v2246
    %v3671 = vpack.c.b16 %v2255, %v2247
    %v3672 = vpack.c.b16 %v2256, %v2248
    %v3673 = vpack.c.b16 %v2257, %v2249
    %v3674 = vpack.c.b16 %v2258, %v2250
    %v3675 = vpack.c.b16 %v2267, %v2259
    %v3676 = vpack.c.b16 %v2268, %v2260
    %v3677 = vpack.c.b16 %v2269, %v2261
    %v3678 = vpack.c.b16 %v2270, %v2262
    %v3679 = vpack.c.b16 %v2271, %v2263
    %v3680 = vpack.c.b16 %v2272, %v2264
    %v3681 = vpack.c.b16 %v2273, %v2265
    %v3682 = vpack.c.b16 %v2274, %v2266
    %v3683 = vpack.c.b16 %v2283, %v2275
    %v3684 = vpack.c.b16 %v2284, %v2276
    %v3685 = vpack.c.b16 %v2285, %v2277
    %v3686 = vpack.c.b16 %v2286, %v2278
    %v3687 = vpack.c.b16 %v2287, %v2279
    %v3688 = vpack.c.b16 %v2288, %v2280
    %v3689 = vpack.c.b16 %v2289, %v2281
    %v3690 = vpack.c.b16 %v2290, %v2282
    %v3691 = vpack.c.b16 %v2299, %v2291
    %v3692 = vpack.c.b16 %v2300, %v2292
    %v3693 = vpack.c.b16 %v2301, %v2293
    %v3694 = vpack.c.b16 %v2302, %v2294
    %v3695 = vpack.c.b16 %v2303, %v2295
    %v3696 = vpack.c.b16 %v2304, %v2296
    %v3697 = vpack.c.b16 %v2305, %v2297
    %v3698 = vpack.c.b16 %v2306, %v2298
    %v3699 = vpack.c.b16 %v2315, %v2307
    %v3700 = vpack.c.b16 %v2316, %v2308
    %v3701 = vpack.c.b16 %v2317, %v2309
    %v3702 = vpack.c.b16 %v2318, %v2310
    %v3703 = vpack.c.b16 %v2319, %v2311
    %v3704 = vpack.c.b16 %v2320, %v2312
    %v3705 = vpack.c.b16 %v2321, %v2313
    %v3706 = vpack.c.b16 %v2322, %v2314
    %v3707 = vpack.c.b16 %v2331, %v2323
    %v3708 = vpack.c.b16 %v2332, %v2324
    %v3709 = vpack.c.b16 %v2333, %v2325
    %v3710 = vpack.c.b16 %v2334, %v2326
    %v3711 = vpack.c.b16 %v2335, %v2327
    %v3712 = vpack.c.b16 %v2336, %v2328
    %v3713 = vpack.c.b16 %v2337, %v2329
    %v3714 = vpack.c.b16 %v2338, %v2330
    %v3715 = vpack.c.b16 %v2347, %v2339
    %v3716 = vpack.c.b16 %v2348, %v2340
    %v3717 = vpack.c.b16 %v2349, %v2341
    %v3718 = vpack.c.b16 %v2350, %v2342
    %v3719 = vpack.c.b16 %v2351, %v2343
    %v3720 = vpack.c.b16 %v2352, %v2344
    %v3721 = vpack.c.b16 %v2353, %v2345
    %v3722 = vpack.c.b16 %v2354, %v2346
    %v3723 = vpack.c.b16 %v2363, %v2355
    %v3724 = vpack.c.b16 %v2364, %v2356
    %v3725 = vpack.c.b16 %v2365, %v2357
    %v3726 = vpack.c.b16 %v2366, %v2358
    %v3727 = vpack.c.b16 %v2367, %v2359
    %v3728 = vpack.c.b16 %v2368, %v2360
    %v3729 = vpack.c.b16 %v2369, %v2361
    %v3730 = vpack.c.b16 %v2370, %v2362
    %v3731 = vpack.c.b16 %v2379, %v2371
    %v3732 = vpack.c.b16 %v2380, %v2372
    %v3733 = vpack.c.b16 %v2381, %v2373
    %v3734 = vpack.c.b16 %v2382, %v2374
    %v3735 = vpack.c.b16 %v2383, %v2375
    %v3736 = vpack.c.b16 %v2384, %v2376
    %v3737 = vpack.c.b16 %v2385, %v2377
    %v3738 = vpack.c.b16 %v2386, %v2378
    %v3739 = vpack.c.b16 %v2395, %v2387
    %v3740 = vpack.c.b16 %v2396, %v2388
    %v3741 = vpack.c.b16 %v2397, %v2389
    %v3742 = vpack.c.b16 %v2398, %v2390
    %v3743 = vpack.c.b16 %v2399, %v2391
    %v3744 = vpack.c.b16 %v2400, %v2392
    %v3745 = vpack.c.b16 %v2401, %v2393
    %v3746 = vpack.c.b16 %v2402, %v2394
    %v3747 = vpack.c.b16 %v2411, %v2403
    %v3748 = vpack.c.b16 %v2412, %v2404
    %v3749 = vpack.c.b16 %v2413, %v2405
    %v3750 = vpack.c.b16 %v2414, %v2406
    %v3751 = vpack.c.b16 %v2415, %v2407
    %v3752 = vpack.c.b16 %v2416, %v2408
    %v3753 = vpack.c.b16 %v2417, %v2409
    %v3754 = vpack.c.b16 %v2418, %v2410
    %v3755 = vpack.c.b16 %v2427, %v2419
    %v3756 = vpack.c.b16 %v2428, %v2420
    %v3757 = vpack.c.b16 %v2429, %v2421
    %v3758 = vpack.c.b16 %v2430, %v2422
    %v3759 = vpack.c.b16 %v2431, %v2423
    %v3760 = vpack.c.b16 %v2432, %v2424
    %v3761 = vpack.c.b16 %v2433, %v2425
    %v3762 = vpack.c.b16 %v2434, %v2426
    %v3763 = vpack.c.b16 %v2443, %v2435
    %v3764 = vpack.c.b16 %v2444, %v2436
    %v3765 = vpack.c.b16 %v2445, %v2437
    %v3766 = vpack.c.b16 %v2446, %v2438
    %v3767 = vpack.c.b16 %v2447, %v2439
    %v3768 = vpack.c.b16 %v2448, %v2440
    %v3769 = vpack.c.b16 %v2449, %v2441
    %v3770 = vpack.c.b16 %v2450, %v2442
    %v3771 = vpack.c.b16 %v2459, %v2451
    %v3772 = vpack.c.b16 %v2460, %v2452
    %v3773 = vpack.c.b16 %v2461, %v2453
    %v3774 = vpack.c.b16 %v2462, %v2454
    %v3775 = vpack.c.b16 %v2463, %v2455
    %v3776 = vpack.c.b16 %v2464, %v2456
    %v3777 = vpack.c.b16 %v2465, %v2457
    %v3778 = vpack.c.b16 %v2466, %v2458
    %v3779 = vpack.c.b16 %v2475, %v2467
    %v3780 = vpack.c.b16 %v2476, %v2468
    %v3781 = vpack.c.b16 %v2477, %v2469
    %v3782 = vpack.c.b16 %v2478, %v2470
    %v3783 = vpack.c.b16 %v2479, %v2471
    %v3784 = vpack.c.b16 %v2480, %v2472
    %v3785 = vpack.c.b16 %v2481, %v2473
    %v3786 = vpack.c.b16 %v2482, %v2474
    %v3787 = vpack.c.b16 %v2491, %v2483
    %v3788 = vpack.c.b16 %v2492, %v2484
    %v3789 = vpack.c.b16 %v2493, %v2485
    %v3790 = vpack.c.b16 %v2494, %v2486
    %v3791 = vpack.c.b16 %v2495, %v2487
    %v3792 = vpack.c.b16 %v2496, %v2488
    %v3793 = vpack.c.b16 %v2497, %v2489
    %v3794 = vpack.c.b16 %v2498, %v2490
    %v3795 = vpack.c.b16 %v2507, %v2499
    %v3796 = vpack.c.b16 %v2508, %v2500
    %v3797 = vpack.c.b16 %v2509, %v2501
    %v3798 = vpack.c.b16 %v2510, %v2502
    %v3799 = vpack.c.b16 %v2511, %v2503
    %v3800 = vpack.c.b16 %v2512, %v2504
    %v3801 = vpack.c.b16 %v2513, %v2505
    %v3802 = vpack.c.b16 %v2514, %v2506
    %v3803 = vpack.c.b16 %v2523, %v2515
    %v3804 = vpack.c.b16 %v2524, %v2516
    %v3805 = vpack.c.b16 %v2525, %v2517
    %v3806 = vpack.c.b16 %v2526, %v2518
    %v3807 = vpack.c.b16 %v2527, %v2519
    %v3808 = vpack.c.b16 %v2528, %v2520
    %v3809 = vpack.c.b16 %v2529, %v2521
    %v3810 = vpack.c.b16 %v2530, %v2522
    %v3811 = vpack.c.b16 %v2539, %v2531
    %v3812 = vpack.c.b16 %v2540, %v2532
    %v3813 = vpack.c.b16 %v2541, %v2533
    %v3814 = vpack.c.b16 %v2542, %v2534
    %v3815 = vpack.c.b16 %v2543, %v2535
    %v3816 = vpack.c.b16 %v2544, %v2536
    %v3817 = vpack.c.b16 %v2545, %v2537
    %v3818 = vpack.c.b16 %v2546, %v2538
    %v3819 = vpack.c.b16 %v2555, %v2547
    %v3820 = vpack.c.b16 %v2556, %v2548
    %v3821 = vpack.c.b16 %v2557, %v2549
    %v3822 = vpack.c.b16 %v2558, %v2550
    %v3823 = vpack.c.b16 %v2559, %v2551
    %v3824 = vpack.c.b16 %v2560, %v2552
    %v3825 = vpack.c.b16 %v2561, %v2553
    %v3826 = vpack.c.b16 %v2562, %v2554
    %v3827 = vpack.c.b16 %v2571, %v2563
    %v3828 = vpack.c.b16 %v2572, %v2564
    %v3829 = vpack.c.b16 %v2573, %v2565
    %v3830 = vpack.c.b16 %v2574, %v2566
    %v3831 = vpack.c.b16 %v2575, %v2567
    %v3832 = vpack.c.b16 %v2576, %v2568
    %v3833 = vpack.c.b16 %v2577, %v2569
    %v3834 = vpack.c.b16 %v2578, %v2570
    %v3835 = vpack.c.b16 %v2587, %v2579
    %v3836 = vpack.c.b16 %v2588, %v2580
    %v3837 = vpack.c.b16 %v2589, %v2581
    %v3838 = vpack.c.b16 %v2590, %v2582
    %v3839 = vpack.c.b16 %v2591, %v2583
    %v3840 = vpack.c.b16 %v2592, %v2584
    %v3841 = vpack.c.b16 %v2593, %v2585
    %v3842 = vpack.c.b16 %v2594, %v2586
    %v3843 = vpack.c.b16 %v2603, %v2595
    %v3844 = vpack.c.b16 %v2604, %v2596
    %v3845 = vpack.c.b16 %v2605, %v2597
    %v3846 = vpack.c.b16 %v2606, %v2598
    %v3847 = vpack.c.b16 %v2607, %v2599
    %v3848 = vpack.c.b16 %v2608, %v2600
    %v3849 = vpack.c.b16 %v2609, %v2601
    %v3850 = vpack.c.b16 %v2610, %v2602
    %v3851 = vpack.c.b16 %v2619, %v2611
    %v3852 = vpack.c.b16 %v2620, %v2612
    %v3853 = vpack.c.b16 %v2621, %v2613
    %v3854 = vpack.c.b16 %v2622, %v2614
    %v3855 = vpack.c.b16 %v2623, %v2615
    %v3856 = vpack.c.b16 %v2624, %v2616
    %v3857 = vpack.c.b16 %v2625, %v2617
    %v3858 = vpack.c.b16 %v2626, %v2618
    %v3859 = vpack.c.b16 %v2635, %v2627
    %v3860 = vpack.c.b16 %v2636, %v2628
    %v3861 = vpack.c.b16 %v2637, %v2629
    %v3862 = vpack.c.b16 %v2638, %v2630
    %v3863 = vpack.c.b16 %v2639, %v2631
    %v3864 = vpack.c.b16 %v2640, %v2632
    %v3865 = vpack.c.b16 %v2641, %v2633
    %v3866 = vpack.c.b16 %v2642, %v2634
    %v3867 = vpack.c.b16 %v2651, %v2643
    %v3868 = vpack.c.b16 %v2652, %v2644
    %v3869 = vpack.c.b16 %v2653, %v2645
    %v3870 = vpack.c.b16 %v2654, %v2646
    %v3871 = vpack.c.b16 %v2655, %v2647
    %v3872 = vpack.c.b16 %v2656, %v2648
    %v3873 = vpack.c.b16 %v2657, %v2649
    %v3874 = vpack.c.b16 %v2658, %v2650
    %v3875 = vpack.c.b16 %v2667, %v2659
    %v3876 = vpack.c.b16 %v2668, %v2660
    %v3877 = vpack.c.b16 %v2669, %v2661
    %v3878 = vpack.c.b16 %v2670, %v2662
    %v3879 = vpack.c.b16 %v2671, %v2663
    %v3880 = vpack.c.b16 %v2672, %v2664
    %v3881 = vpack.c.b16 %v2673, %v2665
    %v3882 = vpack.c.b16 %v2674, %v2666
    %v3883 = vpack.c.b16 %v2683, %v2675
    %v3884 = vpack.c.b16 %v2684, %v2676
    %v3885 = vpack.c.b16 %v2685, %v2677
    %v3886 = vpack.c.b16 %v2686, %v2678
    %v3887 = vpack.c.b16 %v2687, %v2679
    %v3888 = vpack.c.b16 %v2688, %v2680
    %v3889 = vpack.c.b16 %v2689, %v2681
    %v3890 = vpack.c.b16 %v2690, %v2682
    %v3891 = vpack.c.b16 %v2699, %v2691
    %v3892 = vpack.c.b16 %v2700, %v2692
    %v3893 = vpack.c.b16 %v2701, %v2693
    %v3894 = vpack.c.b16 %v2702, %v2694
    %v3895 = vpack.c.b16 %v2703, %v2695
    %v3896 = vpack.c.b16 %v2704, %v2696
    %v3897 = vpack.c.b16 %v2705, %v2697
    %v3898 = vpack.c.b16 %v2706, %v2698
    %v3899 = vpack.c.b16 %v2715, %v2707
    %v3900 = vpack.c.b16 %v2716, %v2708
    %v3901 = vpack.c.b16 %v2717, %v2709
    %v3902 = vpack.c.b16 %v2718, %v2710
    %v3903 = vpack.c.b16 %v2719, %v2711
    %v3904 = vpack.c.b16 %v2720, %v2712
    %v3905 = vpack.c.b16 %v2721, %v2713
    %v3906 = vpack.c.b16 %v2722, %v2714
    %v3907 = vpack.c.b16 %v2731, %v2723
    %v3908 = vpack.c.b16 %v2732, %v2724
    %v3909 = vpack.c.b16 %v2733, %v2725
    %v3910 = vpack.c.b16 %v2734, %v2726
    %v3911 = vpack.c.b16 %v2735, %v2727
    %v3912 = vpack.c.b16 %v2736, %v2728
    %v3913 = vpack.c.b16 %v2737, %v2729
    %v3914 = vpack.c.b16 %v2738, %v2730
    %v3915 = vpack.c.b16 %v2747, %v2739
    %v3916 = vpack.c.b16 %v2748, %v2740
    %v3917 = vpack.c.b16 %v2749, %v2741
    %v3918 = vpack.c.b16 %v2750, %v2742
    %v3919 = vpack.c.b16 %v2751, %v2743
    %v3920 = vpack.c.b16 %v2752, %v2744
    %v3921 = vpack.c.b16 %v2753, %v2745
    %v3922 = vpack.c.b16 %v2754, %v2746
    %v3923 = vpack.c.b16 %v2763, %v2755
    %v3924 = vpack.c.b16 %v2764, %v2756
    %v3925 = vpack.c.b16 %v2765, %v2757
    %v3926 = vpack.c.b16 %v2766, %v2758
    %v3927 = vpack.c.b16 %v2767, %v2759
    %v3928 = vpack.c.b16 %v2768, %v2760
    %v3929 = vpack.c.b16 %v2769, %v2761
    %v3930 = vpack.c.b16 %v2770, %v2762
    %v3931 = vpack.c.b16 %v2779, %v2771
    %v3932 = vpack.c.b16 %v2780, %v2772
    %v3933 = vpack.c.b16 %v2781, %v2773
    %v3934 = vpack.c.b16 %v2782, %v2774
    %v3935 = vpack.c.b16 %v2783, %v2775
    %v3936 = vpack.c.b16 %v2784, %v2776
    %v3937 = vpack.c.b16 %v2785, %v2777
    %v3938 = vpack.c.b16 %v2786, %v2778
    %v3939 = vpack.c.b16 %v2795, %v2787
    %v3940 = vpack.c.b16 %v2796, %v2788
    %v3941 = vpack.c.b16 %v2797, %v2789
    %v3942 = vpack.c.b16 %v2798, %v2790
    %v3943 = vpack.c.b16 %v2799, %v2791
    %v3944 = vpack.c.b16 %v2800, %v2792
    %v3945 = vpack.c.b16 %v2801, %v2793
    %v3946 = vpack.c.b16 %v2802, %v2794
    %v3947 = vpack.c.b16 %v2811, %v2803
    %v3948 = vpack.c.b16 %v2812, %v2804
    %v3949 = vpack.c.b16 %v2813, %v2805
    %v3950 = vpack.c.b16 %v2814, %v2806
    %v3951 = vpack.c.b16 %v2815, %v2807
    %v3952 = vpack.c.b16 %v2816, %v2808
    %v3953 = vpack.c.b16 %v2817, %v2809
    %v3954 = vpack.c.b16 %v2818, %v2810
    %v3955 = vpack.c.b16 %v2827, %v2819
    %v3956 = vpack.c.b16 %v2828, %v2820
    %v3957 = vpack.c.b16 %v2829, %v2821
    %v3958 = vpack.c.b16 %v2830, %v2822
    %v3959 = vpack.c.b16 %v2831, %v2823
    %v3960 = vpack.c.b16 %v2832, %v2824
    %v3961 = vpack.c.b16 %v2833, %v2825
    %v3962 = vpack.c.b16 %v2834, %v2826
    %v3963 = vpack.c.b16 %v2843, %v2835
    %v3964 = vpack.c.b16 %v2844, %v2836
    %v3965 = vpack.c.b16 %v2845, %v2837
    %v3966 = vpack.c.b16 %v2846, %v2838
    %v3967 = vpack.c.b16 %v2847, %v2839
    %v3968 = vpack.c.b16 %v2848, %v2840
    %v3969 = vpack.c.b16 %v2849, %v2841
    %v3970 = vpack.c.b16 %v2850, %v2842
    %v3971 = vpack.c.b16 %v2859, %v2851
    %v3972 = vpack.c.b16 %v2860, %v2852
    %v3973 = vpack.c.b16 %v2861, %v2853
    %v3974 = vpack.c.b16 %v2862, %v2854
    %v3975 = vpack.c.b16 %v2863, %v2855
    %v3976 = vpack.c.b16 %v2864, %v2856
    %v3977 = vpack.c.b16 %v2865, %v2857
    %v3978 = vpack.c.b16 %v2866, %v2858
    %v3979 = vpack.c.b16 %v2875, %v2867
    %v3980 = vpack.c.b16 %v2876, %v2868
    %v3981 = vpack.c.b16 %v2877, %v2869
    %v3982 = vpack.c.b16 %v2878, %v2870
    %v3983 = vpack.c.b16 %v2879, %v2871
    %v3984 = vpack.c.b16 %v2880, %v2872
    %v3985 = vpack.c.b16 %v2881, %v2873
    %v3986 = vpack.c.b16 %v2882, %v2874
    %v3987 = vpack.c.b16 %v2891, %v2883
    %v3988 = vpack.c.b16 %v2892, %v2884
    %v3989 = vpack.c.b16 %v2893, %v2885
    %v3990 = vpack.c.b16 %v2894, %v2886
    %v3991 = vpack.c.b16 %v2895, %v2887
    %v3992 = vpack.c.b16 %v2896, %v2888
    %v3993 = vpack.c.b16 %v2897, %v2889
    %v3994 = vpack.c.b16 %v2898, %v2890
    %v3995 = vpack.c.b16 %v2907, %v2899
    %v3996 = vpack.c.b16 %v2908, %v2900
    %v3997 = vpack.c.b16 %v2909, %v2901
    %v3998 = vpack.c.b16 %v2910, %v2902
    %v3999 = vpack.c.b16 %v2911, %v2903
    %v4000 = vpack.c.b16 %v2912, %v2904
    %v4001 = vpack.c.b16 %v2913, %v2905
    %v4002 = vpack.c.b16 %v2914, %v2906
    %v4003 = vpack.c.b16 %v2923, %v2915
    %v4004 = vpack.c.b16 %v2924, %v2916
    %v4005 = vpack.c.b16 %v2925, %v2917
    %v4006 = vpack.c.b16 %v2926, %v2918
    %v4007 = vpack.c.b16 %v2927, %v2919
    %v4008 = vpack.c.b16 %v2928, %v2920
    %v4009 = vpack.c.b16 %v2929, %v2921
    %v4010 = vpack.c.b16 %v2930, %v2922
    %v4011 = vpack.c.b16 %v2939, %v2931
    %v4012 = vpack.c.b16 %v2940, %v2932
    %v4013 = vpack.c.b16 %v2941, %v2933
    %v4014 = vpack.c.b16 %v2942, %v2934
    %v4015 = vpack.c.b16 %v2943, %v2935
    %v4016 = vpack.c.b16 %v2944, %v2936
    %v4017 = vpack.c.b16 %v2945, %v2937
    %v4018 = vpack.c.b16 %v2946, %v2938
    %v4019 = vpack.c.b16 %v2955, %v2947
    %v4020 = vpack.c.b16 %v2956, %v2948
    %v4021 = vpack.c.b16 %v2957, %v2949
    %v4022 = vpack.c.b16 %v2958, %v2950
    %v4023 = vpack.c.b16 %v2959, %v2951
    %v4024 = vpack.c.b16 %v2960, %v2952
    %v4025 = vpack.c.b16 %v2961, %v2953
    %v4026 = vpack.c.b16 %v2962, %v2954
    %v4027 = vpack.c.b16 %v2971, %v2963
    %v4028 = vpack.c.b16 %v2972, %v2964
    %v4029 = vpack.c.b16 %v2973, %v2965
    %v4030 = vpack.c.b16 %v2974, %v2966
    %v4031 = vpack.c.b16 %v2975, %v2967
    %v4032 = vpack.c.b16 %v2976, %v2968
    %v4033 = vpack.c.b16 %v2977, %v2969
    %v4034 = vpack.c.b16 %v2978, %v2970
    %v4035 = vpack.c.b16 %v2987, %v2979
    %v4036 = vpack.c.b16 %v2988, %v2980
    %v4037 = vpack.c.b16 %v2989, %v2981
    %v4038 = vpack.c.b16 %v2990, %v2982
    %v4039 = vpack.c.b16 %v2991, %v2983
    %v4040 = vpack.c.b16 %v2992, %v2984
    %v4041 = vpack.c.b16 %v2993, %v2985
    %v4042 = vpack.c.b16 %v2994, %v2986
    %v4043 = vpack.c.b16 %v3003, %v2995
    %v4044 = vpack.c.b16 %v3004, %v2996
    %v4045 = vpack.c.b16 %v3005, %v2997
    %v4046 = vpack.c.b16 %v3006, %v2998
    %v4047 = vpack.c.b16 %v3007, %v2999
    %v4048 = vpack.c.b16 %v3008, %v3000
    %v4049 = vpack.c.b16 %v3009, %v3001
    %v4050 = vpack.c.b16 %v3010, %v3002
    %v4051 = vpack.c.b16 %v3019, %v3011
    %v4052 = vpack.c.b16 %v3020, %v3012
    %v4053 = vpack.c.b16 %v3021, %v3013
    %v4054 = vpack.c.b16 %v3022, %v3014
    %v4055 = vpack.c.b16 %v3023, %v3015
    %v4056 = vpack.c.b16 %v3024, %v3016
    %v4057 = vpack.c.b16 %v3025, %v3017
    %v4058 = vpack.c.b16 %v3026, %v3018
    %v4059 = vpack.c.b16 %v3035, %v3027
    %v4060 = vpack.c.b16 %v3036, %v3028
    %v4061 = vpack.c.b16 %v3037, %v3029
    %v4062 = vpack.c.b16 %v3038, %v3030
    %v4063 = vpack.c.b16 %v3039, %v3031
    %v4064 = vpack.c.b16 %v3040, %v3032
    %v4065 = vpack.c.b16 %v3041, %v3033
    %v4066 = vpack.c.b16 %v3042, %v3034
    %v4067 = vpack.c.b16 %v3051, %v3043
    %v4068 = vpack.c.b16 %v3052, %v3044
    %v4069 = vpack.c.b16 %v3053, %v3045
    %v4070 = vpack.c.b16 %v3054, %v3046
    %v4071 = vpack.c.b16 %v3055, %v3047
    %v4072 = vpack.c.b16 %v3056, %v3048
    %v4073 = vpack.c.b16 %v3057, %v3049
    %v4074 = vpack.c.b16 %v3058, %v3050
    %v4075 = vpack.c.b16 %v3067, %v3059
    %v4076 = vpack.c.b16 %v3068, %v3060
    %v4077 = vpack.c.b16 %v3069, %v3061
    %v4078 = vpack.c.b16 %v3070, %v3062
    %v4079 = vpack.c.b16 %v3071, %v3063
    %v4080 = vpack.c.b16 %v3072, %v3064
    %v4081 = vpack.c.b16 %v3073, %v3065
    %v4082 = vpack.c.b16 %v3074, %v3066
    %v4083 = vpack.c.b16 %v3083, %v3075
    %v4084 = vpack.c.b16 %v3084, %v3076
    %v4085 = vpack.c.b16 %v3085, %v3077
    %v4086 = vpack.c.b16 %v3086, %v3078
    %v4087 = vpack.c.b16 %v3087, %v3079
    %v4088 = vpack.c.b16 %v3088, %v3080
    %v4089 = vpack.c.b16 %v3089, %v3081
    %v4090 = vpack.c.b16 %v3090, %v3082
    %v4091 = vpack.c.b16 %v3099, %v3091
    %v4092 = vpack.c.b16 %v3100, %v3092
    %v4093 = vpack.c.b16 %v3101, %v3093
    %v4094 = vpack.c.b16 %v3102, %v3094
    %v4095 = vpack.c.b16 %v3103, %v3095
    %v4096 = vpack.c.b16 %v3104, %v3096
    %v4097 = vpack.c.b16 %v3105, %v3097
    %v4098 = vpack.c.b16 %v3106, %v3098
    %v4099 = vpack.c.b16 %v3115, %v3107
    %v4100 = vpack.c.b16 %v3116, %v3108
    %v4101 = vpack.c.b16 %v3117, %v3109
    %v4102 = vpack.c.b16 %v3118, %v3110
    %v4103 = vpack.c.b16 %v3119, %v3111
    %v4104 = vpack.c.b16 %v3120, %v3112
    %v4105 = vpack.c.b16 %v3121, %v3113
    %v4106 = vpack.c.b16 %v3122, %v3114
    %v4107 = vpack.c.b16 %v3131, %v3123
    %v4108 = vpack.c.b16 %v3132, %v3124
    %v4109 = vpack.c.b16 %v3133, %v3125
    %v4110 = vpack.c.b16 %v3134, %v3126
    %v4111 = vpack.c.b16 %v3135, %v3127
    %v4112 = vpack.c.b16 %v3136, %v3128
    %v4113 = vpack.c.b16 %v3137, %v3129
    %v4114 = vpack.c.b16 %v3138, %v3130
    %v4115 = vpack.c.b16 %v3147, %v3139
    %v4116 = vpack.c.b16 %v3148, %v3140
    %v4117 = vpack.c.b16 %v3149, %v3141
    %v4118 = vpack.c.b16 %v3150, %v3142
    %v4119 = vpack.c.b16 %v3151, %v3143
    %v4120 = vpack.c.b16 %v3152, %v3144
    %v4121 = vpack.c.b16 %v3153, %v3145
    %v4122 = vpack.c.b16 %v3154, %v3146
    %v4123 = vpack.c.b16 %v3163, %v3155
    %v4124 = vpack.c.b16 %v3164, %v3156
    %v4125 = vpack.c.b16 %v3165, %v3157
    %v4126 = vpack.c.b16 %v3166, %v3158
    %v4127 = vpack.c.b16 %v3167, %v3159
    %v4128 = vpack.c.b16 %v3168, %v3160
    %v4129 = vpack.c.b16 %v3169, %v3161
    %v4130 = vpack.c.b16 %v3170, %v3162
    %v4131 = vpack.c.b16 %v3179, %v3171
    %v4132 = vpack.c.b16 %v3180, %v3172
    %v4133 = vpack.c.b16 %v3181, %v3173
    %v4134 = vpack.c.b16 %v3182, %v3174
    %v4135 = vpack.c.b16 %v3183, %v3175
    %v4136 = vpack.c.b16 %v3184, %v3176
    %v4137 = vpack.c.b16 %v3185, %v3177
    %v4138 = vpack.c.b16 %v3186, %v3178
    %v4139 = vpack.c.b16 %v3195, %v3187
    %v4140 = vpack.c.b16 %v3196, %v3188
    %v4141 = vpack.c.b16 %v3197, %v3189
    %v4142 = vpack.c.b16 %v3198, %v3190
    %v4143 = vpack.c.b16 %v3199, %v3191
    %v4144 = vpack.c.b16 %v3200, %v3192
    %v4145 = vpack.c.b16 %v3201, %v3193
    %v4146 = vpack.c.b16 %v3202, %v3194
    %v4147 = vpack.c.b16 %v3211, %v3203
    %v4148 = vpack.c.b16 %v3212, %v3204
    %v4149 = vpack.c.b16 %v3213, %v3205
    %v4150 = vpack.c.b16 %v3214, %v3206
    %v4151 = vpack.c.b16 %v3215, %v3207
    %v4152 = vpack.c.b16 %v3216, %v3208
    %v4153 = vpack.c.b16 %v3217, %v3209
    %v4154 = vpack.c.b16 %v3218, %v3210
    %v4155 = vpack.c.b16 %v3227, %v3219
    %v4156 = vpack.c.b16 %v3228, %v3220
    %v4157 = vpack.c.b16 %v3229, %v3221
    %v4158 = vpack.c.b16 %v3230, %v3222
    %v4159 = vpack.c.b16 %v3231, %v3223
    %v4160 = vpack.c.b16 %v3232, %v3224
    %v4161 = vpack.c.b16 %v3233, %v3225
    %v4162 = vpack.c.b16 %v3234, %v3226
    %v4163 = vpack.c.b16 %v3243, %v3235
    %v4164 = vpack.c.b16 %v3244, %v3236
    %v4165 = vpack.c.b16 %v3245, %v3237
    %v4166 = vpack.c.b16 %v3246, %v3238
    %v4167 = vpack.c.b16 %v3247, %v3239
    %v4168 = vpack.c.b16 %v3248, %v3240
    %v4169 = vpack.c.b16 %v3249, %v3241
    %v4170 = vpack.c.b16 %v3250, %v3242
    %v4171 = vpack.c.b16 %v3259, %v3251
    %v4172 = vpack.c.b16 %v3260, %v3252
    %v4173 = vpack.c.b16 %v3261, %v3253
    %v4174 = vpack.c.b16 %v3262, %v3254
    %v4175 = vpack.c.b16 %v3263, %v3255
    %v4176 = vpack.c.b16 %v3264, %v3256
    %v4177 = vpack.c.b16 %v3265, %v3257
    %v4178 = vpack.c.b16 %v3266, %v3258
    %v4179 = vpack.c.b16 %v3275, %v3267
    %v4180 = vpack.c.b16 %v3276, %v3268
    %v4181 = vpack.c.b16 %v3277, %v3269
    %v4182 = vpack.c.b16 %v3278, %v3270
    %v4183 = vpack.c.b16 %v3279, %v3271
    %v4184 = vpack.c.b16 %v3280, %v3272
    %v4185 = vpack.c.b16 %v3281, %v3273
    %v4186 = vpack.c.b16 %v3282, %v3274
    %v4187 = vpack.c.b16 %v3291, %v3283
    %v4188 = vpack.c.b16 %v3292, %v3284
    %v4189 = vpack.c.b16 %v3293, %v3285
    %v4190 = vpack.c.b16 %v3294, %v3286
    %v4191 = vpack.c.b16 %v3295, %v3287
    %v4192 = vpack.c.b16 %v3296, %v3288
    %v4193 = vpack.c.b16 %v3297, %v3289
    %v4194 = vpack.c.b16 %v3298, %v3290
    %v4195 = vpack.c.b16 %v3307, %v3299
    %v4196 = vpack.c.b16 %v3308, %v3300
    %v4197 = vpack.c.b16 %v3309, %v3301
    %v4198 = vpack.c.b16 %v3310, %v3302
    %v4199 = vpack.c.b16 %v3311, %v3303
    %v4200 = vpack.c.b16 %v3312, %v3304
    %v4201 = vpack.c.b16 %v3313, %v3305
    %v4202 = vpack.c.b16 %v3314, %v3306
    %v4203 = vpack.c.b16 %v3323, %v3315
    %v4204 = vpack.c.b16 %v3324, %v3316
    %v4205 = vpack.c.b16 %v3325, %v3317
    %v4206 = vpack.c.b16 %v3326, %v3318
    %v4207 = vpack.c.b16 %v3327, %v3319
    %v4208 = vpack.c.b16 %v3328, %v3320
    %v4209 = vpack.c.b16 %v3329, %v3321
    %v4210 = vpack.c.b16 %v3330, %v3322
    %v4211 = vpack.c.b16 %v3339, %v3331
    %v4212 = vpack.c.b16 %v3340, %v3332
    %v4213 = vpack.c.b16 %v3341, %v3333
    %v4214 = vpack.c.b16 %v3342, %v3334
    %v4215 = vpack.c.b16 %v3343, %v3335
    %v4216 = vpack.c.b16 %v3344, %v3336
    %v4217 = vpack.c.b16 %v3345, %v3337
    %v4218 = vpack.c.b16 %v3346, %v3338
    %v4219 = vpack.c.b16 %v3355, %v3347
    %v4220 = vpack.c.b16 %v3356, %v3348
    %v4221 = vpack.c.b16 %v3357, %v3349
    %v4222 = vpack.c.b16 %v3358, %v3350
    %v4223 = vpack.c.b16 %v3359, %v3351
    %v4224 = vpack.c.b16 %v3360, %v3352
    %v4225 = vpack.c.b16 %v3361, %v3353
    %v4226 = vpack.c.b16 %v3362, %v3354
    %v4227 = vpack.c.b16 %v3371, %v3363
    %v4228 = vpack.c.b16 %v3372, %v3364
    %v4229 = vpack.c.b16 %v3373, %v3365
    %v4230 = vpack.c.b16 %v3374, %v3366
    %v4231 = vpack.c.b16 %v3375, %v3367
    %v4232 = vpack.c.b16 %v3376, %v3368
    %v4233 = vpack.c.b16 %v3377, %v3369
    %v4234 = vpack.c.b16 %v3378, %v3370
    %v4235 = vpack.c.b16 %v3387, %v3379
    %v4236 = vpack.c.b16 %v3388, %v3380
    %v4237 = vpack.c.b16 %v3389, %v3381
    %v4238 = vpack.c.b16 %v3390, %v3382
    %v4239 = vpack.c.b16 %v3391, %v3383
    %v4240 = vpack.c.b16 %v3392, %v3384
    %v4241 = vpack.c.b16 %v3393, %v3385
    %v4242 = vpack.c.b16 %v3394, %v3386
    %v4243 = vpack.c.b16 %v3403, %v3395
    %v4244 = vpack.c.b16 %v3404, %v3396
    %v4245 = vpack.c.b16 %v3405, %v3397
    %v4246 = vpack.c.b16 %v3406, %v3398
    %v4247 = vpack.c.b16 %v3407, %v3399
    %v4248 = vpack.c.b16 %v3408, %v3400
    %v4249 = vpack.c.b16 %v3409, %v3401
    %v4250 = vpack.c.b16 %v3410, %v3402
    %v4251 = vpack.c.b16 %v3419, %v3411
    %v4252 = vpack.c.b16 %v3420, %v3412
    %v4253 = vpack.c.b16 %v3421, %v3413
    %v4254 = vpack.c.b16 %v3422, %v3414
    %v4255 = vpack.c.b16 %v3423, %v3415
    %v4256 = vpack.c.b16 %v3424, %v3416
    %v4257 = vpack.c.b16 %v3425, %v3417
    %v4258 = vpack.c.b16 %v3426, %v3418
    %v5092 = vlaneseq
    %v5093 = vshrl.u32 %v5092, 7
    %v5094 = vsub.s32 0, %v5093
    %v5095 = vrot.slane %v930, %v5094
    %v5096 = vlaneseq
    %v5097 = vshrl.u32 %v5096, 7
    %v5098 = vsub.s32 1, %v5097
    %v5099 = vrot.slane %v930, %v5098
    %v5100 = vlaneseq
    %v5101 = vshrl.u32 %v5100, 7
    %v5102 = vsub.s32 2, %v5101
    %v5103 = vrot.slane %v930, %v5102
    %v5104 = vlaneseq
    %v5105 = vshrl.u32 %v5104, 7
    %v5106 = vsub.s32 3, %v5105
    %v5107 = vrot.slane %v930, %v5106
    %v5108 = vlaneseq
    %v5109 = vshrl.u32 %v5108, 7
    %v5110 = vsub.s32 4, %v5109
    %v5111 = vrot.slane %v930, %v5110
    %v5112 = vlaneseq
    %v5113 = vshrl.u32 %v5112, 7
    %v5114 = vsub.s32 5, %v5113
    %v5115 = vrot.slane %v930, %v5114
    %v5116 = vlaneseq
    %v5117 = vshrl.u32 %v5116, 7
    %v5118 = vsub.s32 6, %v5117
    %v5119 = vrot.slane %v930, %v5118
    %v5120 = vlaneseq
    %v5121 = vshrl.u32 %v5120, 7
    %v5122 = vsub.s32 7, %v5121
    %v5123 = vrot.slane %v930, %v5122
    %5132 = vmatprep.subr.bf16.mxu0 %v3428
    %5133 = vmatpush1.bf16.msra.mxu0 %v3427
    %5134 = vmatprep.subr.bf16.mxu0 %v3436
    %5135 = vmatpush1.bf16.msra.mxu0 %v3435
    %5136 = vmatprep.subr.bf16.mxu0 %v3444
    %5137 = vmatpush1.bf16.msra.mxu0 %v3443
    %5138 = vmatprep.subr.bf16.mxu0 %v3452
    %5139 = vmatpush1.bf16.msra.mxu0 %v3451
    %5140 = vmatprep.subr.bf16.mxu0 %v3460
    %5141 = vmatpush1.bf16.msra.mxu0 %v3459
    %5142 = vmatprep.subr.bf16.mxu0 %v3468
    %5143 = vmatpush1.bf16.msra.mxu0 %v3467
    %5144 = vmatprep.subr.bf16.mxu0 %v3476
    %5145 = vmatpush1.bf16.msra.mxu0 %v3475
    %5146 = vmatprep.subr.bf16.mxu0 %v3484
    %5147 = vmatpush1.bf16.msra.mxu0 %v3483
    %5148 = vmatprep.subr.bf16.mxu0 %v3492
    %5149 = vmatpush1.bf16.msra.mxu0 %v3491
    %5150 = vmatprep.subr.bf16.mxu0 %v3500
    %5151 = vmatpush1.bf16.msra.mxu0 %v3499
    %5152 = vmatprep.subr.bf16.mxu0 %v3508
    %5153 = vmatpush1.bf16.msra.mxu0 %v3507
    %5154 = vmatprep.subr.bf16.mxu0 %v3516
    %5155 = vmatpush1.bf16.msra.mxu0 %v3515
    %5156 = vmatprep.subr.bf16.mxu0 %v3524
    %5157 = vmatpush1.bf16.msra.mxu0 %v3523
    %5158 = vmatprep.subr.bf16.mxu0 %v3532
    %5159 = vmatpush1.bf16.msra.mxu0 %v3531
    %5160 = vmatprep.subr.bf16.mxu0 %v3540
    %5161 = vmatpush1.bf16.msra.mxu0 %v3539
    %5162 = vmatprep.subr.bf16.mxu0 %v3548
    %5163 = vmatpush1.bf16.msra.mxu0 %v3547
    %5164 = vmatprep.mubr.bf16.mxu0 %v86
    %5165 = vmatmul.mubr.bf16.gmra.mrb[0].mxu0 %v85
    %v5166 = vpop.f32.mrb[0].mxu0
    %v5167 = vadd.f32 %v5095, %v5166
    %v5168 = vpop.f32.mrb[0].mxu0
    %v5169 = vadd.f32 %v5099, %v5168
    %v5170 = vpop.f32.mrb[0].mxu0
    %v5171 = vpop.f32.mrb[0].mxu0
    %5172 = vdwg.mxu0
    %5173 = vmatprep.subr.bf16.mxu0 %v3556
    %5174 = vmatpush1.bf16.msra.mxu0 %v3555
    %5175 = vmatprep.subr.bf16.mxu0 %v3564
    %5176 = vmatpush1.bf16.msra.mxu0 %v3563
    %5177 = vmatprep.subr.bf16.mxu0 %v3572
    %5178 = vmatpush1.bf16.msra.mxu0 %v3571
    %5179 = vmatprep.subr.bf16.mxu0 %v3580
    %5180 = vmatpush1.bf16.msra.mxu0 %v3579
    %5181 = vmatprep.subr.bf16.mxu0 %v3588
    %5182 = vmatpush1.bf16.msra.mxu0 %v3587
    %5183 = vmatprep.subr.bf16.mxu0 %v3596
    %5184 = vmatpush1.bf16.msra.mxu0 %v3595
    %5185 = vmatprep.subr.bf16.mxu0 %v3604
    %5186 = vmatpush1.bf16.msra.mxu0 %v3603
    %5187 = vmatprep.subr.bf16.mxu0 %v3612
    %5188 = vmatpush1.bf16.msra.mxu0 %v3611
    %5189 = vmatprep.subr.bf16.mxu0 %v3620
    %5190 = vmatpush1.bf16.msra.mxu0 %v3619
    %5191 = vmatprep.subr.bf16.mxu0 %v3628
    %5192 = vmatpush1.bf16.msra.mxu0 %v3627
    %5193 = vmatprep.subr.bf16.mxu0 %v3636
    %5194 = vmatpush1.bf16.msra.mxu0 %v3635
    %5195 = vmatprep.subr.bf16.mxu0 %v3644
    %5196 = vmatpush1.bf16.msra.mxu0 %v3643
    %5197 = vmatprep.subr.bf16.mxu0 %v3652
    %5198 = vmatpush1.bf16.msra.mxu0 %v3651
    %5199 = vmatprep.subr.bf16.mxu0 %v3660
    %5200 = vmatpush1.bf16.msra.mxu0 %v3659
    %5201 = vmatprep.subr.bf16.mxu0 %v3668
    %5202 = vmatpush1.bf16.msra.mxu0 %v3667
    %5203 = vmatprep.subr.bf16.mxu0 %v3676
    %5204 = vmatpush1.bf16.msra.mxu0 %v3675
    %5205 = vmatprep.mubr.bf16.mxu0 %v88
    %5206 = vmatmul.mubr.bf16.gmra.mrb[0].mxu0 %v87
    %v5207 = vpop.f32.mrb[0].mxu0
    %v5208 = vadd.f32 %v5167, %v5207
    %v5209 = vpop.f32.mrb[0].mxu0
    %v5210 = vadd.f32 %v5169, %v5209
    %v5211 = vpop.f32.mrb[0].mxu0
    %v5212 = vpop.f32.mrb[0].mxu0
    %5213 = vdwg.mxu0
    %5214 = vmatprep.subr.bf16.mxu0 %v3684
    %5215 = vmatpush1.bf16.msra.mxu0 %v3683
    %5216 = vmatprep.subr.bf16.mxu0 %v3692
    %5217 = vmatpush1.bf16.msra.mxu0 %v3691
    %5218 = vmatprep.subr.bf16.mxu0 %v3700
    %5219 = vmatpush1.bf16.msra.mxu0 %v3699
    %5220 = vmatprep.subr.bf16.mxu0 %v3708
    %5221 = vmatpush1.bf16.msra.mxu0 %v3707
    %5222 = vmatprep.subr.bf16.mxu0 %v3716
    %5223 = vmatpush1.bf16.msra.mxu0 %v3715
    %5224 = vmatprep.subr.bf16.mxu0 %v3724
    %5225 = vmatpush1.bf16.msra.mxu0 %v3723
    %5226 = vmatprep.subr.bf16.mxu0 %v3732
    %5227 = vmatpush1.bf16.msra.mxu0 %v3731
    %5228 = vmatprep.subr.bf16.mxu0 %v3740
    %5229 = vmatpush1.bf16.msra.mxu0 %v3739
    %5230 = vmatprep.subr.bf16.mxu0 %v3748
    %5231 = vmatpush1.bf16.msra.mxu0 %v3747
    %5232 = vmatprep.subr.bf16.mxu0 %v3756
    %5233 = vmatpush1.bf16.msra.mxu0 %v3755
    %5234 = vmatprep.subr.bf16.mxu0 %v3764
    %5235 = vmatpush1.bf16.msra.mxu0 %v3763
    %5236 = vmatprep.subr.bf16.mxu0 %v3772
    %5237 = vmatpush1.bf16.msra.mxu0 %v3771
    %5238 = vmatprep.subr.bf16.mxu0 %v3780
    %5239 = vmatpush1.bf16.msra.mxu0 %v3779
    %5240 = vmatprep.subr.bf16.mxu0 %v3788
    %5241 = vmatpush1.bf16.msra.mxu0 %v3787
    %5242 = vmatprep.subr.bf16.mxu0 %v3796
    %5243 = vmatpush1.bf16.msra.mxu0 %v3795
    %5244 = vmatprep.subr.bf16.mxu0 %v3804
    %5245 = vmatpush1.bf16.msra.mxu0 %v3803
    %5246 = vmatprep.mubr.bf16.mxu0 %v90
    %5247 = vmatmul.mubr.bf16.gmra.mrb[0].mxu0 %v89
    %v5248 = vpop.f32.mrb[0].mxu0
    %v5249 = vadd.f32 %v5208, %v5248
    %v5250 = vpop.f32.mrb[0].mxu0
    %v5251 = vadd.f32 %v5210, %v5250
    %v5252 = vpop.f32.mrb[0].mxu0
    %v5253 = vpop.f32.mrb[0].mxu0
    %5254 = vdwg.mxu0
    %5255 = vmatprep.subr.bf16.mxu0 %v3812
    %5256 = vmatpush1.bf16.msra.mxu0 %v3811
    %5257 = vmatprep.subr.bf16.mxu0 %v3820
    %5258 = vmatpush1.bf16.msra.mxu0 %v3819
    %5259 = vmatprep.subr.bf16.mxu0 %v3828
    %5260 = vmatpush1.bf16.msra.mxu0 %v3827
    %5261 = vmatprep.subr.bf16.mxu0 %v3836
    %5262 = vmatpush1.bf16.msra.mxu0 %v3835
    %5263 = vmatprep.subr.bf16.mxu0 %v3844
    %5264 = vmatpush1.bf16.msra.mxu0 %v3843
    %5265 = vmatprep.subr.bf16.mxu0 %v3852
    %5266 = vmatpush1.bf16.msra.mxu0 %v3851
    %5267 = vmatprep.subr.bf16.mxu0 %v3860
    %5268 = vmatpush1.bf16.msra.mxu0 %v3859
    %5269 = vmatprep.subr.bf16.mxu0 %v3868
    %5270 = vmatpush1.bf16.msra.mxu0 %v3867
    %5271 = vmatprep.subr.bf16.mxu0 %v3876
    %5272 = vmatpush1.bf16.msra.mxu0 %v3875
    %5273 = vmatprep.subr.bf16.mxu0 %v3884
    %5274 = vmatpush1.bf16.msra.mxu0 %v3883
    %5275 = vmatprep.subr.bf16.mxu0 %v3892
    %5276 = vmatpush1.bf16.msra.mxu0 %v3891
    %5277 = vmatprep.subr.bf16.mxu0 %v3900
    %5278 = vmatpush1.bf16.msra.mxu0 %v3899
    %5279 = vmatprep.subr.bf16.mxu0 %v3908
    %5280 = vmatpush1.bf16.msra.mxu0 %v3907
    %5281 = vmatprep.subr.bf16.mxu0 %v3916
    %5282 = vmatpush1.bf16.msra.mxu0 %v3915
    %5283 = vmatprep.subr.bf16.mxu0 %v3924
    %5284 = vmatpush1.bf16.msra.mxu0 %v3923
    %5285 = vmatprep.subr.bf16.mxu0 %v3932
    %5286 = vmatpush1.bf16.msra.mxu0 %v3931
    %5287 = vmatprep.mubr.bf16.mxu0 %v92
    %5288 = vmatmul.mubr.bf16.gmra.mrb[0].mxu0 %v91
    %v5289 = vpop.f32.mrb[0].mxu0
    %v5290 = vadd.f32 %v5249, %v5289
    %v5291 = vpop.f32.mrb[0].mxu0
    %v5292 = vadd.f32 %v5251, %v5291
    %v5293 = vpop.f32.mrb[0].mxu0
    %v5294 = vpop.f32.mrb[0].mxu0
    %5295 = vdwg.mxu0
    %5296 = vmatprep.subr.bf16.mxu0 %v3940
    %5297 = vmatpush1.bf16.msra.mxu0 %v3939
    %5298 = vmatprep.subr.bf16.mxu0 %v3948
    %5299 = vmatpush1.bf16.msra.mxu0 %v3947
    %5300 = vmatprep.subr.bf16.mxu0 %v3956
    %5301 = vmatpush1.bf16.msra.mxu0 %v3955
    %5302 = vmatprep.subr.bf16.mxu0 %v3964
    %5303 = vmatpush1.bf16.msra.mxu0 %v3963
    %5304 = vmatprep.subr.bf16.mxu0 %v3972
    %5305 = vmatpush1.bf16.msra.mxu0 %v3971
    %5306 = vmatprep.subr.bf16.mxu0 %v3980
    %5307 = vmatpush1.bf16.msra.mxu0 %v3979
    %5308 = vmatprep.subr.bf16.mxu0 %v3988
    %5309 = vmatpush1.bf16.msra.mxu0 %v3987
    %5310 = vmatprep.subr.bf16.mxu0 %v3996
    %5311 = vmatpush1.bf16.msra.mxu0 %v3995
    %5312 = vmatprep.subr.bf16.mxu0 %v4004
    %5313 = vmatpush1.bf16.msra.mxu0 %v4003
    %5314 = vmatprep.subr.bf16.mxu0 %v4012
    %5315 = vmatpush1.bf16.msra.mxu0 %v4011
    %5316 = vmatprep.subr.bf16.mxu0 %v4020
    %5317 = vmatpush1.bf16.msra.mxu0 %v4019
    %5318 = vmatprep.subr.bf16.mxu0 %v4028
    %5319 = vmatpush1.bf16.msra.mxu0 %v4027
    %5320 = vmatprep.subr.bf16.mxu0 %v4036
    %5321 = vmatpush1.bf16.msra.mxu0 %v4035
    %5322 = vmatprep.subr.bf16.mxu0 %v4044
    %5323 = vmatpush1.bf16.msra.mxu0 %v4043
    %5324 = vmatprep.subr.bf16.mxu0 %v4052
    %5325 = vmatpush1.bf16.msra.mxu0 %v4051
    %5326 = vmatprep.subr.bf16.mxu0 %v4060
    %5327 = vmatpush1.bf16.msra.mxu0 %v4059
    %5328 = vmatprep.mubr.bf16.mxu0 %v94
    %5329 = vmatmul.mubr.bf16.gmra.mrb[0].mxu0 %v93
    %v5330 = vpop.f32.mrb[0].mxu0
    %v5331 = vadd.f32 %v5290, %v5330
    %v5332 = vpop.f32.mrb[0].mxu0
    %v5333 = vadd.f32 %v5292, %v5332
    %v5334 = vpop.f32.mrb[0].mxu0
    %v5335 = vpop.f32.mrb[0].mxu0
    %5336 = vdwg.mxu0
    %5337 = vmatprep.subr.bf16.mxu0 %v4068
    %5338 = vmatpush1.bf16.msra.mxu0 %v4067
    %5339 = vmatprep.subr.bf16.mxu0 %v4076
    %5340 = vmatpush1.bf16.msra.mxu0 %v4075
    %5341 = vmatprep.subr.bf16.mxu0 %v4084
    %5342 = vmatpush1.bf16.msra.mxu0 %v4083
    %5343 = vmatprep.subr.bf16.mxu0 %v4092
    %5344 = vmatpush1.bf16.msra.mxu0 %v4091
    %5345 = vmatprep.subr.bf16.mxu0 %v4100
    %5346 = vmatpush1.bf16.msra.mxu0 %v4099
    %5347 = vmatprep.subr.bf16.mxu0 %v4108
    %5348 = vmatpush1.bf16.msra.mxu0 %v4107
    %5349 = vmatprep.subr.bf16.mxu0 %v4116
    %5350 = vmatpush1.bf16.msra.mxu0 %v4115
    %5351 = vmatprep.subr.bf16.mxu0 %v4124
    %5352 = vmatpush1.bf16.msra.mxu0 %v4123
    %5353 = vmatprep.subr.bf16.mxu0 %v4132
    %5354 = vmatpush1.bf16.msra.mxu0 %v4131
    %5355 = vmatprep.subr.bf16.mxu0 %v4140
    %5356 = vmatpush1.bf16.msra.mxu0 %v4139
    %5357 = vmatprep.subr.bf16.mxu0 %v4148
    %5358 = vmatpush1.bf16.msra.mxu0 %v4147
    %5359 = vmatprep.subr.bf16.mxu0 %v4156
    %5360 = vmatpush1.bf16.msra.mxu0 %v4155
    %5361 = vmatprep.subr.bf16.mxu0 %v4164
    %5362 = vmatpush1.bf16.msra.mxu0 %v4163
    %5363 = vmatprep.subr.bf16.mxu0 %v4172
    %5364 = vmatpush1.bf16.msra.mxu0 %v4171
    %5365 = vmatprep.subr.bf16.mxu0 %v4180
    %5366 = vmatpush1.bf16.msra.mxu0 %v4179
    %5367 = vmatprep.subr.bf16.mxu0 %v4188
    %5368 = vmatpush1.bf16.msra.mxu0 %v4187
    %5369 = vmatprep.mubr.bf16.mxu0 %v96
    %5370 = vmatmul.mubr.bf16.gmra.mrb[0].mxu0 %v95
    %v5371 = vpop.f32.mrb[0].mxu0
    %v5372 = vadd.f32 %v5331, %v5371
    %v5373 = vpop.f32.mrb[0].mxu0
    %v5374 = vadd.f32 %v5333, %v5373
    %v5375 = vpop.f32.mrb[0].mxu0
    %v5376 = vpop.f32.mrb[0].mxu0
    %5377 = vdwg.mxu0
    %5378 = vmatprep.subr.bf16.mxu0 %v4196
    %5379 = vmatpush1.bf16.msra.mxu0 %v4195
    %5380 = vmatprep.subr.bf16.mxu0 %v4204
    %5381 = vmatpush1.bf16.msra.mxu0 %v4203
    %5382 = vmatprep.subr.bf16.mxu0 %v4212
    %5383 = vmatpush1.bf16.msra.mxu0 %v4211
    %5384 = vmatprep.subr.bf16.mxu0 %v4220
    %5385 = vmatpush1.bf16.msra.mxu0 %v4219
    %5386 = vmatprep.subr.bf16.mxu0 %v4228
    %5387 = vmatpush1.bf16.msra.mxu0 %v4227
    %5388 = vmatprep.subr.bf16.mxu0 %v4236
    %5389 = vmatpush1.bf16.msra.mxu0 %v4235
    %5390 = vmatprep.subr.bf16.mxu0 %v4244
    %5391 = vmatpush1.bf16.msra.mxu0 %v4243
    %5392 = vmatprep.subr.bf16.mxu0 %v4252
    %5393 = vmatpush1.bf16.msra.mxu0 %v4251
    %5394 = vmatprep.subr.bf16.mxu0 0
    %5395 = vmatpush1.bf16.msra.mxu0 0
    %5396 = vmatprep.subr.bf16.mxu0 0
    %5397 = vmatpush1.bf16.msra.mxu0 0
    %5398 = vmatprep.subr.bf16.mxu0 0
    %5399 = vmatpush1.bf16.msra.mxu0 0
    %5400 = vmatprep.subr.bf16.mxu0 0
    %5401 = vmatpush1.bf16.msra.mxu0 0
    %5402 = vmatprep.subr.bf16.mxu0 0
    %5403 = vmatpush1.bf16.msra.mxu0 0
    %5404 = vmatprep.subr.bf16.mxu0 0
    %5405 = vmatpush1.bf16.msra.mxu0 0
    %5406 = vmatprep.subr.bf16.mxu0 0
    %5407 = vmatpush1.bf16.msra.mxu0 0
    %5408 = vmatprep.subr.bf16.mxu0 0
    %5409 = vmatpush1.bf16.msra.mxu0 0
    %5410 = vmatprep.mubr.bf16.mxu0 0
    %5411 = vmatmul.mubr.bf16.gmra.mrb[0].mxu0 %v97
    %v5412 = vpop.f32.mrb[0].mxu0
    %v5413 = vadd.f32 %v5372, %v5412
    %v5414 = vpop.f32.mrb[0].mxu0
    %v5415 = vadd.f32 %v5374, %v5414
    %v5416 = vpop.f32.mrb[0].mxu0
    %v5417 = vpop.f32.mrb[0].mxu0
    %5418 = vdwg.mxu0
    %5419 = vmatprep.subr.bf16.mxu0 %v3430
    %5420 = vmatpush1.bf16.msra.mxu0 %v3429
    %5421 = vmatprep.subr.bf16.mxu0 %v3438
    %5422 = vmatpush1.bf16.msra.mxu0 %v3437
    %5423 = vmatprep.subr.bf16.mxu0 %v3446
    %5424 = vmatpush1.bf16.msra.mxu0 %v3445
    %5425 = vmatprep.subr.bf16.mxu0 %v3454
    %5426 = vmatpush1.bf16.msra.mxu0 %v3453
    %5427 = vmatprep.subr.bf16.mxu0 %v3462
    %5428 = vmatpush1.bf16.msra.mxu0 %v3461
    %5429 = vmatprep.subr.bf16.mxu0 %v3470
    %5430 = vmatpush1.bf16.msra.mxu0 %v3469
    %5431 = vmatprep.subr.bf16.mxu0 %v3478
    %5432 = vmatpush1.bf16.msra.mxu0 %v3477
    %5433 = vmatprep.subr.bf16.mxu0 %v3486
    %5434 = vmatpush1.bf16.msra.mxu0 %v3485
    %5435 = vmatprep.subr.bf16.mxu0 %v3494
    %5436 = vmatpush1.bf16.msra.mxu0 %v3493
    %5437 = vmatprep.subr.bf16.mxu0 %v3502
    %5438 = vmatpush1.bf16.msra.mxu0 %v3501
    %5439 = vmatprep.subr.bf16.mxu0 %v3510
    %5440 = vmatpush1.bf16.msra.mxu0 %v3509
    %5441 = vmatprep.subr.bf16.mxu0 %v3518
    %5442 = vmatpush1.bf16.msra.mxu0 %v3517
    %5443 = vmatprep.subr.bf16.mxu0 %v3526
    %5444 = vmatpush1.bf16.msra.mxu0 %v3525
    %5445 = vmatprep.subr.bf16.mxu0 %v3534
    %5446 = vmatpush1.bf16.msra.mxu0 %v3533
    %5447 = vmatprep.subr.bf16.mxu0 %v3542
    %5448 = vmatpush1.bf16.msra.mxu0 %v3541
    %5449 = vmatprep.subr.bf16.mxu0 %v3550
    %5450 = vmatpush1.bf16.msra.mxu0 %v3549
    %5451 = vmatprep.mubr.bf16.mxu0 %v86
    %5452 = vmatmul.mubr.bf16.gmra.mrb[0].mxu0 %v85
    %v5453 = vpop.f32.mrb[0].mxu0
    %v5454 = vadd.f32 %v5103, %v5453
    %v5455 = vpop.f32.mrb[0].mxu0
    %v5456 = vadd.f32 %v5107, %v5455
    %v5457 = vpop.f32.mrb[0].mxu0
    %v5458 = vpop.f32.mrb[0].mxu0
    %5459 = vdwg.mxu0
    %5460 = vmatprep.subr.bf16.mxu0 %v3558
    %5461 = vmatpush1.bf16.msra.mxu0 %v3557
    %5462 = vmatprep.subr.bf16.mxu0 %v3566
    %5463 = vmatpush1.bf16.msra.mxu0 %v3565
    %5464 = vmatprep.subr.bf16.mxu0 %v3574
    %5465 = vmatpush1.bf16.msra.mxu0 %v3573
    %5466 = vmatprep.subr.bf16.mxu0 %v3582
    %5467 = vmatpush1.bf16.msra.mxu0 %v3581
    %5468 = vmatprep.subr.bf16.mxu0 %v3590
    %5469 = vmatpush1.bf16.msra.mxu0 %v3589
    %5470 = vmatprep.subr.bf16.mxu0 %v3598
    %5471 = vmatpush1.bf16.msra.mxu0 %v3597
    %5472 = vmatprep.subr.bf16.mxu0 %v3606
    %5473 = vmatpush1.bf16.msra.mxu0 %v3605
    %5474 = vmatprep.subr.bf16.mxu0 %v3614
    %5475 = vmatpush1.bf16.msra.mxu0 %v3613
    %5476 = vmatprep.subr.bf16.mxu0 %v3622
    %5477 = vmatpush1.bf16.msra.mxu0 %v3621
    %5478 = vmatprep.subr.bf16.mxu0 %v3630
    %5479 = vmatpush1.bf16.msra.mxu0 %v3629
    %5480 = vmatprep.subr.bf16.mxu0 %v3638
    %5481 = vmatpush1.bf16.msra.mxu0 %v3637
    %5482 = vmatprep.subr.bf16.mxu0 %v3646
    %5483 = vmatpush1.bf16.msra.mxu0 %v3645
    %5484 = vmatprep.subr.bf16.mxu0 %v3654
    %5485 = vmatpush1.bf16.msra.mxu0 %v3653
    %5486 = vmatprep.subr.bf16.mxu0 %v3662
    %5487 = vmatpush1.bf16.msra.mxu0 %v3661
    %5488 = vmatprep.subr.bf16.mxu0 %v3670
    %5489 = vmatpush1.bf16.msra.mxu0 %v3669
    %5490 = vmatprep.subr.bf16.mxu0 %v3678
    %5491 = vmatpush1.bf16.msra.mxu0 %v3677
    %5492 = vmatprep.mubr.bf16.mxu0 %v88
    %5493 = vmatmul.mubr.bf16.gmra.mrb[0].mxu0 %v87
    %v5494 = vpop.f32.mrb[0].mxu0
    %v5495 = vadd.f32 %v5454, %v5494
    %v5496 = vpop.f32.mrb[0].mxu0
    %v5497 = vadd.f32 %v5456, %v5496
    %v5498 = vpop.f32.mrb[0].mxu0
    %v5499 = vpop.f32.mrb[0].mxu0
    %5500 = vdwg.mxu0
    %5501 = vmatprep.subr.bf16.mxu0 %v3686
    %5502 = vmatpush1.bf16.msra.mxu0 %v3685
    %5503 = vmatprep.subr.bf16.mxu0 %v3694
    %5504 = vmatpush1.bf16.msra.mxu0 %v3693
    %5505 = vmatprep.subr.bf16.mxu0 %v3702
    %5506 = vmatpush1.bf16.msra.mxu0 %v3701
    %5507 = vmatprep.subr.bf16.mxu0 %v3710
    %5508 = vmatpush1.bf16.msra.mxu0 %v3709
    %5509 = vmatprep.subr.bf16.mxu0 %v3718
    %5510 = vmatpush1.bf16.msra.mxu0 %v3717
    %5511 = vmatprep.subr.bf16.mxu0 %v3726
    %5512 = vmatpush1.bf16.msra.mxu0 %v3725
    %5513 = vmatprep.subr.bf16.mxu0 %v3734
    %5514 = vmatpush1.bf16.msra.mxu0 %v3733
    %5515 = vmatprep.subr.bf16.mxu0 %v3742
    %5516 = vmatpush1.bf16.msra.mxu0 %v3741
    %5517 = vmatprep.subr.bf16.mxu0 %v3750
    %5518 = vmatpush1.bf16.msra.mxu0 %v3749
    %5519 = vmatprep.subr.bf16.mxu0 %v3758
    %5520 = vmatpush1.bf16.msra.mxu0 %v3757
    %5521 = vmatprep.subr.bf16.mxu0 %v3766
    %5522 = vmatpush1.bf16.msra.mxu0 %v3765
    %5523 = vmatprep.subr.bf16.mxu0 %v3774
    %5524 = vmatpush1.bf16.msra.mxu0 %v3773
    %5525 = vmatprep.subr.bf16.mxu0 %v3782
    %5526 = vmatpush1.bf16.msra.mxu0 %v3781
    %5527 = vmatprep.subr.bf16.mxu0 %v3790
    %5528 = vmatpush1.bf16.msra.mxu0 %v3789
    %5529 = vmatprep.subr.bf16.mxu0 %v3798
    %5530 = vmatpush1.bf16.msra.mxu0 %v3797
    %5531 = vmatprep.subr.bf16.mxu0 %v3806
    %5532 = vmatpush1.bf16.msra.mxu0 %v3805
    %5533 = vmatprep.mubr.bf16.mxu0 %v90
    %5534 = vmatmul.mubr.bf16.gmra.mrb[0].mxu0 %v89
    %v5535 = vpop.f32.mrb[0].mxu0
    %v5536 = vadd.f32 %v5495, %v5535
    %v5537 = vpop.f32.mrb[0].mxu0
    %v5538 = vadd.f32 %v5497, %v5537
    %v5539 = vpop.f32.mrb[0].mxu0
    %v5540 = vpop.f32.mrb[0].mxu0
    %5541 = vdwg.mxu0
    %5542 = vmatprep.subr.bf16.mxu0 %v3814
    %5543 = vmatpush1.bf16.msra.mxu0 %v3813
    %5544 = vmatprep.subr.bf16.mxu0 %v3822
    %5545 = vmatpush1.bf16.msra.mxu0 %v3821
    %5546 = vmatprep.subr.bf16.mxu0 %v3830
    %5547 = vmatpush1.bf16.msra.mxu0 %v3829
    %5548 = vmatprep.subr.bf16.mxu0 %v3838
    %5549 = vmatpush1.bf16.msra.mxu0 %v3837
    %5550 = vmatprep.subr.bf16.mxu0 %v3846
    %5551 = vmatpush1.bf16.msra.mxu0 %v3845
    %5552 = vmatprep.subr.bf16.mxu0 %v3854
    %5553 = vmatpush1.bf16.msra.mxu0 %v3853
    %5554 = vmatprep.subr.bf16.mxu0 %v3862
    %5555 = vmatpush1.bf16.msra.mxu0 %v3861
    %5556 = vmatprep.subr.bf16.mxu0 %v3870
    %5557 = vmatpush1.bf16.msra.mxu0 %v3869
    %5558 = vmatprep.subr.bf16.mxu0 %v3878
    %5559 = vmatpush1.bf16.msra.mxu0 %v3877
    %5560 = vmatprep.subr.bf16.mxu0 %v3886
    %5561 = vmatpush1.bf16.msra.mxu0 %v3885
    %5562 = vmatprep.subr.bf16.mxu0 %v3894
    %5563 = vmatpush1.bf16.msra.mxu0 %v3893
    %5564 = vmatprep.subr.bf16.mxu0 %v3902
    %5565 = vmatpush1.bf16.msra.mxu0 %v3901
    %5566 = vmatprep.subr.bf16.mxu0 %v3910
    %5567 = vmatpush1.bf16.msra.mxu0 %v3909
    %5568 = vmatprep.subr.bf16.mxu0 %v3918
    %5569 = vmatpush1.bf16.msra.mxu0 %v3917
    %5570 = vmatprep.subr.bf16.mxu0 %v3926
    %5571 = vmatpush1.bf16.msra.mxu0 %v3925
    %5572 = vmatprep.subr.bf16.mxu0 %v3934
    %5573 = vmatpush1.bf16.msra.mxu0 %v3933
    %5574 = vmatprep.mubr.bf16.mxu0 %v92
    %5575 = vmatmul.mubr.bf16.gmra.mrb[0].mxu0 %v91
    %v5576 = vpop.f32.mrb[0].mxu0
    %v5577 = vadd.f32 %v5536, %v5576
    %v5578 = vpop.f32.mrb[0].mxu0
    %v5579 = vadd.f32 %v5538, %v5578
    %v5580 = vpop.f32.mrb[0].mxu0
    %v5581 = vpop.f32.mrb[0].mxu0
    %5582 = vdwg.mxu0
    %5583 = vmatprep.subr.bf16.mxu0 %v3942
    %5584 = vmatpush1.bf16.msra.mxu0 %v3941
    %5585 = vmatprep.subr.bf16.mxu0 %v3950
    %5586 = vmatpush1.bf16.msra.mxu0 %v3949
    %5587 = vmatprep.subr.bf16.mxu0 %v3958
    %5588 = vmatpush1.bf16.msra.mxu0 %v3957
    %5589 = vmatprep.subr.bf16.mxu0 %v3966
    %5590 = vmatpush1.bf16.msra.mxu0 %v3965
    %5591 = vmatprep.subr.bf16.mxu0 %v3974
    %5592 = vmatpush1.bf16.msra.mxu0 %v3973
    %5593 = vmatprep.subr.bf16.mxu0 %v3982
    %5594 = vmatpush1.bf16.msra.mxu0 %v3981
    %5595 = vmatprep.subr.bf16.mxu0 %v3990
    %5596 = vmatpush1.bf16.msra.mxu0 %v3989
    %5597 = vmatprep.subr.bf16.mxu0 %v3998
    %5598 = vmatpush1.bf16.msra.mxu0 %v3997
    %5599 = vmatprep.subr.bf16.mxu0 %v4006
    %5600 = vmatpush1.bf16.msra.mxu0 %v4005
    %5601 = vmatprep.subr.bf16.mxu0 %v4014
    %5602 = vmatpush1.bf16.msra.mxu0 %v4013
    %5603 = vmatprep.subr.bf16.mxu0 %v4022
    %5604 = vmatpush1.bf16.msra.mxu0 %v4021
    %5605 = vmatprep.subr.bf16.mxu0 %v4030
    %5606 = vmatpush1.bf16.msra.mxu0 %v4029
    %5607 = vmatprep.subr.bf16.mxu0 %v4038
    %5608 = vmatpush1.bf16.msra.mxu0 %v4037
    %5609 = vmatprep.subr.bf16.mxu0 %v4046
    %5610 = vmatpush1.bf16.msra.mxu0 %v4045
    %5611 = vmatprep.subr.bf16.mxu0 %v4054
    %5612 = vmatpush1.bf16.msra.mxu0 %v4053
    %5613 = vmatprep.subr.bf16.mxu0 %v4062
    %5614 = vmatpush1.bf16.msra.mxu0 %v4061
    %5615 = vmatprep.mubr.bf16.mxu0 %v94
    %5616 = vmatmul.mubr.bf16.gmra.mrb[0].mxu0 %v93
    %v5617 = vpop.f32.mrb[0].mxu0
    %v5618 = vadd.f32 %v5577, %v5617
    %v5619 = vpop.f32.mrb[0].mxu0
    %v5620 = vadd.f32 %v5579, %v5619
    %v5621 = vpop.f32.mrb[0].mxu0
    %v5622 = vpop.f32.mrb[0].mxu0
    %5623 = vdwg.mxu0
    %5624 = vmatprep.subr.bf16.mxu0 %v4070
    %5625 = vmatpush1.bf16.msra.mxu0 %v4069
    %5626 = vmatprep.subr.bf16.mxu0 %v4078
    %5627 = vmatpush1.bf16.msra.mxu0 %v4077
    %5628 = vmatprep.subr.bf16.mxu0 %v4086
    %5629 = vmatpush1.bf16.msra.mxu0 %v4085
    %5630 = vmatprep.subr.bf16.mxu0 %v4094
    %5631 = vmatpush1.bf16.msra.mxu0 %v4093
    %5632 = vmatprep.subr.bf16.mxu0 %v4102
    %5633 = vmatpush1.bf16.msra.mxu0 %v4101
    %5634 = vmatprep.subr.bf16.mxu0 %v4110
    %5635 = vmatpush1.bf16.msra.mxu0 %v4109
    %5636 = vmatprep.subr.bf16.mxu0 %v4118
    %5637 = vmatpush1.bf16.msra.mxu0 %v4117
    %5638 = vmatprep.subr.bf16.mxu0 %v4126
    %5639 = vmatpush1.bf16.msra.mxu0 %v4125
    %5640 = vmatprep.subr.bf16.mxu0 %v4134
    %5641 = vmatpush1.bf16.msra.mxu0 %v4133
    %5642 = vmatprep.subr.bf16.mxu0 %v4142
    %5643 = vmatpush1.bf16.msra.mxu0 %v4141
    %5644 = vmatprep.subr.bf16.mxu0 %v4150
    %5645 = vmatpush1.bf16.msra.mxu0 %v4149
    %5646 = vmatprep.subr.bf16.mxu0 %v4158
    %5647 = vmatpush1.bf16.msra.mxu0 %v4157
    %5648 = vmatprep.subr.bf16.mxu0 %v4166
    %5649 = vmatpush1.bf16.msra.mxu0 %v4165
    %5650 = vmatprep.subr.bf16.mxu0 %v4174
    %5651 = vmatpush1.bf16.msra.mxu0 %v4173
    %5652 = vmatprep.subr.bf16.mxu0 %v4182
    %5653 = vmatpush1.bf16.msra.mxu0 %v4181
    %5654 = vmatprep.subr.bf16.mxu0 %v4190
    %5655 = vmatpush1.bf16.msra.mxu0 %v4189
    %5656 = vmatprep.mubr.bf16.mxu0 %v96
    %5657 = vmatmul.mubr.bf16.gmra.mrb[0].mxu0 %v95
    %v5658 = vpop.f32.mrb[0].mxu0
    %v5659 = vadd.f32 %v5618, %v5658
    %v5660 = vpop.f32.mrb[0].mxu0
    %v5661 = vadd.f32 %v5620, %v5660
    %v5662 = vpop.f32.mrb[0].mxu0
    %v5663 = vpop.f32.mrb[0].mxu0
    %5664 = vdwg.mxu0
    %5665 = vmatprep.subr.bf16.mxu0 %v4198
    %5666 = vmatpush1.bf16.msra.mxu0 %v4197
    %5667 = vmatprep.subr.bf16.mxu0 %v4206
    %5668 = vmatpush1.bf16.msra.mxu0 %v4205
    %5669 = vmatprep.subr.bf16.mxu0 %v4214
    %5670 = vmatpush1.bf16.msra.mxu0 %v4213
    %5671 = vmatprep.subr.bf16.mxu0 %v4222
    %5672 = vmatpush1.bf16.msra.mxu0 %v4221
    %5673 = vmatprep.subr.bf16.mxu0 %v4230
    %5674 = vmatpush1.bf16.msra.mxu0 %v4229
    %5675 = vmatprep.subr.bf16.mxu0 %v4238
    %5676 = vmatpush1.bf16.msra.mxu0 %v4237
    %5677 = vmatprep.subr.bf16.mxu0 %v4246
    %5678 = vmatpush1.bf16.msra.mxu0 %v4245
    %5679 = vmatprep.subr.bf16.mxu0 %v4254
    %5680 = vmatpush1.bf16.msra.mxu0 %v4253
    %5681 = vmatprep.subr.bf16.mxu0 0
    %5682 = vmatpush1.bf16.msra.mxu0 0
    %5683 = vmatprep.subr.bf16.mxu0 0
    %5684 = vmatpush1.bf16.msra.mxu0 0
    %5685 = vmatprep.subr.bf16.mxu0 0
    %5686 = vmatpush1.bf16.msra.mxu0 0
    %5687 = vmatprep.subr.bf16.mxu0 0
    %5688 = vmatpush1.bf16.msra.mxu0 0
    %5689 = vmatprep.subr.bf16.mxu0 0
    %5690 = vmatpush1.bf16.msra.mxu0 0
    %5691 = vmatprep.subr.bf16.mxu0 0
    %5692 = vmatpush1.bf16.msra.mxu0 0
    %5693 = vmatprep.subr.bf16.mxu0 0
    %5694 = vmatpush1.bf16.msra.mxu0 0
    %5695 = vmatprep.subr.bf16.mxu0 0
    %5696 = vmatpush1.bf16.msra.mxu0 0
    %5697 = vmatprep.mubr.bf16.mxu0 0
    %5698 = vmatmul.mubr.bf16.gmra.mrb[0].mxu0 %v97
    %v5699 = vpop.f32.mrb[0].mxu0
    %v5700 = vadd.f32 %v5659, %v5699
    %v5701 = vpop.f32.mrb[0].mxu0
    %v5702 = vadd.f32 %v5661, %v5701
    %v5703 = vpop.f32.mrb[0].mxu0
    %v5704 = vpop.f32.mrb[0].mxu0
    %5705 = vdwg.mxu0
    %5706 = vmatprep.subr.bf16.mxu0 %v3432
    %5707 = vmatpush1.bf16.msra.mxu0 %v3431
    %5708 = vmatprep.subr.bf16.mxu0 %v3440
    %5709 = vmatpush1.bf16.msra.mxu0 %v3439
    %5710 = vmatprep.subr.bf16.mxu0 %v3448
    %5711 = vmatpush1.bf16.msra.mxu0 %v3447
    %5712 = vmatprep.subr.bf16.mxu0 %v3456
    %5713 = vmatpush1.bf16.msra.mxu0 %v3455
    %5714 = vmatprep.subr.bf16.mxu0 %v3464
    %5715 = vmatpush1.bf16.msra.mxu0 %v3463
    %5716 = vmatprep.subr.bf16.mxu0 %v3472
    %5717 = vmatpush1.bf16.msra.mxu0 %v3471
    %5718 = vmatprep.subr.bf16.mxu0 %v3480
    %5719 = vmatpush1.bf16.msra.mxu0 %v3479
    %5720 = vmatprep.subr.bf16.mxu0 %v3488
    %5721 = vmatpush1.bf16.msra.mxu0 %v3487
    %5722 = vmatprep.subr.bf16.mxu0 %v3496
    %5723 = vmatpush1.bf16.msra.mxu0 %v3495
    %5724 = vmatprep.subr.bf16.mxu0 %v3504
    %5725 = vmatpush1.bf16.msra.mxu0 %v3503
    %5726 = vmatprep.subr.bf16.mxu0 %v3512
    %5727 = vmatpush1.bf16.msra.mxu0 %v3511
    %5728 = vmatprep.subr.bf16.mxu0 %v3520
    %5729 = vmatpush1.bf16.msra.mxu0 %v3519
    %5730 = vmatprep.subr.bf16.mxu0 %v3528
    %5731 = vmatpush1.bf16.msra.mxu0 %v3527
    %5732 = vmatprep.subr.bf16.mxu0 %v3536
    %5733 = vmatpush1.bf16.msra.mxu0 %v3535
    %5734 = vmatprep.subr.bf16.mxu0 %v3544
    %5735 = vmatpush1.bf16.msra.mxu0 %v3543
    %5736 = vmatprep.subr.bf16.mxu0 %v3552
    %5737 = vmatpush1.bf16.msra.mxu0 %v3551
    %5738 = vmatprep.mubr.bf16.mxu0 %v86
    %5739 = vmatmul.mubr.bf16.gmra.mrb[0].mxu0 %v85
    %v5740 = vpop.f32.mrb[0].mxu0
    %v5741 = vadd.f32 %v5111, %v5740
    %v5742 = vpop.f32.mrb[0].mxu0
    %v5743 = vadd.f32 %v5115, %v5742
    %v5744 = vpop.f32.mrb[0].mxu0
    %v5745 = vpop.f32.mrb[0].mxu0
    %5746 = vdwg.mxu0
    %5747 = vmatprep.subr.bf16.mxu0 %v3560
    %5748 = vmatpush1.bf16.msra.mxu0 %v3559
    %5749 = vmatprep.subr.bf16.mxu0 %v3568
    %5750 = vmatpush1.bf16.msra.mxu0 %v3567
    %5751 = vmatprep.subr.bf16.mxu0 %v3576
    %5752 = vmatpush1.bf16.msra.mxu0 %v3575
    %5753 = vmatprep.subr.bf16.mxu0 %v3584
    %5754 = vmatpush1.bf16.msra.mxu0 %v3583
    %5755 = vmatprep.subr.bf16.mxu0 %v3592
    %5756 = vmatpush1.bf16.msra.mxu0 %v3591
    %5757 = vmatprep.subr.bf16.mxu0 %v3600
    %5758 = vmatpush1.bf16.msra.mxu0 %v3599
    %5759 = vmatprep.subr.bf16.mxu0 %v3608
    %5760 = vmatpush1.bf16.msra.mxu0 %v3607
    %5761 = vmatprep.subr.bf16.mxu0 %v3616
    %5762 = vmatpush1.bf16.msra.mxu0 %v3615
    %5763 = vmatprep.subr.bf16.mxu0 %v3624
    %5764 = vmatpush1.bf16.msra.mxu0 %v3623
    %5765 = vmatprep.subr.bf16.mxu0 %v3632
    %5766 = vmatpush1.bf16.msra.mxu0 %v3631
    %5767 = vmatprep.subr.bf16.mxu0 %v3640
    %5768 = vmatpush1.bf16.msra.mxu0 %v3639
    %5769 = vmatprep.subr.bf16.mxu0 %v3648
    %5770 = vmatpush1.bf16.msra.mxu0 %v3647
    %5771 = vmatprep.subr.bf16.mxu0 %v3656
    %5772 = vmatpush1.bf16.msra.mxu0 %v3655
    %5773 = vmatprep.subr.bf16.mxu0 %v3664
    %5774 = vmatpush1.bf16.msra.mxu0 %v3663
    %5775 = vmatprep.subr.bf16.mxu0 %v3672
    %5776 = vmatpush1.bf16.msra.mxu0 %v3671
    %5777 = vmatprep.subr.bf16.mxu0 %v3680
    %5778 = vmatpush1.bf16.msra.mxu0 %v3679
    %5779 = vmatprep.mubr.bf16.mxu0 %v88
    %5780 = vmatmul.mubr.bf16.gmra.mrb[0].mxu0 %v87
    %v5781 = vpop.f32.mrb[0].mxu0
    %v5782 = vadd.f32 %v5741, %v5781
    %v5783 = vpop.f32.mrb[0].mxu0
    %v5784 = vadd.f32 %v5743, %v5783
    %v5785 = vpop.f32.mrb[0].mxu0
    %v5786 = vpop.f32.mrb[0].mxu0
    %5787 = vdwg.mxu0
    %5788 = vmatprep.subr.bf16.mxu0 %v3688
    %5789 = vmatpush1.bf16.msra.mxu0 %v3687
    %5790 = vmatprep.subr.bf16.mxu0 %v3696
    %5791 = vmatpush1.bf16.msra.mxu0 %v3695
    %5792 = vmatprep.subr.bf16.mxu0 %v3704
    %5793 = vmatpush1.bf16.msra.mxu0 %v3703
    %5794 = vmatprep.subr.bf16.mxu0 %v3712
    %5795 = vmatpush1.bf16.msra.mxu0 %v3711
    %5796 = vmatprep.subr.bf16.mxu0 %v3720
    %5797 = vmatpush1.bf16.msra.mxu0 %v3719
    %5798 = vmatprep.subr.bf16.mxu0 %v3728
    %5799 = vmatpush1.bf16.msra.mxu0 %v3727
    %5800 = vmatprep.subr.bf16.mxu0 %v3736
    %5801 = vmatpush1.bf16.msra.mxu0 %v3735
    %5802 = vmatprep.subr.bf16.mxu0 %v3744
    %5803 = vmatpush1.bf16.msra.mxu0 %v3743
    %5804 = vmatprep.subr.bf16.mxu0 %v3752
    %5805 = vmatpush1.bf16.msra.mxu0 %v3751
    %5806 = vmatprep.subr.bf16.mxu0 %v3760
    %5807 = vmatpush1.bf16.msra.mxu0 %v3759
    %5808 = vmatprep.subr.bf16.mxu0 %v3768
    %5809 = vmatpush1.bf16.msra.mxu0 %v3767
    %5810 = vmatprep.subr.bf16.mxu0 %v3776
    %5811 = vmatpush1.bf16.msra.mxu0 %v3775
    %5812 = vmatprep.subr.bf16.mxu0 %v3784
    %5813 = vmatpush1.bf16.msra.mxu0 %v3783
    %5814 = vmatprep.subr.bf16.mxu0 %v3792
    %5815 = vmatpush1.bf16.msra.mxu0 %v3791
    %5816 = vmatprep.subr.bf16.mxu0 %v3800
    %5817 = vmatpush1.bf16.msra.mxu0 %v3799
    %5818 = vmatprep.subr.bf16.mxu0 %v3808
    %5819 = vmatpush1.bf16.msra.mxu0 %v3807
    %5820 = vmatprep.mubr.bf16.mxu0 %v90
    %5821 = vmatmul.mubr.bf16.gmra.mrb[0].mxu0 %v89
    %v5822 = vpop.f32.mrb[0].mxu0
    %v5823 = vadd.f32 %v5782, %v5822
    %v5824 = vpop.f32.mrb[0].mxu0
    %v5825 = vadd.f32 %v5784, %v5824
    %v5826 = vpop.f32.mrb[0].mxu0
    %v5827 = vpop.f32.mrb[0].mxu0
    %5828 = vdwg.mxu0
    %5829 = vmatprep.subr.bf16.mxu0 %v3816
    %5830 = vmatpush1.bf16.msra.mxu0 %v3815
    %5831 = vmatprep.subr.bf16.mxu0 %v3824
    %5832 = vmatpush1.bf16.msra.mxu0 %v3823
    %5833 = vmatprep.subr.bf16.mxu0 %v3832
    %5834 = vmatpush1.bf16.msra.mxu0 %v3831
    %5835 = vmatprep.subr.bf16.mxu0 %v3840
    %5836 = vmatpush1.bf16.msra.mxu0 %v3839
    %5837 = vmatprep.subr.bf16.mxu0 %v3848
    %5838 = vmatpush1.bf16.msra.mxu0 %v3847
    %5839 = vmatprep.subr.bf16.mxu0 %v3856
    %5840 = vmatpush1.bf16.msra.mxu0 %v3855
    %5841 = vmatprep.subr.bf16.mxu0 %v3864
    %5842 = vmatpush1.bf16.msra.mxu0 %v3863
    %5843 = vmatprep.subr.bf16.mxu0 %v3872
    %5844 = vmatpush1.bf16.msra.mxu0 %v3871
    %5845 = vmatprep.subr.bf16.mxu0 %v3880
    %5846 = vmatpush1.bf16.msra.mxu0 %v3879
    %5847 = vmatprep.subr.bf16.mxu0 %v3888
    %5848 = vmatpush1.bf16.msra.mxu0 %v3887
    %5849 = vmatprep.subr.bf16.mxu0 %v3896
    %5850 = vmatpush1.bf16.msra.mxu0 %v3895
    %5851 = vmatprep.subr.bf16.mxu0 %v3904
    %5852 = vmatpush1.bf16.msra.mxu0 %v3903
    %5853 = vmatprep.subr.bf16.mxu0 %v3912
    %5854 = vmatpush1.bf16.msra.mxu0 %v3911
    %5855 = vmatprep.subr.bf16.mxu0 %v3920
    %5856 = vmatpush1.bf16.msra.mxu0 %v3919
    %5857 = vmatprep.subr.bf16.mxu0 %v3928
    %5858 = vmatpush1.bf16.msra.mxu0 %v3927
    %5859 = vmatprep.subr.bf16.mxu0 %v3936
    %5860 = vmatpush1.bf16.msra.mxu0 %v3935
    %5861 = vmatprep.mubr.bf16.mxu0 %v92
    %5862 = vmatmul.mubr.bf16.gmra.mrb[0].mxu0 %v91
    %v5863 = vpop.f32.mrb[0].mxu0
    %v5864 = vadd.f32 %v5823, %v5863
    %v5865 = vpop.f32.mrb[0].mxu0
    %v5866 = vadd.f32 %v5825, %v5865
    %v5867 = vpop.f32.mrb[0].mxu0
    %v5868 = vpop.f32.mrb[0].mxu0
    %5869 = vdwg.mxu0
    %5870 = vmatprep.subr.bf16.mxu0 %v3944
    %5871 = vmatpush1.bf16.msra.mxu0 %v3943
    %5872 = vmatprep.subr.bf16.mxu0 %v3952
    %5873 = vmatpush1.bf16.msra.mxu0 %v3951
    %5874 = vmatprep.subr.bf16.mxu0 %v3960
    %5875 = vmatpush1.bf16.msra.mxu0 %v3959
    %5876 = vmatprep.subr.bf16.mxu0 %v3968
    %5877 = vmatpush1.bf16.msra.mxu0 %v3967
    %5878 = vmatprep.subr.bf16.mxu0 %v3976
    %5879 = vmatpush1.bf16.msra.mxu0 %v3975
    %5880 = vmatprep.subr.bf16.mxu0 %v3984
    %5881 = vmatpush1.bf16.msra.mxu0 %v3983
    %5882 = vmatprep.subr.bf16.mxu0 %v3992
    %5883 = vmatpush1.bf16.msra.mxu0 %v3991
    %5884 = vmatprep.subr.bf16.mxu0 %v4000
    %5885 = vmatpush1.bf16.msra.mxu0 %v3999
    %5886 = vmatprep.subr.bf16.mxu0 %v4008
    %5887 = vmatpush1.bf16.msra.mxu0 %v4007
    %5888 = vmatprep.subr.bf16.mxu0 %v4016
    %5889 = vmatpush1.bf16.msra.mxu0 %v4015
    %5890 = vmatprep.subr.bf16.mxu0 %v4024
    %5891 = vmatpush1.bf16.msra.mxu0 %v4023
    %5892 = vmatprep.subr.bf16.mxu0 %v4032
    %5893 = vmatpush1.bf16.msra.mxu0 %v4031
    %5894 = vmatprep.subr.bf16.mxu0 %v4040
    %5895 = vmatpush1.bf16.msra.mxu0 %v4039
    %5896 = vmatprep.subr.bf16.mxu0 %v4048
    %5897 = vmatpush1.bf16.msra.mxu0 %v4047
    %5898 = vmatprep.subr.bf16.mxu0 %v4056
    %5899 = vmatpush1.bf16.msra.mxu0 %v4055
    %5900 = vmatprep.subr.bf16.mxu0 %v4064
    %5901 = vmatpush1.bf16.msra.mxu0 %v4063
    %5902 = vmatprep.mubr.bf16.mxu0 %v94
    %5903 = vmatmul.mubr.bf16.gmra.mrb[0].mxu0 %v93
    %v5904 = vpop.f32.mrb[0].mxu0
    %v5905 = vadd.f32 %v5864, %v5904
    %v5906 = vpop.f32.mrb[0].mxu0
    %v5907 = vadd.f32 %v5866, %v5906
    %v5908 = vpop.f32.mrb[0].mxu0
    %v5909 = vpop.f32.mrb[0].mxu0
    %5910 = vdwg.mxu0
    %5911 = vmatprep.subr.bf16.mxu0 %v4072
    %5912 = vmatpush1.bf16.msra.mxu0 %v4071
    %5913 = vmatprep.subr.bf16.mxu0 %v4080
    %5914 = vmatpush1.bf16.msra.mxu0 %v4079
    %5915 = vmatprep.subr.bf16.mxu0 %v4088
    %5916 = vmatpush1.bf16.msra.mxu0 %v4087
    %5917 = vmatprep.subr.bf16.mxu0 %v4096
    %5918 = vmatpush1.bf16.msra.mxu0 %v4095
    %5919 = vmatprep.subr.bf16.mxu0 %v4104
    %5920 = vmatpush1.bf16.msra.mxu0 %v4103
    %5921 = vmatprep.subr.bf16.mxu0 %v4112
    %5922 = vmatpush1.bf16.msra.mxu0 %v4111
    %5923 = vmatprep.subr.bf16.mxu0 %v4120
    %5924 = vmatpush1.bf16.msra.mxu0 %v4119
    %5925 = vmatprep.subr.bf16.mxu0 %v4128
    %5926 = vmatpush1.bf16.msra.mxu0 %v4127
    %5927 = vmatprep.subr.bf16.mxu0 %v4136
    %5928 = vmatpush1.bf16.msra.mxu0 %v4135
    %5929 = vmatprep.subr.bf16.mxu0 %v4144
    %5930 = vmatpush1.bf16.msra.mxu0 %v4143
    %5931 = vmatprep.subr.bf16.mxu0 %v4152
    %5932 = vmatpush1.bf16.msra.mxu0 %v4151
    %5933 = vmatprep.subr.bf16.mxu0 %v4160
    %5934 = vmatpush1.bf16.msra.mxu0 %v4159
    %5935 = vmatprep.subr.bf16.mxu0 %v4168
    %5936 = vmatpush1.bf16.msra.mxu0 %v4167
    %5937 = vmatprep.subr.bf16.mxu0 %v4176
    %5938 = vmatpush1.bf16.msra.mxu0 %v4175
    %5939 = vmatprep.subr.bf16.mxu0 %v4184
    %5940 = vmatpush1.bf16.msra.mxu0 %v4183
    %5941 = vmatprep.subr.bf16.mxu0 %v4192
    %5942 = vmatpush1.bf16.msra.mxu0 %v4191
    %5943 = vmatprep.mubr.bf16.mxu0 %v96
    %5944 = vmatmul.mubr.bf16.gmra.mrb[0].mxu0 %v95
    %v5945 = vpop.f32.mrb[0].mxu0
    %v5946 = vadd.f32 %v5905, %v5945
    %v5947 = vpop.f32.mrb[0].mxu0
    %v5948 = vadd.f32 %v5907, %v5947
    %v5949 = vpop.f32.mrb[0].mxu0
    %v5950 = vpop.f32.mrb[0].mxu0
    %5951 = vdwg.mxu0
    %5952 = vmatprep.subr.bf16.mxu0 %v4200
    %5953 = vmatpush1.bf16.msra.mxu0 %v4199
    %5954 = vmatprep.subr.bf16.mxu0 %v4208
    %5955 = vmatpush1.bf16.msra.mxu0 %v4207
    %5956 = vmatprep.subr.bf16.mxu0 %v4216
    %5957 = vmatpush1.bf16.msra.mxu0 %v4215
    %5958 = vmatprep.subr.bf16.mxu0 %v4224
    %5959 = vmatpush1.bf16.msra.mxu0 %v4223
    %5960 = vmatprep.subr.bf16.mxu0 %v4232
    %5961 = vmatpush1.bf16.msra.mxu0 %v4231
    %5962 = vmatprep.subr.bf16.mxu0 %v4240
    %5963 = vmatpush1.bf16.msra.mxu0 %v4239
    %5964 = vmatprep.subr.bf16.mxu0 %v4248
    %5965 = vmatpush1.bf16.msra.mxu0 %v4247
    %5966 = vmatprep.subr.bf16.mxu0 %v4256
    %5967 = vmatpush1.bf16.msra.mxu0 %v4255
    %5968 = vmatprep.subr.bf16.mxu0 0
    %5969 = vmatpush1.bf16.msra.mxu0 0
    %5970 = vmatprep.subr.bf16.mxu0 0
    %5971 = vmatpush1.bf16.msra.mxu0 0
    %5972 = vmatprep.subr.bf16.mxu0 0
    %5973 = vmatpush1.bf16.msra.mxu0 0
    %5974 = vmatprep.subr.bf16.mxu0 0
    %5975 = vmatpush1.bf16.msra.mxu0 0
    %5976 = vmatprep.subr.bf16.mxu0 0
    %5977 = vmatpush1.bf16.msra.mxu0 0
    %5978 = vmatprep.subr.bf16.mxu0 0
    %5979 = vmatpush1.bf16.msra.mxu0 0
    %5980 = vmatprep.subr.bf16.mxu0 0
    %5981 = vmatpush1.bf16.msra.mxu0 0
    %5982 = vmatprep.subr.bf16.mxu0 0
    %5983 = vmatpush1.bf16.msra.mxu0 0
    %5984 = vmatprep.mubr.bf16.mxu0 0
    %5985 = vmatmul.mubr.bf16.gmra.mrb[0].mxu0 %v97
    %v5986 = vpop.f32.mrb[0].mxu0
    %v5987 = vadd.f32 %v5946, %v5986
    %v5988 = vpop.f32.mrb[0].mxu0
    %v5989 = vadd.f32 %v5948, %v5988
    %v5990 = vpop.f32.mrb[0].mxu0
    %v5991 = vpop.f32.mrb[0].mxu0
    %5992 = vdwg.mxu0
    %5993 = vmatprep.subr.bf16.mxu0 %v3434
    %5994 = vmatpush1.bf16.msra.mxu0 %v3433
    %5995 = vmatprep.subr.bf16.mxu0 %v3442
    %5996 = vmatpush1.bf16.msra.mxu0 %v3441
    %5997 = vmatprep.subr.bf16.mxu0 %v3450
    %5998 = vmatpush1.bf16.msra.mxu0 %v3449
    %5999 = vmatprep.subr.bf16.mxu0 %v3458
    %6000 = vmatpush1.bf16.msra.mxu0 %v3457
    %6001 = vmatprep.subr.bf16.mxu0 %v3466
    %6002 = vmatpush1.bf16.msra.mxu0 %v3465
    %6003 = vmatprep.subr.bf16.mxu0 %v3474
    %6004 = vmatpush1.bf16.msra.mxu0 %v3473
    %6005 = vmatprep.subr.bf16.mxu0 %v3482
    %6006 = vmatpush1.bf16.msra.mxu0 %v3481
    %6007 = vmatprep.subr.bf16.mxu0 %v3490
    %6008 = vmatpush1.bf16.msra.mxu0 %v3489
    %6009 = vmatprep.subr.bf16.mxu0 %v3498
    %6010 = vmatpush1.bf16.msra.mxu0 %v3497
    %6011 = vmatprep.subr.bf16.mxu0 %v3506
    %6012 = vmatpush1.bf16.msra.mxu0 %v3505
    %6013 = vmatprep.subr.bf16.mxu0 %v3514
    %6014 = vmatpush1.bf16.msra.mxu0 %v3513
    %6015 = vmatprep.subr.bf16.mxu0 %v3522
    %6016 = vmatpush1.bf16.msra.mxu0 %v3521
    %6017 = vmatprep.subr.bf16.mxu0 %v3530
    %6018 = vmatpush1.bf16.msra.mxu0 %v3529
    %6019 = vmatprep.subr.bf16.mxu0 %v3538
    %6020 = vmatpush1.bf16.msra.mxu0 %v3537
    %6021 = vmatprep.subr.bf16.mxu0 %v3546
    %6022 = vmatpush1.bf16.msra.mxu0 %v3545
    %6023 = vmatprep.subr.bf16.mxu0 %v3554
    %6024 = vmatpush1.bf16.msra.mxu0 %v3553
    %6025 = vmatprep.mubr.bf16.mxu0 %v86
    %6026 = vmatmul.mubr.bf16.gmra.mrb[0].mxu0 %v85
    %v6027 = vpop.f32.mrb[0].mxu0
    %v6028 = vadd.f32 %v5119, %v6027
    %v6029 = vpop.f32.mrb[0].mxu0
    %v6030 = vadd.f32 %v5123, %v6029
    %v6031 = vpop.f32.mrb[0].mxu0
    %v6032 = vpop.f32.mrb[0].mxu0
    %6033 = vdwg.mxu0
    %6034 = vmatprep.subr.bf16.mxu0 %v3562
    %6035 = vmatpush1.bf16.msra.mxu0 %v3561
    %6036 = vmatprep.subr.bf16.mxu0 %v3570
    %6037 = vmatpush1.bf16.msra.mxu0 %v3569
    %6038 = vmatprep.subr.bf16.mxu0 %v3578
    %6039 = vmatpush1.bf16.msra.mxu0 %v3577
    %6040 = vmatprep.subr.bf16.mxu0 %v3586
    %6041 = vmatpush1.bf16.msra.mxu0 %v3585
    %6042 = vmatprep.subr.bf16.mxu0 %v3594
    %6043 = vmatpush1.bf16.msra.mxu0 %v3593
    %6044 = vmatprep.subr.bf16.mxu0 %v3602
    %6045 = vmatpush1.bf16.msra.mxu0 %v3601
    %6046 = vmatprep.subr.bf16.mxu0 %v3610
    %6047 = vmatpush1.bf16.msra.mxu0 %v3609
    %6048 = vmatprep.subr.bf16.mxu0 %v3618
    %6049 = vmatpush1.bf16.msra.mxu0 %v3617
    %6050 = vmatprep.subr.bf16.mxu0 %v3626
    %6051 = vmatpush1.bf16.msra.mxu0 %v3625
    %6052 = vmatprep.subr.bf16.mxu0 %v3634
    %6053 = vmatpush1.bf16.msra.mxu0 %v3633
    %6054 = vmatprep.subr.bf16.mxu0 %v3642
    %6055 = vmatpush1.bf16.msra.mxu0 %v3641
    %6056 = vmatprep.subr.bf16.mxu0 %v3650
    %6057 = vmatpush1.bf16.msra.mxu0 %v3649
    %6058 = vmatprep.subr.bf16.mxu0 %v3658
    %6059 = vmatpush1.bf16.msra.mxu0 %v3657
    %6060 = vmatprep.subr.bf16.mxu0 %v3666
    %6061 = vmatpush1.bf16.msra.mxu0 %v3665
    %6062 = vmatprep.subr.bf16.mxu0 %v3674
    %6063 = vmatpush1.bf16.msra.mxu0 %v3673
    %6064 = vmatprep.subr.bf16.mxu0 %v3682
    %6065 = vmatpush1.bf16.msra.mxu0 %v3681
    %6066 = vmatprep.mubr.bf16.mxu0 %v88
    %6067 = vmatmul.mubr.bf16.gmra.mrb[0].mxu0 %v87
    %v6068 = vpop.f32.mrb[0].mxu0
    %v6069 = vadd.f32 %v6028, %v6068
    %v6070 = vpop.f32.mrb[0].mxu0
    %v6071 = vadd.f32 %v6030, %v6070
    %v6072 = vpop.f32.mrb[0].mxu0
    %v6073 = vpop.f32.mrb[0].mxu0
    %6074 = vdwg.mxu0
    %6075 = vmatprep.subr.bf16.mxu0 %v3690
    %6076 = vmatpush1.bf16.msra.mxu0 %v3689
    %6077 = vmatprep.subr.bf16.mxu0 %v3698
    %6078 = vmatpush1.bf16.msra.mxu0 %v3697
    %6079 = vmatprep.subr.bf16.mxu0 %v3706
    %6080 = vmatpush1.bf16.msra.mxu0 %v3705
    %6081 = vmatprep.subr.bf16.mxu0 %v3714
    %6082 = vmatpush1.bf16.msra.mxu0 %v3713
    %6083 = vmatprep.subr.bf16.mxu0 %v3722
    %6084 = vmatpush1.bf16.msra.mxu0 %v3721
    %6085 = vmatprep.subr.bf16.mxu0 %v3730
    %6086 = vmatpush1.bf16.msra.mxu0 %v3729
    %6087 = vmatprep.subr.bf16.mxu0 %v3738
    %6088 = vmatpush1.bf16.msra.mxu0 %v3737
    %6089 = vmatprep.subr.bf16.mxu0 %v3746
    %6090 = vmatpush1.bf16.msra.mxu0 %v3745
    %6091 = vmatprep.subr.bf16.mxu0 %v3754
    %6092 = vmatpush1.bf16.msra.mxu0 %v3753
    %6093 = vmatprep.subr.bf16.mxu0 %v3762
    %6094 = vmatpush1.bf16.msra.mxu0 %v3761
    %6095 = vmatprep.subr.bf16.mxu0 %v3770
    %6096 = vmatpush1.bf16.msra.mxu0 %v3769
    %6097 = vmatprep.subr.bf16.mxu0 %v3778
    %6098 = vmatpush1.bf16.msra.mxu0 %v3777
    %6099 = vmatprep.subr.bf16.mxu0 %v3786
    %6100 = vmatpush1.bf16.msra.mxu0 %v3785
    %6101 = vmatprep.subr.bf16.mxu0 %v3794
    %6102 = vmatpush1.bf16.msra.mxu0 %v3793
    %6103 = vmatprep.subr.bf16.mxu0 %v3802
    %6104 = vmatpush1.bf16.msra.mxu0 %v3801
    %6105 = vmatprep.subr.bf16.mxu0 %v3810
    %6106 = vmatpush1.bf16.msra.mxu0 %v3809
    %6107 = vmatprep.mubr.bf16.mxu0 %v90
    %6108 = vmatmul.mubr.bf16.gmra.mrb[0].mxu0 %v89
    %v6109 = vpop.f32.mrb[0].mxu0
    %v6110 = vadd.f32 %v6069, %v6109
    %v6111 = vpop.f32.mrb[0].mxu0
    %v6112 = vadd.f32 %v6071, %v6111
    %v6113 = vpop.f32.mrb[0].mxu0
    %v6114 = vpop.f32.mrb[0].mxu0
    %6115 = vdwg.mxu0
    %6116 = vmatprep.subr.bf16.mxu0 %v3818
    %6117 = vmatpush1.bf16.msra.mxu0 %v3817
    %6118 = vmatprep.subr.bf16.mxu0 %v3826
    %6119 = vmatpush1.bf16.msra.mxu0 %v3825
    %6120 = vmatprep.subr.bf16.mxu0 %v3834
    %6121 = vmatpush1.bf16.msra.mxu0 %v3833
    %6122 = vmatprep.subr.bf16.mxu0 %v3842
    %6123 = vmatpush1.bf16.msra.mxu0 %v3841
    %6124 = vmatprep.subr.bf16.mxu0 %v3850
    %6125 = vmatpush1.bf16.msra.mxu0 %v3849
    %6126 = vmatprep.subr.bf16.mxu0 %v3858
    %6127 = vmatpush1.bf16.msra.mxu0 %v3857
    %6128 = vmatprep.subr.bf16.mxu0 %v3866
    %6129 = vmatpush1.bf16.msra.mxu0 %v3865
    %6130 = vmatprep.subr.bf16.mxu0 %v3874
    %6131 = vmatpush1.bf16.msra.mxu0 %v3873
    %6132 = vmatprep.subr.bf16.mxu0 %v3882
    %6133 = vmatpush1.bf16.msra.mxu0 %v3881
    %6134 = vmatprep.subr.bf16.mxu0 %v3890
    %6135 = vmatpush1.bf16.msra.mxu0 %v3889
    %6136 = vmatprep.subr.bf16.mxu0 %v3898
    %6137 = vmatpush1.bf16.msra.mxu0 %v3897
    %6138 = vmatprep.subr.bf16.mxu0 %v3906
    %6139 = vmatpush1.bf16.msra.mxu0 %v3905
    %6140 = vmatprep.subr.bf16.mxu0 %v3914
    %6141 = vmatpush1.bf16.msra.mxu0 %v3913
    %6142 = vmatprep.subr.bf16.mxu0 %v3922
    %6143 = vmatpush1.bf16.msra.mxu0 %v3921
    %6144 = vmatprep.subr.bf16.mxu0 %v3930
    %6145 = vmatpush1.bf16.msra.mxu0 %v3929
    %6146 = vmatprep.subr.bf16.mxu0 %v3938
    %6147 = vmatpush1.bf16.msra.mxu0 %v3937
    %6148 = vmatprep.mubr.bf16.mxu0 %v92
    %6149 = vmatmul.mubr.bf16.gmra.mrb[0].mxu0 %v91
    %v6150 = vpop.f32.mrb[0].mxu0
    %v6151 = vadd.f32 %v6110, %v6150
    %v6152 = vpop.f32.mrb[0].mxu0
    %v6153 = vadd.f32 %v6112, %v6152
    %v6154 = vpop.f32.mrb[0].mxu0
    %v6155 = vpop.f32.mrb[0].mxu0
    %6156 = vdwg.mxu0
    %6157 = vmatprep.subr.bf16.mxu0 %v3946
    %6158 = vmatpush1.bf16.msra.mxu0 %v3945
    %6159 = vmatprep.subr.bf16.mxu0 %v3954
    %6160 = vmatpush1.bf16.msra.mxu0 %v3953
    %6161 = vmatprep.subr.bf16.mxu0 %v3962
    %6162 = vmatpush1.bf16.msra.mxu0 %v3961
    %6163 = vmatprep.subr.bf16.mxu0 %v3970
    %6164 = vmatpush1.bf16.msra.mxu0 %v3969
    %6165 = vmatprep.subr.bf16.mxu0 %v3978
    %6166 = vmatpush1.bf16.msra.mxu0 %v3977
    %6167 = vmatprep.subr.bf16.mxu0 %v3986
    %6168 = vmatpush1.bf16.msra.mxu0 %v3985
    %6169 = vmatprep.subr.bf16.mxu0 %v3994
    %6170 = vmatpush1.bf16.msra.mxu0 %v3993
    %6171 = vmatprep.subr.bf16.mxu0 %v4002
    %6172 = vmatpush1.bf16.msra.mxu0 %v4001
    %6173 = vmatprep.subr.bf16.mxu0 %v4010
    %6174 = vmatpush1.bf16.msra.mxu0 %v4009
    %6175 = vmatprep.subr.bf16.mxu0 %v4018
    %6176 = vmatpush1.bf16.msra.mxu0 %v4017
    %6177 = vmatprep.subr.bf16.mxu0 %v4026
    %6178 = vmatpush1.bf16.msra.mxu0 %v4025
    %6179 = vmatprep.subr.bf16.mxu0 %v4034
    %6180 = vmatpush1.bf16.msra.mxu0 %v4033
    %6181 = vmatprep.subr.bf16.mxu0 %v4042
    %6182 = vmatpush1.bf16.msra.mxu0 %v4041
    %6183 = vmatprep.subr.bf16.mxu0 %v4050
    %6184 = vmatpush1.bf16.msra.mxu0 %v4049
    %6185 = vmatprep.subr.bf16.mxu0 %v4058
    %6186 = vmatpush1.bf16.msra.mxu0 %v4057
    %6187 = vmatprep.subr.bf16.mxu0 %v4066
    %6188 = vmatpush1.bf16.msra.mxu0 %v4065
    %6189 = vmatprep.mubr.bf16.mxu0 %v94
    %6190 = vmatmul.mubr.bf16.gmra.mrb[0].mxu0 %v93
    %v6191 = vpop.f32.mrb[0].mxu0
    %v6192 = vadd.f32 %v6151, %v6191
    %v6193 = vpop.f32.mrb[0].mxu0
    %v6194 = vadd.f32 %v6153, %v6193
    %v6195 = vpop.f32.mrb[0].mxu0
    %v6196 = vpop.f32.mrb[0].mxu0
    %6197 = vdwg.mxu0
    %6198 = vmatprep.subr.bf16.mxu0 %v4074
    %6199 = vmatpush1.bf16.msra.mxu0 %v4073
    %6200 = vmatprep.subr.bf16.mxu0 %v4082
    %6201 = vmatpush1.bf16.msra.mxu0 %v4081
    %6202 = vmatprep.subr.bf16.mxu0 %v4090
    %6203 = vmatpush1.bf16.msra.mxu0 %v4089
    %6204 = vmatprep.subr.bf16.mxu0 %v4098
    %6205 = vmatpush1.bf16.msra.mxu0 %v4097
    %6206 = vmatprep.subr.bf16.mxu0 %v4106
    %6207 = vmatpush1.bf16.msra.mxu0 %v4105
    %6208 = vmatprep.subr.bf16.mxu0 %v4114
    %6209 = vmatpush1.bf16.msra.mxu0 %v4113
    %6210 = vmatprep.subr.bf16.mxu0 %v4122
    %6211 = vmatpush1.bf16.msra.mxu0 %v4121
    %6212 = vmatprep.subr.bf16.mxu0 %v4130
    %6213 = vmatpush1.bf16.msra.mxu0 %v4129
    %6214 = vmatprep.subr.bf16.mxu0 %v4138
    %6215 = vmatpush1.bf16.msra.mxu0 %v4137
    %6216 = vmatprep.subr.bf16.mxu0 %v4146
    %6217 = vmatpush1.bf16.msra.mxu0 %v4145
    %6218 = vmatprep.subr.bf16.mxu0 %v4154
    %6219 = vmatpush1.bf16.msra.mxu0 %v4153
    %6220 = vmatprep.subr.bf16.mxu0 %v4162
    %6221 = vmatpush1.bf16.msra.mxu0 %v4161
    %6222 = vmatprep.subr.bf16.mxu0 %v4170
    %6223 = vmatpush1.bf16.msra.mxu0 %v4169
    %6224 = vmatprep.subr.bf16.mxu0 %v4178
    %6225 = vmatpush1.bf16.msra.mxu0 %v4177
    %6226 = vmatprep.subr.bf16.mxu0 %v4186
    %6227 = vmatpush1.bf16.msra.mxu0 %v4185
    %6228 = vmatprep.subr.bf16.mxu0 %v4194
    %6229 = vmatpush1.bf16.msra.mxu0 %v4193
    %6230 = vmatprep.mubr.bf16.mxu0 %v96
    %6231 = vmatmul.mubr.bf16.gmra.mrb[0].mxu0 %v95
    %v6232 = vpop.f32.mrb[0].mxu0
    %v6233 = vadd.f32 %v6192, %v6232
    %v6234 = vpop.f32.mrb[0].mxu0
    %v6235 = vadd.f32 %v6194, %v6234
    %v6236 = vpop.f32.mrb[0].mxu0
    %v6237 = vpop.f32.mrb[0].mxu0
    %6238 = vdwg.mxu0
    %6239 = vmatprep.subr.bf16.mxu0 %v4202
    %6240 = vmatpush1.bf16.msra.mxu0 %v4201
    %6241 = vmatprep.subr.bf16.mxu0 %v4210
    %6242 = vmatpush1.bf16.msra.mxu0 %v4209
    %6243 = vmatprep.subr.bf16.mxu0 %v4218
    %6244 = vmatpush1.bf16.msra.mxu0 %v4217
    %6245 = vmatprep.subr.bf16.mxu0 %v4226
    %6246 = vmatpush1.bf16.msra.mxu0 %v4225
    %6247 = vmatprep.subr.bf16.mxu0 %v4234
    %6248 = vmatpush1.bf16.msra.mxu0 %v4233
    %6249 = vmatprep.subr.bf16.mxu0 %v4242
    %6250 = vmatpush1.bf16.msra.mxu0 %v4241
    %6251 = vmatprep.subr.bf16.mxu0 %v4250
    %6252 = vmatpush1.bf16.msra.mxu0 %v4249
    %6253 = vmatprep.subr.bf16.mxu0 %v4258
    %6254 = vmatpush1.bf16.msra.mxu0 %v4257
    %6255 = vmatprep.subr.bf16.mxu0 0
    %6256 = vmatpush1.bf16.msra.mxu0 0
    %6257 = vmatprep.subr.bf16.mxu0 0
    %6258 = vmatpush1.bf16.msra.mxu0 0
    %6259 = vmatprep.subr.bf16.mxu0 0
    %6260 = vmatpush1.bf16.msra.mxu0 0
    %6261 = vmatprep.subr.bf16.mxu0 0
    %6262 = vmatpush1.bf16.msra.mxu0 0
    %6263 = vmatprep.subr.bf16.mxu0 0
    %6264 = vmatpush1.bf16.msra.mxu0 0
    %6265 = vmatprep.subr.bf16.mxu0 0
    %6266 = vmatpush1.bf16.msra.mxu0 0
    %6267 = vmatprep.subr.bf16.mxu0 0
    %6268 = vmatpush1.bf16.msra.mxu0 0
    %6269 = vmatprep.subr.bf16.mxu0 0
    %6270 = vmatpush1.bf16.msra.mxu0 0
    %6271 = vmatprep.mubr.bf16.mxu0 0
    %6272 = vmatmul.mubr.bf16.gmra.mrb[0].mxu0 %v97
    %v6273 = vpop.f32.mrb[0].mxu0
    %v6274 = vadd.f32 %v6233, %v6273
    %v6275 = vpop.f32.mrb[0].mxu0
    %v6276 = vadd.f32 %v6235, %v6275
    %v6277 = vpop.f32.mrb[0].mxu0
    %v6278 = vpop.f32.mrb[0].mxu0
    %6279 = vdwg.mxu0
    %v6288 = vcombine.low %v5413, %v5415
    %v6289 = vcombine.low %v5700, %v5702
    %v6290 = vcombine.low %v5987, %v5989
    %v6291 = vcombine.low %v6274, %v6276
    %v6293 = vunpack.c.l.s4 1966171168
    %v6294 = vunpack.c.0.s8 %v6293
    %v6295 = vlaneseq
    %v6296 = vshrl.u32 %v6295, 7
    %v6297 = vsub.s32 %v6294, %v6296
    %v6298 = vrot.slane %v6288, %v6297
    %v6300 = vunpack.c.l.s4 1966171168
    %v6301 = vunpack.c.0.s8 %v6300
    %v6302 = vlaneseq
    %v6303 = vshrl.u32 %v6302, 7
    %v6304 = vsub.s32 %v6301, %v6303
    %v6305 = vrot.slane %v6289, %v6304
    %v6307 = vunpack.c.l.s4 1966171168
    %v6308 = vunpack.c.0.s8 %v6307
    %v6309 = vlaneseq
    %v6310 = vshrl.u32 %v6309, 7
    %v6311 = vsub.s32 %v6308, %v6310
    %v6312 = vrot.slane %v6290, %v6311
    %v6314 = vunpack.c.l.s4 1966171168
    %v6315 = vunpack.c.0.s8 %v6314
    %v6316 = vlaneseq
    %v6317 = vshrl.u32 %v6316, 7
    %v6318 = vsub.s32 %v6315, %v6317
    %v6319 = vrot.slane %v6291, %v6318
    %v6320 = vcombine.low %v6298, %v6305
    %v6321 = vcombine.low %v6312, %v6319
    %v6323 = vunpack.c.l.s4 1966171168
    %v6324 = vunpack.c.0.s8 %v6323
    %v6325 = vlaneseq
    %v6326 = vshrl.u32 %v6325, 7
    %v6327 = vsub.s32 %v6324, %v6326
    %v6328 = vrot.slane %v6320, %v6327
    %v6330 = vunpack.c.l.s4 1966171168
    %v6331 = vunpack.c.0.s8 %v6330
    %v6332 = vlaneseq
    %v6333 = vshrl.u32 %v6332, 7
    %v6334 = vsub.s32 %v6331, %v6333
    %v6335 = vrot.slane %v6321, %v6334
    %v6336 = vcombine.low %v6328, %v6335
    %v6338 = vlaneseq
    %vm6339 = vcmp.ge.s32.totalorder %v6338, 0
    %vm6340 = vcmp.lt.s32.totalorder %v6338, 1000
    %vm6341 = vmand %vm6339, %vm6340
    %6342 = vst.msk [vmem:[#allocation2] sm:$0xff] %vm6341, %v6336
    // Predicated region
    $region14: #{tpu_custom_call.1} parent=1 // pred_check
      _
    $region15: #{tpu_custom_call.1} parent=1 // pred_check_branch
      %6344 = sbr.rel (0) target = $region17
    $region16: #{tpu_custom_call.1} parent=1 // pred_region
      %s6346 = ssub.s32 128, 128
      %6347 = vsyncadd [#allocation3], %s6346
      %s6349 = sshll.u32 [#allocation2], 4
      %s6350 = int_to_ptr.vmem [resolvable:$true] %s6349
      %6352 = dma.vmem_to_hbm [thread:$0]  %s6350, 128, %s3, [#allocation3]
    $region17: #{tpu_custom_call.1} parent=1 // pred_fallthru
      _
    // Predicated region
    $region18: #{tpu_custom_call.1} parent=1 // pred_check
      _
    $region19: #{tpu_custom_call.1} parent=1 // pred_check_branch
      %6354 = sbr.rel (0) target = $region21
    $region20: #{tpu_custom_call.1} parent=1 // pred_region
      %6355 = dma.done [#allocation3], 128
    $region21: #{tpu_custom_call.1} parent=1 // pred_fallthru
      _
    %6356 = vsyncpa [#allocation3], 1

</llo_original>
